<compile_context>
chip_gen: v5e
topology: v5e:2x2
jax: 0.10.0
libtpu: 0.0.40
codegen_flags: <defaults>
</compile_context>

<pallas_src>
import functools

import jax
import jax.numpy as jnp
import numpy as np
from jax.experimental import pallas as pl
from jax.experimental.pallas import tpu as pltpu


# ---------------------------------------------------------------------------
# Small helpers (all trace-time Python)
# ---------------------------------------------------------------------------
def _round_up(x, m):
    return ((x + m - 1) // m) * m


def _vmem_limit_bytes():
    """Generation-aware scoped-VMEM limit (v5e/v6e: 128 MiB physical; v7x: 64 MiB per TC)."""
    try:
        cap = int(pltpu.get_tpu_info().vmem_capacity_bytes)
    except Exception:
        cap = 64 * 1024 * 1024
    return max(32 * 1024 * 1024, min(int(cap * 3 // 4), 100 * 1024 * 1024))


def _multi_tensorcore():
    """True on parts with >1 TensorCore per chip (megacore grid sharding pays off)."""
    try:
        kind = jax.devices()[0].device_kind.lower()
    except Exception:
        return False
    return any(t in kind for t in ("v7", "v5p", "v4"))


# ---------------------------------------------------------------------------
# Kernel A: two-stage gate projection
#   x: (M, Dv) -> hid = x @ W_v2h^T + b_v2h -> gi = hid @ W_ih^T + b_ih'
# Row-tiled over M; weights/biases resident; fully parallel grid.
# ---------------------------------------------------------------------------
def _proj_kernel(x_ref, wv_ref, bv_ref, wi_ref, bi_ref, o_ref):
    # Stage 1: vid2hid (f32 accumulation).
    hid = jnp.dot(x_ref[...], wv_ref[...], preferred_element_type=jnp.float32) + bv_ref[...]
    # input_dropout with p == 0 is the identity (the fusion below relies on this).
    # Stage 2: GRU input gates.  (tile_m, H) intermediate never leaves VMEM.
    gi = jnp.dot(hid.astype(wi_ref.dtype), wi_ref[...],
                 preferred_element_type=jnp.float32) + bi_ref[...]
    o_ref[...] = gi.astype(o_ref.dtype)


def gate_projection(x2d, wv_t, bv, wi_t, bi, *, out_dtype, tile_m, vmem_limit):
    M, Dv = x2d.shape
    H = wv_t.shape[1]
    G = wi_t.shape[1]
    return pl.pallas_call(
        _proj_kernel,
        out_shape=jax.ShapeDtypeStruct((M, G), out_dtype),
        grid_spec=pltpu.PrefetchScalarGridSpec(
            num_scalar_prefetch=0,
            grid=(M // tile_m,),
            in_specs=[
                pl.BlockSpec((tile_m, Dv), lambda i: (i, 0)),   # x rows (pipelined stream)
                pl.BlockSpec((Dv, H), lambda i: (0, 0)),        # W_v2h^T (resident)
                pl.BlockSpec((1, H), lambda i: (0, 0)),         # b_v2h   (resident, f32)
                pl.BlockSpec((H, G), lambda i: (0, 0)),         # W_ih^T  (resident)
                pl.BlockSpec((1, G), lambda i: (0, 0)),         # b_ih + [b_hr, b_hz, 0] (f32)
            ],
            out_specs=pl.BlockSpec((tile_m, G), lambda i: (i, 0)),
        ),
        compiler_params=pltpu.CompilerParams(
            dimension_semantics=("parallel",),
            vmem_limit_bytes=vmem_limit,
        ),
    )(x2d, wv_t, bv, wi_t, bi)


# ---------------------------------------------------------------------------
# Kernel B: GRU recurrence over precomputed input gates (batch-first).
#   gi: (Bp, Sp, 3H), W_hh^T: (H, 3H), b_hn: (1, H)
# Grid: (batch-chunks [parallel], time-chunks [arbitrary]); hidden state in VMEM scratch.
# PyTorch GRU cell (with b_hr/b_hz already folded into gi):
#   r = sigmoid(gi_r + h W_hr^T)
#   z = sigmoid(gi_z + h W_hz^T)
#   n = tanh   (gi_n + r * (h W_hn^T + b_hn))
#   h' = (1 - z) * n + z * h  ==  n + z * (h - n)
# ---------------------------------------------------------------------------
def _gru_kernel(gi_ref, whh_ref, bhn_ref, out_ref, h_scratch, *, hidden, tile_s):
    s = pl.program_id(1)

    @pl.when(s == 0)
    def _():
        h_scratch[...] = jnp.zeros_like(h_scratch)   # h_0 = 0 (PyTorch default), per batch chunk

    H = hidden
    whh = whh_ref[...]          # (H, 3H) resident
    bhn = bhn_ref[...]          # (1, H)  f32 (n-gate recurrent bias only)
    mm_dtype = whh.dtype
    h = h_scratch[...]          # (chunk_b, H) f32

    # Statically unrolled inner loop: tile_s <= 8 for H >= 512 (bounded vreg pressure),
    # <= 16 otherwise.  Static j -> static sublane offsets for the (chunk_b, 1, H) stores.
    # NOTE: gate slices at k*H are lane-aligned whenever H % 128 == 0 (realistic configs).
    for j in range(tile_s):
        gi = gi_ref[:, j, :].astype(jnp.float32)                          # (chunk_b, 3H)
        h_mm = h if mm_dtype == jnp.float32 else h.astype(mm_dtype)       # no cast on f32 path
        gh = jnp.dot(h_mm, whh, preferred_element_type=jnp.float32)       # (chunk_b, 3H)
        r = jax.nn.sigmoid(gi[:, 0 * H:1 * H] + gh[:, 0 * H:1 * H])
        z = jax.nn.sigmoid(gi[:, 1 * H:2 * H] + gh[:, 1 * H:2 * H])
        n = jnp.tanh(gi[:, 2 * H:3 * H] + r * (gh[:, 2 * H:3 * H] + bhn))
        h = n + z * (h - n)
        out_ref[:, j, :] = h.astype(out_ref.dtype)

    h_scratch[...] = h


def gru(gi, whh_t, bhn, *, hidden, tile_s, n_bchunks, vmem_limit):
    Bp, Sp, G = gi.shape
    chunk_b = Bp // n_bchunks
    kernel = functools.partial(_gru_kernel, hidden=hidden, tile_s=tile_s)
    return pl.pallas_call(
        kernel,
        out_shape=jax.ShapeDtypeStruct((Bp, Sp, hidden), jnp.float32),
        grid_spec=pltpu.PrefetchScalarGridSpec(
            num_scalar_prefetch=0,
            grid=(n_bchunks, Sp // tile_s),
            in_specs=[
                pl.BlockSpec((chunk_b, tile_s, G), lambda b, s: (b, s, 0)),  # gi chunk (pipelined)
                pl.BlockSpec((hidden, G), lambda b, s: (0, 0)),              # W_hh^T (resident)
                pl.BlockSpec((1, hidden), lambda b, s: (0, 0)),              # b_hn   (resident)
            ],
            out_specs=pl.BlockSpec((chunk_b, tile_s, hidden), lambda b, s: (b, s, 0)),
            scratch_shapes=[pltpu.VMEM((chunk_b, hidden), jnp.float32)],     # carried hidden state
        ),
        compiler_params=pltpu.CompilerParams(
            dimension_semantics=("parallel", "arbitrary"),   # batch chunks parallel, time serial
            vmem_limit_bytes=vmem_limit,
        ),
    )(gi, whh_t, bhn)


# ---------------------------------------------------------------------------
# Encoder forward (matches PyTorch Encoder.forward; dropout_p == 0 -> identity)
# ---------------------------------------------------------------------------
@functools.partial(jax.jit, static_argnames=("dim_hidden", "use_bf16"))
def encoder_forward(vid_feats, params, *, dim_hidden, use_bf16=True):
    B, S, Dv = vid_feats.shape
    H = dim_hidden
    vmem_limit = _vmem_limit_bytes()
    in_dtype = jnp.bfloat16 if use_bf16 else jnp.float32

    # --- padding: batch -> sublane multiple, seq -> time-tile multiple ---------------------
    B_pad = _round_up(B, 8)
    tile_s = 8 if H >= 512 else 16
    tile_s = min(tile_s, _round_up(S, 8))
    S_pad = _round_up(S, tile_s)
    if (B_pad, S_pad) != (B, S):
        vid_feats = jnp.pad(vid_feats, ((0, B_pad - B), (0, S_pad - S), (0, 0)))

    # --- Kernel A row tiling: pad M up to a multiple of the target tile (no tiny fallbacks) --
    M = B_pad * S_pad
    target_m = 1024 if vmem_limit >= (80 << 20) else 512
    tile_m = _round_up(M, 8) if M <= target_m else target_m
    M_pad = _round_up(M, tile_m)
    x2d = vid_feats.reshape(M, Dv)
    if M_pad != M:
        x2d = jnp.pad(x2d, ((0, M_pad - M), (0, 0)))
    x2d = x2d.astype(in_dtype)

    # Fold the r/z thirds of b_hh into the input-side gate bias (exact; b_hn stays in the
    # recurrence because it is scaled by r).
    bi = params["bih"].at[:, :2 * H].add(params["bhh"][:, :2 * H])
    bhn = params["bhh"][:, 2 * H:]

    # Kernel A: fully parallel two-stage projection over all padded rows.
    gi2d = gate_projection(
        x2d,
        params["w_v2h_t"].astype(in_dtype), params["b_v2h"].astype(jnp.float32),
        params["wih_t"].astype(in_dtype), bi.astype(jnp.float32),
        out_dtype=in_dtype, tile_m=tile_m, vmem_limit=vmem_limit)
    gi = gi2d[:M].reshape(B_pad, S_pad, 3 * H)          # batch-first; free reshape

    # Kernel B: sequential GRU; shard batch chunks across TensorCores on multi-TC chips.
    n_bchunks = 2 if (B_pad >= 16 and _multi_tensorcore()) else 1
    out_pad = gru(gi, params["whh_t"].astype(in_dtype), bhn.astype(jnp.float32),
                  hidden=H, tile_s=tile_s, n_bchunks=n_bchunks, vmem_limit=vmem_limit)

    output = out_pad[:B, :S]                 # (B, S, H) batch-first, f32
    hidden = output[:, S - 1][None]          # (1, B, H): h_n == last output (1 layer, unidir)
    return output, hidden


def init_params(key, dim_vid, dim_hidden):
    ks = jax.random.split(key, 6)
    k_lin = 1.0 / np.sqrt(dim_vid)
    k_rnn = 1.0 / np.sqrt(dim_hidden)
    u = lambda k, shape, lim: jax.random.uniform(k, shape, jnp.float32, -lim, lim)
    return {
        # stored pre-transposed for the kernels: y = x @ W^T
        "w_v2h_t": u(ks[0], (dim_vid, dim_hidden), k_lin),
        "b_v2h":   u(ks[1], (1, dim_hidden), k_lin),
        "wih_t":   u(ks[2], (dim_hidden, 3 * dim_hidden), k_rnn),
        "whh_t":   u(ks[3], (dim_hidden, 3 * dim_hidden), k_rnn),
        "bih":     u(ks[4], (1, 3 * dim_hidden), k_rnn),
        "bhh":     u(ks[5], (1, 3 * dim_hidden), k_rnn),
    }


# ---------------------------------------------------------------------------
# Pure-JAX reference (mirrors torch.nn.Linear + torch.nn.GRU semantics, unfused)
# ---------------------------------------------------------------------------
def encoder_reference(vid_feats, params, dim_hidden):
    B, S, Dv = vid_feats.shape
    x = vid_feats.reshape(B * S, Dv) @ params["w_v2h_t"] + params["b_v2h"]
    x = x.reshape(B, S, dim_hidden)
    H = dim_hidden

    def step(h, x_t):
        gi = x_t @ params["wih_t"] + params["bih"][0]
        gh = h @ params["whh_t"] + params["bhh"][0]
        r = jax.nn.sigmoid(gi[:, :H] + gh[:, :H])
        z = jax.nn.sigmoid(gi[:, H:2 * H] + gh[:, H:2 * H])
        n = jnp.tanh(gi[:, 2 * H:] + r * gh[:, 2 * H:])
        h_new = (1.0 - z) * n + z * h
        return h_new, h_new

    h0 = jnp.zeros((B, H), jnp.float32)
    h_last, outs = jax.lax.scan(step, h0, jnp.transpose(x, (1, 0, 2)))
    return jnp.transpose(outs, (1, 0, 2)), h_last[None]


if __name__ == "__main__":
    B, S, DIM_VID, DIM_HIDDEN = 2, 8, 64, 32

    key = jax.random.PRNGKey(0)
    k_params, k_x = jax.random.split(key)
    params = init_params(k_params, DIM_VID, DIM_HIDDEN)
    vid_feats = jax.random.normal(k_x, (B, S, DIM_VID), jnp.float32)

    ref_out, ref_hid = encoder_reference(vid_feats, params, DIM_HIDDEN)

    # f32 path: tight check against the unfused pure-JAX reference.
    output, hidden = encoder_forward(vid_feats, params, dim_hidden=DIM_HIDDEN, use_bf16=False)
    jax.block_until_ready((output, hidden))
    np.testing.assert_allclose(np.asarray(output), np.asarray(ref_out), atol=1e-4, rtol=1e-4)
    np.testing.assert_allclose(np.asarray(hidden), np.asarray(ref_hid), atol=1e-4, rtol=1e-4)

    # bf16 MXU path (default; f32 accumulation / f32 gate math): loose sanity check.
    out_bf, hid_bf = encoder_forward(vid_feats, params, dim_hidden=DIM_HIDDEN, use_bf16=True)
    jax.block_until_ready((out_bf, hid_bf))
    np.testing.assert_allclose(np.asarray(out_bf), np.asarray(ref_out), atol=0.25, rtol=0.0)

    assert output.shape == (B, S, DIM_HIDDEN)
    assert hidden.shape == (1, B, DIM_HIDDEN)
    print("KERNEL_OK")
</pallas_src>

<mosaic_0001>
module attributes {stable_mosaic.version = 11 : i64} {
  func.func @_proj_kernel(%arg0: i32, %arg1: memref<64x64xf32, #tpu.memory_space<vmem>>, %arg2: memref<64x32xf32, #tpu.memory_space<vmem>>, %arg3: memref<1x32xf32, #tpu.memory_space<vmem>>, %arg4: memref<32x96xf32, #tpu.memory_space<vmem>>, %arg5: memref<1x96xf32, #tpu.memory_space<vmem>>, %arg6: memref<64x96xf32, #tpu.memory_space<vmem>>) attributes {dimension_semantics = [#tpu.dimension_semantics<parallel>], iteration_bounds = array<i64: 1>, scalar_prefetch = 0 : i64, scratch_operands = 0 : i64, tpu.core_type = #tpu.core_type<tc>, window_params = [{transform_indices = @transform_0, window_bounds = array<i64: 64, 64>}, {pipeline_mode = #tpu.pipeline_mode<synchronous>, transform_indices = @transform_1, window_bounds = array<i64: 64, 32>}, {pipeline_mode = #tpu.pipeline_mode<synchronous>, transform_indices = @transform_2, window_bounds = array<i64: 1, 32>}, {pipeline_mode = #tpu.pipeline_mode<synchronous>, transform_indices = @transform_3, window_bounds = array<i64: 32, 96>}, {pipeline_mode = #tpu.pipeline_mode<synchronous>, transform_indices = @transform_4, window_bounds = array<i64: 1, 96>}, {transform_indices = @transform_5, window_bounds = array<i64: 64, 96>}]} {
    %c0 = arith.constant 0 : index
    %c0_0 = arith.constant 0 : index
    %0 = vector.load %arg1[%c0, %c0_0] : memref<64x64xf32, #tpu.memory_space<vmem>>, vector<64x64xf32>
    %c0_1 = arith.constant 0 : index
    %c0_2 = arith.constant 0 : index
    %1 = vector.load %arg2[%c0_1, %c0_2] : memref<64x32xf32, #tpu.memory_space<vmem>>, vector<64x32xf32>
    %cst = arith.constant dense<0.000000e+00> : vector<64x32xf32>
    %2 = tpu.matmul %0, %1, %cst {dimension_numbers = #tpu.dot_dimension_numbers<[1], [0], [0], [1], [0, 0, 1, 1], [], []>} : vector<64x64xf32>, vector<64x32xf32>, vector<64x32xf32> -> vector<64x32xf32>
    %c0_3 = arith.constant 0 : index
    %c0_4 = arith.constant 0 : index
    %3 = vector.load %arg3[%c0_3, %c0_4] : memref<1x32xf32, #tpu.memory_space<vmem>>, vector<1x32xf32>
    %4 = vector.broadcast %3 : vector<1x32xf32> to vector<64x32xf32>
    %5 = arith.addf %2, %4 : vector<64x32xf32>
    %c0_5 = arith.constant 0 : index
    %c0_6 = arith.constant 0 : index
    %6 = vector.load %arg4[%c0_5, %c0_6] : memref<32x96xf32, #tpu.memory_space<vmem>>, vector<32x96xf32>
    %cst_7 = arith.constant dense<0.000000e+00> : vector<64x96xf32>
    %7 = tpu.matmul %5, %6, %cst_7 {dimension_numbers = #tpu.dot_dimension_numbers<[1], [0], [0], [1], [0, 0, 1, 1], [], []>} : vector<64x32xf32>, vector<32x96xf32>, vector<64x96xf32> -> vector<64x96xf32>
    %c0_8 = arith.constant 0 : index
    %c0_9 = arith.constant 0 : index
    %8 = vector.load %arg5[%c0_8, %c0_9] : memref<1x96xf32, #tpu.memory_space<vmem>>, vector<1x96xf32>
    %9 = vector.broadcast %8 : vector<1x96xf32> to vector<64x96xf32>
    %10 = arith.addf %7, %9 : vector<64x96xf32>
    %c0_10 = arith.constant 0 : index
    %c0_11 = arith.constant 0 : index
    %11 = vector.load %arg6[%c0_10, %c0_11] : memref<64x96xf32, #tpu.memory_space<vmem>>, vector<64x96xf32>
    tpu.vector_store %arg6[%c0_10, %c0_11], %10 {strides = array<i32>} : memref<64x96xf32, #tpu.memory_space<vmem>>, vector<64x96xf32>,
    return
  }
  func.func @transform_0(%arg0: i32) -> (i32, i32) {
    %c0_i32 = arith.constant 0 : i32
    %c0_i32_0 = arith.constant 0 : i32
    return %arg0, %c0_i32 : i32, i32
  }
  func.func @transform_1(%arg0: i32) -> (i32, i32) {
    %c0_i32 = arith.constant 0 : i32
    %c0_i32_0 = arith.constant 0 : i32
    %c0_i32_1 = arith.constant 0 : i32
    return %c0_i32, %c0_i32_0 : i32, i32
  }
  func.func @transform_2(%arg0: i32) -> (i32, i32) {
    %c0_i32 = arith.constant 0 : i32
    %c0_i32_0 = arith.constant 0 : i32
    %c0_i32_1 = arith.constant 0 : i32
    return %c0_i32, %c0_i32_0 : i32, i32
  }
  func.func @transform_3(%arg0: i32) -> (i32, i32) {
    %c0_i32 = arith.constant 0 : i32
    %c0_i32_0 = arith.constant 0 : i32
    %c0_i32_1 = arith.constant 0 : i32
    return %c0_i32, %c0_i32_0 : i32, i32
  }
  func.func @transform_4(%arg0: i32) -> (i32, i32) {
    %c0_i32 = arith.constant 0 : i32
    %c0_i32_0 = arith.constant 0 : i32
    %c0_i32_1 = arith.constant 0 : i32
    return %c0_i32, %c0_i32_0 : i32, i32
  }
  func.func @transform_5(%arg0: i32) -> (i32, i32) {
    %c0_i32 = arith.constant 0 : i32
    %c0_i32_0 = arith.constant 0 : i32
    return %arg0, %c0_i32 : i32, i32
  }
}

module attributes {stable_mosaic.version = 11 : i64} {
  func.func @_gru_kernel(%arg0: i32, %arg1: i32, %arg2: memref<8x8x96xf32, #tpu.memory_space<vmem>>, %arg3: memref<32x96xf32, #tpu.memory_space<vmem>>, %arg4: memref<1x32xf32, #tpu.memory_space<vmem>>, %arg5: memref<8x8x32xf32, #tpu.memory_space<vmem>>, %arg6: memref<8x32xf32, #tpu.memory_space<vmem>>) attributes {dimension_semantics = [#tpu.dimension_semantics<parallel>, #tpu.dimension_semantics<arbitrary>], iteration_bounds = array<i64: 1, 1>, scalar_prefetch = 0 : i64, scratch_operands = 1 : i64, tpu.core_type = #tpu.core_type<tc>, window_params = [{transform_indices = @transform_0, window_bounds = array<i64: 8, 8, 96>}, {pipeline_mode = #tpu.pipeline_mode<synchronous>, transform_indices = @transform_1, window_bounds = array<i64: 32, 96>}, {pipeline_mode = #tpu.pipeline_mode<synchronous>, transform_indices = @transform_2, window_bounds = array<i64: 1, 32>}, {transform_indices = @transform_3, window_bounds = array<i64: 8, 8, 32>}]} {
    %c0_i32 = arith.constant 0 : i32
    %0 = arith.cmpi eq, %arg1, %c0_i32 : i32
    %1 = arith.extui %0 : i1 to i32
    %c0_i32_0 = arith.constant 0 : i32
    %2 = arith.cmpi ne, %1, %c0_i32_0 : i32
    scf.if %2 {
      %cst_72 = arith.constant 0.000000e+00 : f32
      %263 = vector.broadcast %cst_72 : f32 to vector<8x32xf32>
      %c0_73 = arith.constant 0 : index
      %c0_74 = arith.constant 0 : index
      %264 = vector.load %arg6[%c0_73, %c0_74] : memref<8x32xf32, #tpu.memory_space<vmem>>, vector<8x32xf32>
      tpu.vector_store %arg6[%c0_73, %c0_74], %263 {strides = array<i32>} : memref<8x32xf32, #tpu.memory_space<vmem>>, vector<8x32xf32>,
    } else {
    }
    %c0 = arith.constant 0 : index
    %c0_1 = arith.constant 0 : index
    %3 = vector.load %arg3[%c0, %c0_1] : memref<32x96xf32, #tpu.memory_space<vmem>>, vector<32x96xf32>
    %c0_2 = arith.constant 0 : index
    %c0_3 = arith.constant 0 : index
    %4 = vector.load %arg4[%c0_2, %c0_3] : memref<1x32xf32, #tpu.memory_space<vmem>>, vector<1x32xf32>
    %c0_4 = arith.constant 0 : index
    %c0_5 = arith.constant 0 : index
    %5 = vector.load %arg6[%c0_4, %c0_5] : memref<8x32xf32, #tpu.memory_space<vmem>>, vector<8x32xf32>
    %c0_6 = arith.constant 0 : index
    %c0_7 = arith.constant 0 : index
    %c0_8 = arith.constant 0 : index
    %6 = vector.load %arg2[%c0_6, %c0_7, %c0_8] : memref<8x8x96xf32, #tpu.memory_space<vmem>>, vector<8x1x96xf32>
    %7 = vector.shape_cast %6 : vector<8x1x96xf32> to vector<8x96xf32>
    %cst = arith.constant dense<0.000000e+00> : vector<8x96xf32>
    %8 = tpu.matmul %5, %3, %cst {dimension_numbers = #tpu.dot_dimension_numbers<[1], [0], [0], [1], [0, 0, 1, 1], [], []>} : vector<8x32xf32>, vector<32x96xf32>, vector<8x96xf32> -> vector<8x96xf32>
    %9 = vector.extract_strided_slice %7 {offsets = [0, 0], sizes = [8, 32], strides = [1, 1]} : vector<8x96xf32> to vector<8x32xf32>
    %10 = vector.extract_strided_slice %8 {offsets = [0, 0], sizes = [8, 32], strides = [1, 1]} : vector<8x96xf32> to vector<8x32xf32>
    %11 = arith.addf %9, %10 : vector<8x32xf32>
    %12 = arith.negf %11 : vector<8x32xf32>
    %13 = math.exp %12 : vector<8x32xf32>
    %cst_9 = arith.constant 1.000000e+00 : f32
    %14 = vector.broadcast %cst_9 : f32 to vector<8x32xf32>
    %15 = arith.addf %14, %13 : vector<8x32xf32>
    %16 = arith.divf %14, %15 : vector<8x32xf32>
    %17 = vector.extract_strided_slice %7 {offsets = [0, 32], sizes = [8, 32], strides = [1, 1]} : vector<8x96xf32> to vector<8x32xf32>
    %18 = vector.extract_strided_slice %8 {offsets = [0, 32], sizes = [8, 32], strides = [1, 1]} : vector<8x96xf32> to vector<8x32xf32>
    %19 = arith.addf %17, %18 : vector<8x32xf32>
    %20 = arith.negf %19 : vector<8x32xf32>
    %21 = math.exp %20 : vector<8x32xf32>
    %cst_10 = arith.constant 1.000000e+00 : f32
    %22 = vector.broadcast %cst_10 : f32 to vector<8x32xf32>
    %23 = arith.addf %22, %21 : vector<8x32xf32>
    %24 = arith.divf %22, %23 : vector<8x32xf32>
    %25 = vector.extract_strided_slice %7 {offsets = [0, 64], sizes = [8, 32], strides = [1, 1]} : vector<8x96xf32> to vector<8x32xf32>
    %26 = vector.extract_strided_slice %8 {offsets = [0, 64], sizes = [8, 32], strides = [1, 1]} : vector<8x96xf32> to vector<8x32xf32>
    %27 = vector.broadcast %4 : vector<1x32xf32> to vector<8x32xf32>
    %28 = arith.addf %26, %27 : vector<8x32xf32>
    %29 = arith.mulf %16, %28 : vector<8x32xf32>
    %30 = arith.addf %25, %29 : vector<8x32xf32>
    %31 = math.tanh %30 : vector<8x32xf32>
    %32 = arith.subf %5, %31 : vector<8x32xf32>
    %33 = arith.mulf %24, %32 : vector<8x32xf32>
    %34 = arith.addf %31, %33 : vector<8x32xf32>
    %c0_11 = arith.constant 0 : index
    %c0_12 = arith.constant 0 : index
    %c0_13 = arith.constant 0 : index
    %35 = vector.load %arg5[%c0_11, %c0_12, %c0_13] : memref<8x8x32xf32, #tpu.memory_space<vmem>>, vector<8x1x32xf32>
    %36 = vector.shape_cast %35 : vector<8x1x32xf32> to vector<8x32xf32>
    %37 = vector.shape_cast %34 : vector<8x32xf32> to vector<8x1x32xf32>
    tpu.vector_store %arg5[%c0_11, %c0_12, %c0_13], %37 {strides = array<i32>} : memref<8x8x32xf32, #tpu.memory_space<vmem>>, vector<8x1x32xf32>,
    %c0_14 = arith.constant 0 : index
    %c1 = arith.constant 1 : index
    %c0_15 = arith.constant 0 : index
    %38 = vector.load %arg2[%c0_14, %c1, %c0_15] : memref<8x8x96xf32, #tpu.memory_space<vmem>>, vector<8x1x96xf32>
    %39 = vector.shape_cast %38 : vector<8x1x96xf32> to vector<8x96xf32>
    %cst_16 = arith.constant dense<0.000000e+00> : vector<8x96xf32>
    %40 = tpu.matmul %34, %3, %cst_16 {dimension_numbers = #tpu.dot_dimension_numbers<[1], [0], [0], [1], [0, 0, 1, 1], [], []>} : vector<8x32xf32>, vector<32x96xf32>, vector<8x96xf32> -> vector<8x96xf32>
    %41 = vector.extract_strided_slice %39 {offsets = [0, 0], sizes = [8, 32], strides = [1, 1]} : vector<8x96xf32> to vector<8x32xf32>
    %42 = vector.extract_strided_slice %40 {offsets = [0, 0], sizes = [8, 32], strides = [1, 1]} : vector<8x96xf32> to vector<8x32xf32>
    %43 = arith.addf %41, %42 : vector<8x32xf32>
    %44 = arith.negf %43 : vector<8x32xf32>
    %45 = math.exp %44 : vector<8x32xf32>
    %cst_17 = arith.constant 1.000000e+00 : f32
    %46 = vector.broadcast %cst_17 : f32 to vector<8x32xf32>
    %47 = arith.addf %46, %45 : vector<8x32xf32>
    %48 = arith.divf %46, %47 : vector<8x32xf32>
    %49 = vector.extract_strided_slice %39 {offsets = [0, 32], sizes = [8, 32], strides = [1, 1]} : vector<8x96xf32> to vector<8x32xf32>
    %50 = vector.extract_strided_slice %40 {offsets = [0, 32], sizes = [8, 32], strides = [1, 1]} : vector<8x96xf32> to vector<8x32xf32>
    %51 = arith.addf %49, %50 : vector<8x32xf32>
    %52 = arith.negf %51 : vector<8x32xf32>
    %53 = math.exp %52 : vector<8x32xf32>
    %cst_18 = arith.constant 1.000000e+00 : f32
    %54 = vector.broadcast %cst_18 : f32 to vector<8x32xf32>
    %55 = arith.addf %54, %53 : vector<8x32xf32>
    %56 = arith.divf %54, %55 : vector<8x32xf32>
    %57 = vector.extract_strided_slice %39 {offsets = [0, 64], sizes = [8, 32], strides = [1, 1]} : vector<8x96xf32> to vector<8x32xf32>
    %58 = vector.extract_strided_slice %40 {offsets = [0, 64], sizes = [8, 32], strides = [1, 1]} : vector<8x96xf32> to vector<8x32xf32>
    %59 = vector.broadcast %4 : vector<1x32xf32> to vector<8x32xf32>
    %60 = arith.addf %58, %59 : vector<8x32xf32>
    %61 = arith.mulf %48, %60 : vector<8x32xf32>
    %62 = arith.addf %57, %61 : vector<8x32xf32>
    %63 = math.tanh %62 : vector<8x32xf32>
    %64 = arith.subf %34, %63 : vector<8x32xf32>
    %65 = arith.mulf %56, %64 : vector<8x32xf32>
    %66 = arith.addf %63, %65 : vector<8x32xf32>
    %c0_19 = arith.constant 0 : index
    %c1_20 = arith.constant 1 : index
    %c0_21 = arith.constant 0 : index
    %67 = vector.load %arg5[%c0_19, %c1_20, %c0_21] : memref<8x8x32xf32, #tpu.memory_space<vmem>>, vector<8x1x32xf32>
    %68 = vector.shape_cast %67 : vector<8x1x32xf32> to vector<8x32xf32>
    %69 = vector.shape_cast %66 : vector<8x32xf32> to vector<8x1x32xf32>
    tpu.vector_store %arg5[%c0_19, %c1_20, %c0_21], %69 {strides = array<i32>} : memref<8x8x32xf32, #tpu.memory_space<vmem>>, vector<8x1x32xf32>,
    %c0_22 = arith.constant 0 : index
    %c2 = arith.constant 2 : index
    %c0_23 = arith.constant 0 : index
    %70 = vector.load %arg2[%c0_22, %c2, %c0_23] : memref<8x8x96xf32, #tpu.memory_space<vmem>>, vector<8x1x96xf32>
    %71 = vector.shape_cast %70 : vector<8x1x96xf32> to vector<8x96xf32>
    %cst_24 = arith.constant dense<0.000000e+00> : vector<8x96xf32>
    %72 = tpu.matmul %66, %3, %cst_24 {dimension_numbers = #tpu.dot_dimension_numbers<[1], [0], [0], [1], [0, 0, 1, 1], [], []>} : vector<8x32xf32>, vector<32x96xf32>, vector<8x96xf32> -> vector<8x96xf32>
    %73 = vector.extract_strided_slice %71 {offsets = [0, 0], sizes = [8, 32], strides = [1, 1]} : vector<8x96xf32> to vector<8x32xf32>
    %74 = vector.extract_strided_slice %72 {offsets = [0, 0], sizes = [8, 32], strides = [1, 1]} : vector<8x96xf32> to vector<8x32xf32>
    %75 = arith.addf %73, %74 : vector<8x32xf32>
    %76 = arith.negf %75 : vector<8x32xf32>
    %77 = math.exp %76 : vector<8x32xf32>
    %cst_25 = arith.constant 1.000000e+00 : f32
    %78 = vector.broadcast %cst_25 : f32 to vector<8x32xf32>
    %79 = arith.addf %78, %77 : vector<8x32xf32>
    %80 = arith.divf %78, %79 : vector<8x32xf32>
    %81 = vector.extract_strided_slice %71 {offsets = [0, 32], sizes = [8, 32], strides = [1, 1]} : vector<8x96xf32> to vector<8x32xf32>
    %82 = vector.extract_strided_slice %72 {offsets = [0, 32], sizes = [8, 32], strides = [1, 1]} : vector<8x96xf32> to vector<8x32xf32>
    %83 = arith.addf %81, %82 : vector<8x32xf32>
    %84 = arith.negf %83 : vector<8x32xf32>
    %85 = math.exp %84 : vector<8x32xf32>
    %cst_26 = arith.constant 1.000000e+00 : f32
    %86 = vector.broadcast %cst_26 : f32 to vector<8x32xf32>
    %87 = arith.addf %86, %85 : vector<8x32xf32>
    %88 = arith.divf %86, %87 : vector<8x32xf32>
    %89 = vector.extract_strided_slice %71 {offsets = [0, 64], sizes = [8, 32], strides = [1, 1]} : vector<8x96xf32> to vector<8x32xf32>
    %90 = vector.extract_strided_slice %72 {offsets = [0, 64], sizes = [8, 32], strides = [1, 1]} : vector<8x96xf32> to vector<8x32xf32>
    %91 = vector.broadcast %4 : vector<1x32xf32> to vector<8x32xf32>
    %92 = arith.addf %90, %91 : vector<8x32xf32>
    %93 = arith.mulf %80, %92 : vector<8x32xf32>
    %94 = arith.addf %89, %93 : vector<8x32xf32>
    %95 = math.tanh %94 : vector<8x32xf32>
    %96 = arith.subf %66, %95 : vector<8x32xf32>
    %97 = arith.mulf %88, %96 : vector<8x32xf32>
    %98 = arith.addf %95, %97 : vector<8x32xf32>
    %c0_27 = arith.constant 0 : index
    %c2_28 = arith.constant 2 : index
    %c0_29 = arith.constant 0 : index
    %99 = vector.load %arg5[%c0_27, %c2_28, %c0_29] : memref<8x8x32xf32, #tpu.memory_space<vmem>>, vector<8x1x32xf32>
    %100 = vector.shape_cast %99 : vector<8x1x32xf32> to vector<8x32xf32>
    %101 = vector.shape_cast %98 : vector<8x32xf32> to vector<8x1x32xf32>
    tpu.vector_store %arg5[%c0_27, %c2_28, %c0_29], %101 {strides = array<i32>} : memref<8x8x32xf32, #tpu.memory_space<vmem>>, vector<8x1x32xf32>,
    %c0_30 = arith.constant 0 : index
    %c3 = arith.constant 3 : index
    %c0_31 = arith.constant 0 : index
    %102 = vector.load %arg2[%c0_30, %c3, %c0_31] : memref<8x8x96xf32, #tpu.memory_space<vmem>>, vector<8x1x96xf32>
    %103 = vector.shape_cast %102 : vector<8x1x96xf32> to vector<8x96xf32>
    %cst_32 = arith.constant dense<0.000000e+00> : vector<8x96xf32>
    %104 = tpu.matmul %98, %3, %cst_32 {dimension_numbers = #tpu.dot_dimension_numbers<[1], [0], [0], [1], [0, 0, 1, 1], [], []>} : vector<8x32xf32>, vector<32x96xf32>, vector<8x96xf32> -> vector<8x96xf32>
    %105 = vector.extract_strided_slice %103 {offsets = [0, 0], sizes = [8, 32], strides = [1, 1]} : vector<8x96xf32> to vector<8x32xf32>
    %106 = vector.extract_strided_slice %104 {offsets = [0, 0], sizes = [8, 32], strides = [1, 1]} : vector<8x96xf32> to vector<8x32xf32>
    %107 = arith.addf %105, %106 : vector<8x32xf32>
    %108 = arith.negf %107 : vector<8x32xf32>
    %109 = math.exp %108 : vector<8x32xf32>
    %cst_33 = arith.constant 1.000000e+00 : f32
    %110 = vector.broadcast %cst_33 : f32 to vector<8x32xf32>
    %111 = arith.addf %110, %109 : vector<8x32xf32>
    %112 = arith.divf %110, %111 : vector<8x32xf32>
    %113 = vector.extract_strided_slice %103 {offsets = [0, 32], sizes = [8, 32], strides = [1, 1]} : vector<8x96xf32> to vector<8x32xf32>
    %114 = vector.extract_strided_slice %104 {offsets = [0, 32], sizes = [8, 32], strides = [1, 1]} : vector<8x96xf32> to vector<8x32xf32>
    %115 = arith.addf %113, %114 : vector<8x32xf32>
    %116 = arith.negf %115 : vector<8x32xf32>
    %117 = math.exp %116 : vector<8x32xf32>
    %cst_34 = arith.constant 1.000000e+00 : f32
    %118 = vector.broadcast %cst_34 : f32 to vector<8x32xf32>
    %119 = arith.addf %118, %117 : vector<8x32xf32>
    %120 = arith.divf %118, %119 : vector<8x32xf32>
    %121 = vector.extract_strided_slice %103 {offsets = [0, 64], sizes = [8, 32], strides = [1, 1]} : vector<8x96xf32> to vector<8x32xf32>
    %122 = vector.extract_strided_slice %104 {offsets = [0, 64], sizes = [8, 32], strides = [1, 1]} : vector<8x96xf32> to vector<8x32xf32>
    %123 = vector.broadcast %4 : vector<1x32xf32> to vector<8x32xf32>
    %124 = arith.addf %122, %123 : vector<8x32xf32>
    %125 = arith.mulf %112, %124 : vector<8x32xf32>
    %126 = arith.addf %121, %125 : vector<8x32xf32>
    %127 = math.tanh %126 : vector<8x32xf32>
    %128 = arith.subf %98, %127 : vector<8x32xf32>
    %129 = arith.mulf %120, %128 : vector<8x32xf32>
    %130 = arith.addf %127, %129 : vector<8x32xf32>
    %c0_35 = arith.constant 0 : index
    %c3_36 = arith.constant 3 : index
    %c0_37 = arith.constant 0 : index
    %131 = vector.load %arg5[%c0_35, %c3_36, %c0_37] : memref<8x8x32xf32, #tpu.memory_space<vmem>>, vector<8x1x32xf32>
    %132 = vector.shape_cast %131 : vector<8x1x32xf32> to vector<8x32xf32>
    %133 = vector.shape_cast %130 : vector<8x32xf32> to vector<8x1x32xf32>
    tpu.vector_store %arg5[%c0_35, %c3_36, %c0_37], %133 {strides = array<i32>} : memref<8x8x32xf32, #tpu.memory_space<vmem>>, vector<8x1x32xf32>,
    %c0_38 = arith.constant 0 : index
    %c4 = arith.constant 4 : index
    %c0_39 = arith.constant 0 : index
    %134 = vector.load %arg2[%c0_38, %c4, %c0_39] : memref<8x8x96xf32, #tpu.memory_space<vmem>>, vector<8x1x96xf32>
    %135 = vector.shape_cast %134 : vector<8x1x96xf32> to vector<8x96xf32>
    %cst_40 = arith.constant dense<0.000000e+00> : vector<8x96xf32>
    %136 = tpu.matmul %130, %3, %cst_40 {dimension_numbers = #tpu.dot_dimension_numbers<[1], [0], [0], [1], [0, 0, 1, 1], [], []>} : vector<8x32xf32>, vector<32x96xf32>, vector<8x96xf32> -> vector<8x96xf32>
    %137 = vector.extract_strided_slice %135 {offsets = [0, 0], sizes = [8, 32], strides = [1, 1]} : vector<8x96xf32> to vector<8x32xf32>
    %138 = vector.extract_strided_slice %136 {offsets = [0, 0], sizes = [8, 32], strides = [1, 1]} : vector<8x96xf32> to vector<8x32xf32>
    %139 = arith.addf %137, %138 : vector<8x32xf32>
    %140 = arith.negf %139 : vector<8x32xf32>
    %141 = math.exp %140 : vector<8x32xf32>
    %cst_41 = arith.constant 1.000000e+00 : f32
    %142 = vector.broadcast %cst_41 : f32 to vector<8x32xf32>
    %143 = arith.addf %142, %141 : vector<8x32xf32>
    %144 = arith.divf %142, %143 : vector<8x32xf32>
    %145 = vector.extract_strided_slice %135 {offsets = [0, 32], sizes = [8, 32], strides = [1, 1]} : vector<8x96xf32> to vector<8x32xf32>
    %146 = vector.extract_strided_slice %136 {offsets = [0, 32], sizes = [8, 32], strides = [1, 1]} : vector<8x96xf32> to vector<8x32xf32>
    %147 = arith.addf %145, %146 : vector<8x32xf32>
    %148 = arith.negf %147 : vector<8x32xf32>
    %149 = math.exp %148 : vector<8x32xf32>
    %cst_42 = arith.constant 1.000000e+00 : f32
    %150 = vector.broadcast %cst_42 : f32 to vector<8x32xf32>
    %151 = arith.addf %150, %149 : vector<8x32xf32>
    %152 = arith.divf %150, %151 : vector<8x32xf32>
    %153 = vector.extract_strided_slice %135 {offsets = [0, 64], sizes = [8, 32], strides = [1, 1]} : vector<8x96xf32> to vector<8x32xf32>
    %154 = vector.extract_strided_slice %136 {offsets = [0, 64], sizes = [8, 32], strides = [1, 1]} : vector<8x96xf32> to vector<8x32xf32>
    %155 = vector.broadcast %4 : vector<1x32xf32> to vector<8x32xf32>
    %156 = arith.addf %154, %155 : vector<8x32xf32>
    %157 = arith.mulf %144, %156 : vector<8x32xf32>
    %158 = arith.addf %153, %157 : vector<8x32xf32>
    %159 = math.tanh %158 : vector<8x32xf32>
    %160 = arith.subf %130, %159 : vector<8x32xf32>
    %161 = arith.mulf %152, %160 : vector<8x32xf32>
    %162 = arith.addf %159, %161 : vector<8x32xf32>
    %c0_43 = arith.constant 0 : index
    %c4_44 = arith.constant 4 : index
    %c0_45 = arith.constant 0 : index
    %163 = vector.load %arg5[%c0_43, %c4_44, %c0_45] : memref<8x8x32xf32, #tpu.memory_space<vmem>>, vector<8x1x32xf32>
    %164 = vector.shape_cast %163 : vector<8x1x32xf32> to vector<8x32xf32>
    %165 = vector.shape_cast %162 : vector<8x32xf32> to vector<8x1x32xf32>
    tpu.vector_store %arg5[%c0_43, %c4_44, %c0_45], %165 {strides = array<i32>} : memref<8x8x32xf32, #tpu.memory_space<vmem>>, vector<8x1x32xf32>,
    %c0_46 = arith.constant 0 : index
    %c5 = arith.constant 5 : index
    %c0_47 = arith.constant 0 : index
    %166 = vector.load %arg2[%c0_46, %c5, %c0_47] : memref<8x8x96xf32, #tpu.memory_space<vmem>>, vector<8x1x96xf32>
    %167 = vector.shape_cast %166 : vector<8x1x96xf32> to vector<8x96xf32>
    %cst_48 = arith.constant dense<0.000000e+00> : vector<8x96xf32>
    %168 = tpu.matmul %162, %3, %cst_48 {dimension_numbers = #tpu.dot_dimension_numbers<[1], [0], [0], [1], [0, 0, 1, 1], [], []>} : vector<8x32xf32>, vector<32x96xf32>, vector<8x96xf32> -> vector<8x96xf32>
    %169 = vector.extract_strided_slice %167 {offsets = [0, 0], sizes = [8, 32], strides = [1, 1]} : vector<8x96xf32> to vector<8x32xf32>
    %170 = vector.extract_strided_slice %168 {offsets = [0, 0], sizes = [8, 32], strides = [1, 1]} : vector<8x96xf32> to vector<8x32xf32>
    %171 = arith.addf %169, %170 : vector<8x32xf32>
    %172 = arith.negf %171 : vector<8x32xf32>
    %173 = math.exp %172 : vector<8x32xf32>
    %cst_49 = arith.constant 1.000000e+00 : f32
    %174 = vector.broadcast %cst_49 : f32 to vector<8x32xf32>
    %175 = arith.addf %174, %173 : vector<8x32xf32>
    %176 = arith.divf %174, %175 : vector<8x32xf32>
    %177 = vector.extract_strided_slice %167 {offsets = [0, 32], sizes = [8, 32], strides = [1, 1]} : vector<8x96xf32> to vector<8x32xf32>
    %178 = vector.extract_strided_slice %168 {offsets = [0, 32], sizes = [8, 32], strides = [1, 1]} : vector<8x96xf32> to vector<8x32xf32>
    %179 = arith.addf %177, %178 : vector<8x32xf32>
    %180 = arith.negf %179 : vector<8x32xf32>
    %181 = math.exp %180 : vector<8x32xf32>
    %cst_50 = arith.constant 1.000000e+00 : f32
    %182 = vector.broadcast %cst_50 : f32 to vector<8x32xf32>
    %183 = arith.addf %182, %181 : vector<8x32xf32>
    %184 = arith.divf %182, %183 : vector<8x32xf32>
    %185 = vector.extract_strided_slice %167 {offsets = [0, 64], sizes = [8, 32], strides = [1, 1]} : vector<8x96xf32> to vector<8x32xf32>
    %186 = vector.extract_strided_slice %168 {offsets = [0, 64], sizes = [8, 32], strides = [1, 1]} : vector<8x96xf32> to vector<8x32xf32>
    %187 = vector.broadcast %4 : vector<1x32xf32> to vector<8x32xf32>
    %188 = arith.addf %186, %187 : vector<8x32xf32>
    %189 = arith.mulf %176, %188 : vector<8x32xf32>
    %190 = arith.addf %185, %189 : vector<8x32xf32>
    %191 = math.tanh %190 : vector<8x32xf32>
    %192 = arith.subf %162, %191 : vector<8x32xf32>
    %193 = arith.mulf %184, %192 : vector<8x32xf32>
    %194 = arith.addf %191, %193 : vector<8x32xf32>
    %c0_51 = arith.constant 0 : index
    %c5_52 = arith.constant 5 : index
    %c0_53 = arith.constant 0 : index
    %195 = vector.load %arg5[%c0_51, %c5_52, %c0_53] : memref<8x8x32xf32, #tpu.memory_space<vmem>>, vector<8x1x32xf32>
    %196 = vector.shape_cast %195 : vector<8x1x32xf32> to vector<8x32xf32>
    %197 = vector.shape_cast %194 : vector<8x32xf32> to vector<8x1x32xf32>
    tpu.vector_store %arg5[%c0_51, %c5_52, %c0_53], %197 {strides = array<i32>} : memref<8x8x32xf32, #tpu.memory_space<vmem>>, vector<8x1x32xf32>,
    %c0_54 = arith.constant 0 : index
    %c6 = arith.constant 6 : index
    %c0_55 = arith.constant 0 : index
    %198 = vector.load %arg2[%c0_54, %c6, %c0_55] : memref<8x8x96xf32, #tpu.memory_space<vmem>>, vector<8x1x96xf32>
    %199 = vector.shape_cast %198 : vector<8x1x96xf32> to vector<8x96xf32>
    %cst_56 = arith.constant dense<0.000000e+00> : vector<8x96xf32>
    %200 = tpu.matmul %194, %3, %cst_56 {dimension_numbers = #tpu.dot_dimension_numbers<[1], [0], [0], [1], [0, 0, 1, 1], [], []>} : vector<8x32xf32>, vector<32x96xf32>, vector<8x96xf32> -> vector<8x96xf32>
    %201 = vector.extract_strided_slice %199 {offsets = [0, 0], sizes = [8, 32], strides = [1, 1]} : vector<8x96xf32> to vector<8x32xf32>
    %202 = vector.extract_strided_slice %200 {offsets = [0, 0], sizes = [8, 32], strides = [1, 1]} : vector<8x96xf32> to vector<8x32xf32>
    %203 = arith.addf %201, %202 : vector<8x32xf32>
    %204 = arith.negf %203 : vector<8x32xf32>
    %205 = math.exp %204 : vector<8x32xf32>
    %cst_57 = arith.constant 1.000000e+00 : f32
    %206 = vector.broadcast %cst_57 : f32 to vector<8x32xf32>
    %207 = arith.addf %206, %205 : vector<8x32xf32>
    %208 = arith.divf %206, %207 : vector<8x32xf32>
    %209 = vector.extract_strided_slice %199 {offsets = [0, 32], sizes = [8, 32], strides = [1, 1]} : vector<8x96xf32> to vector<8x32xf32>
    %210 = vector.extract_strided_slice %200 {offsets = [0, 32], sizes = [8, 32], strides = [1, 1]} : vector<8x96xf32> to vector<8x32xf32>
    %211 = arith.addf %209, %210 : vector<8x32xf32>
    %212 = arith.negf %211 : vector<8x32xf32>
    %213 = math.exp %212 : vector<8x32xf32>
    %cst_58 = arith.constant 1.000000e+00 : f32
    %214 = vector.broadcast %cst_58 : f32 to vector<8x32xf32>
    %215 = arith.addf %214, %213 : vector<8x32xf32>
    %216 = arith.divf %214, %215 : vector<8x32xf32>
    %217 = vector.extract_strided_slice %199 {offsets = [0, 64], sizes = [8, 32], strides = [1, 1]} : vector<8x96xf32> to vector<8x32xf32>
    %218 = vector.extract_strided_slice %200 {offsets = [0, 64], sizes = [8, 32], strides = [1, 1]} : vector<8x96xf32> to vector<8x32xf32>
    %219 = vector.broadcast %4 : vector<1x32xf32> to vector<8x32xf32>
    %220 = arith.addf %218, %219 : vector<8x32xf32>
    %221 = arith.mulf %208, %220 : vector<8x32xf32>
    %222 = arith.addf %217, %221 : vector<8x32xf32>
    %223 = math.tanh %222 : vector<8x32xf32>
    %224 = arith.subf %194, %223 : vector<8x32xf32>
    %225 = arith.mulf %216, %224 : vector<8x32xf32>
    %226 = arith.addf %223, %225 : vector<8x32xf32>
    %c0_59 = arith.constant 0 : index
    %c6_60 = arith.constant 6 : index
    %c0_61 = arith.constant 0 : index
    %227 = vector.load %arg5[%c0_59, %c6_60, %c0_61] : memref<8x8x32xf32, #tpu.memory_space<vmem>>, vector<8x1x32xf32>
    %228 = vector.shape_cast %227 : vector<8x1x32xf32> to vector<8x32xf32>
    %229 = vector.shape_cast %226 : vector<8x32xf32> to vector<8x1x32xf32>
    tpu.vector_store %arg5[%c0_59, %c6_60, %c0_61], %229 {strides = array<i32>} : memref<8x8x32xf32, #tpu.memory_space<vmem>>, vector<8x1x32xf32>,
    %c0_62 = arith.constant 0 : index
    %c7 = arith.constant 7 : index
    %c0_63 = arith.constant 0 : index
    %230 = vector.load %arg2[%c0_62, %c7, %c0_63] : memref<8x8x96xf32, #tpu.memory_space<vmem>>, vector<8x1x96xf32>
    %231 = vector.shape_cast %230 : vector<8x1x96xf32> to vector<8x96xf32>
    %cst_64 = arith.constant dense<0.000000e+00> : vector<8x96xf32>
    %232 = tpu.matmul %226, %3, %cst_64 {dimension_numbers = #tpu.dot_dimension_numbers<[1], [0], [0], [1], [0, 0, 1, 1], [], []>} : vector<8x32xf32>, vector<32x96xf32>, vector<8x96xf32> -> vector<8x96xf32>
    %233 = vector.extract_strided_slice %231 {offsets = [0, 0], sizes = [8, 32], strides = [1, 1]} : vector<8x96xf32> to vector<8x32xf32>
    %234 = vector.extract_strided_slice %232 {offsets = [0, 0], sizes = [8, 32], strides = [1, 1]} : vector<8x96xf32> to vector<8x32xf32>
    %235 = arith.addf %233, %234 : vector<8x32xf32>
    %236 = arith.negf %235 : vector<8x32xf32>
    %237 = math.exp %236 : vector<8x32xf32>
    %cst_65 = arith.constant 1.000000e+00 : f32
    %238 = vector.broadcast %cst_65 : f32 to vector<8x32xf32>
    %239 = arith.addf %238, %237 : vector<8x32xf32>
    %240 = arith.divf %238, %239 : vector<8x32xf32>
    %241 = vector.extract_strided_slice %231 {offsets = [0, 32], sizes = [8, 32], strides = [1, 1]} : vector<8x96xf32> to vector<8x32xf32>
    %242 = vector.extract_strided_slice %232 {offsets = [0, 32], sizes = [8, 32], strides = [1, 1]} : vector<8x96xf32> to vector<8x32xf32>
    %243 = arith.addf %241, %242 : vector<8x32xf32>
    %244 = arith.negf %243 : vector<8x32xf32>
    %245 = math.exp %244 : vector<8x32xf32>
    %cst_66 = arith.constant 1.000000e+00 : f32
    %246 = vector.broadcast %cst_66 : f32 to vector<8x32xf32>
    %247 = arith.addf %246, %245 : vector<8x32xf32>
    %248 = arith.divf %246, %247 : vector<8x32xf32>
    %249 = vector.extract_strided_slice %231 {offsets = [0, 64], sizes = [8, 32], strides = [1, 1]} : vector<8x96xf32> to vector<8x32xf32>
    %250 = vector.extract_strided_slice %232 {offsets = [0, 64], sizes = [8, 32], strides = [1, 1]} : vector<8x96xf32> to vector<8x32xf32>
    %251 = vector.broadcast %4 : vector<1x32xf32> to vector<8x32xf32>
    %252 = arith.addf %250, %251 : vector<8x32xf32>
    %253 = arith.mulf %240, %252 : vector<8x32xf32>
    %254 = arith.addf %249, %253 : vector<8x32xf32>
    %255 = math.tanh %254 : vector<8x32xf32>
    %256 = arith.subf %226, %255 : vector<8x32xf32>
    %257 = arith.mulf %248, %256 : vector<8x32xf32>
    %258 = arith.addf %255, %257 : vector<8x32xf32>
    %c0_67 = arith.constant 0 : index
    %c7_68 = arith.constant 7 : index
    %c0_69 = arith.constant 0 : index
    %259 = vector.load %arg5[%c0_67, %c7_68, %c0_69] : memref<8x8x32xf32, #tpu.memory_space<vmem>>, vector<8x1x32xf32>
    %260 = vector.shape_cast %259 : vector<8x1x32xf32> to vector<8x32xf32>
    %261 = vector.shape_cast %258 : vector<8x32xf32> to vector<8x1x32xf32>
    tpu.vector_store %arg5[%c0_67, %c7_68, %c0_69], %261 {strides = array<i32>} : memref<8x8x32xf32, #tpu.memory_space<vmem>>, vector<8x1x32xf32>,
    %c0_70 = arith.constant 0 : index
    %c0_71 = arith.constant 0 : index
    %262 = vector.load %arg6[%c0_70, %c0_71] : memref<8x32xf32, #tpu.memory_space<vmem>>, vector<8x32xf32>
    tpu.vector_store %arg6[%c0_70, %c0_71], %258 {strides = array<i32>} : memref<8x32xf32, #tpu.memory_space<vmem>>, vector<8x32xf32>,
    return
  }
  func.func @transform_0(%arg0: i32, %arg1: i32) -> (i32, i32, i32) {
    %c0_i32 = arith.constant 0 : i32
    %c0_i32_0 = arith.constant 0 : i32
    return %arg0, %arg1, %c0_i32 : i32, i32, i32
  }
  func.func @transform_1(%arg0: i32, %arg1: i32) -> (i32, i32) {
    %c0_i32 = arith.constant 0 : i32
    %c0_i32_0 = arith.constant 0 : i32
    %c0_i32_1 = arith.constant 0 : i32
    return %c0_i32, %c0_i32_0 : i32, i32
  }
  func.func @transform_2(%arg0: i32, %arg1: i32) -> (i32, i32) {
    %c0_i32 = arith.constant 0 : i32
    %c0_i32_0 = arith.constant 0 : i32
    %c0_i32_1 = arith.constant 0 : i32
    return %c0_i32, %c0_i32_0 : i32, i32
  }
  func.func @transform_3(%arg0: i32, %arg1: i32) -> (i32, i32, i32) {
    %c0_i32 = arith.constant 0 : i32
    %c0_i32_0 = arith.constant 0 : i32
    return %arg0, %arg1, %c0_i32 : i32, i32, i32
  }
}

</mosaic_0001>

<llo_original>
// kernel: encoder_forward.2
$region0: #{encoder_forward.2}
  #allocation0 [shape = 'u32[]', space=smem, size = 0x4, offset = 0x4, fixed_abs, tag = 'smem constant byte address 0x4 - core index']
  #allocation1 [shape = 'u32[72,128]{1,0:T(1,128)}', space=vmem, size = 0x9000, scoped, tag = 'internal scratch']
  %s0 = inlined_call_operand.vmem [shape: f32[64,64], index: 0, kind: input, shape index: {}]
  %s1 = inlined_call_operand.vmem [shape: f32[64,32], index: 1, kind: input, shape index: {}]
  %s2 = inlined_call_operand.vmem [shape: f32[1,32], index: 2, kind: input, shape index: {}]
  %s3 = inlined_call_operand.vmem [shape: f32[32,96], index: 3, kind: input, shape index: {}]
  %s4 = inlined_call_operand.vmem [shape: f32[1,96], index: 4, kind: input, shape index: {}]
  %s5 = inlined_call_operand.vmem [shape: f32[64,96], index: 5, kind: output, shape index: {}]
  %s6 = sld [smem:[#allocation0]]
  $region30: #{encoder_forward.2} parent=0
    _
  %s8 = ssub.s32 1, %s6
  %s9 = scalar_select 0, %s8, %s6
  // Predicated region
  $region2: #{encoder_forward.2} parent=0 // pred_check
    _
  $region3: #{encoder_forward.2} parent=0 // pred_check_branch
    %11 = sbr.rel (0) target = $region5
  $region4: #{encoder_forward.2} parent=0 // pred_region
    _
  $region5: #{encoder_forward.2} parent=0 // pred_fallthru
    _
  // Predicated region
  $region6: #{encoder_forward.2} parent=0 // pred_check
    _
  $region7: #{encoder_forward.2} parent=0 // pred_check_branch
    %13 = sbr.rel (0) target = $region9
  $region8: #{encoder_forward.2} parent=0 // pred_region
    _
  $region9: #{encoder_forward.2} parent=0 // pred_fallthru
    _
  // Predicated region
  $region10: #{encoder_forward.2} parent=0 // pred_check
    _
  $region11: #{encoder_forward.2} parent=0 // pred_check_branch
    %15 = sbr.rel (0) target = $region13
  $region12: #{encoder_forward.2} parent=0 // pred_region
    _
  $region13: #{encoder_forward.2} parent=0 // pred_fallthru
    _
  // Predicated region
  $region14: #{encoder_forward.2} parent=0 // pred_check
    _
  $region15: #{encoder_forward.2} parent=0 // pred_check_branch
    %17 = sbr.rel (0) target = $region17
  $region16: #{encoder_forward.2} parent=0 // pred_region
    _
  $region17: #{encoder_forward.2} parent=0 // pred_fallthru
    _
  // Predicated region
  $region18: #{encoder_forward.2} parent=0 // pred_check
    _
  $region19: #{encoder_forward.2} parent=0 // pred_check_branch
    %19 = sbr.rel (0) target = $region21
  $region20: #{encoder_forward.2} parent=0 // pred_region
    _
  $region21: #{encoder_forward.2} parent=0 // pred_fallthru
    _
  %v20 = vld [vmem:[%s0] sm:$0xff]
  %v21 = vld [vmem:[%s0 + $0x8] sm:$0xff]
  %v22 = vld [vmem:[%s0 + $0x10] sm:$0xff]
  %v23 = vld [vmem:[%s0 + $0x18] sm:$0xff]
  %v24 = vld [vmem:[%s0 + $0x20] sm:$0xff]
  %v25 = vld [vmem:[%s0 + $0x28] sm:$0xff]
  %v26 = vld [vmem:[%s0 + $0x30] sm:$0xff]
  %v27 = vld [vmem:[%s0 + $0x38] sm:$0xff]
  %v28 = vld [vmem:[%s1] sm:$0xff]
  %v29 = vld [vmem:[%s1 + $0x8] sm:$0xff]
  %v30 = vld [vmem:[%s1 + $0x10] sm:$0xff]
  %v31 = vld [vmem:[%s1 + $0x18] sm:$0xff]
  %v32 = vld [vmem:[%s1 + $0x20] sm:$0xff]
  %v33 = vld [vmem:[%s1 + $0x28] sm:$0xff]
  %v34 = vld [vmem:[%s1 + $0x30] sm:$0xff]
  %v35 = vld [vmem:[%s1 + $0x38] sm:$0xff]
  %v36 = vld [vmem:[%s2] sm:$0x1]
  %v38 = vperm.slane %v36, 0
  %vm40 = vcmask 523264
  %v42 = vsel %vm40, %v20, 0
  %v45 = vsel %vm40, %v21, 0
  %v48 = vsel %vm40, %v22, 0
  %v51 = vsel %vm40, %v23, 0
  %v54 = vsel %vm40, %v24, 0
  %v57 = vsel %vm40, %v25, 0
  %v60 = vsel %vm40, %v26, 0
  %v63 = vsel %vm40, %v27, 0
  %65 = vmatpush.msra.mxu0 0.0
  %66 = vmatpush.msra.mxu0 0.0
  %67 = vmatpush.msra.mxu0 0.0
  %68 = vmatpush.msra.mxu0 0.0
  %69 = vmatpush.msra.mxu0 0.0
  %70 = vmatpush.msra.mxu0 0.0
  %71 = vmatpush.msra.mxu0 0.0
  %72 = vmatpush.msra.mxu0 0.0
  %73 = vmatpush.msra.mxu0 %v35
  %74 = vmatpush.msra.mxu0 %v34
  %75 = vmatpush.msra.mxu0 %v33
  %76 = vmatpush.msra.mxu0 %v32
  %77 = vmatpush.msra.mxu0 %v31
  %78 = vmatpush.msra.mxu0 %v30
  %79 = vmatpush.msra.mxu0 %v29
  %80 = vmatpush.msra.mxu0 %v28
  %81 = vmatmul.f32.gmra.mxu0 %v42
  %v82 = vpop.f32.mrf.mxu0
  %v83 = vadd.f32 %v38, %v82
  %84 = vmatmul.f32.gmra.mxu0 %v45
  %v85 = vpop.f32.mrf.mxu0
  %v86 = vadd.f32 %v38, %v85
  %87 = vmatmul.f32.gmra.mxu0 %v48
  %v88 = vpop.f32.mrf.mxu0
  %v89 = vadd.f32 %v38, %v88
  %90 = vmatmul.f32.gmra.mxu0 %v51
  %v91 = vpop.f32.mrf.mxu0
  %v92 = vadd.f32 %v38, %v91
  %93 = vmatmul.f32.gmra.mxu0 %v54
  %v94 = vpop.f32.mrf.mxu0
  %v95 = vadd.f32 %v38, %v94
  %96 = vmatmul.f32.gmra.mxu0 %v57
  %v97 = vpop.f32.mrf.mxu0
  %v98 = vadd.f32 %v38, %v97
  %99 = vmatmul.f32.gmra.mxu0 %v60
  %v100 = vpop.f32.mrf.mxu0
  %v101 = vadd.f32 %v38, %v100
  %102 = vmatmul.f32.gmra.mxu0 %v63
  %v103 = vpop.f32.mrf.mxu0
  %v104 = vadd.f32 %v38, %v103
  %105 = vdwg.mxu0
  %v106 = vld [vmem:[%s3] sm:$0xff]
  %v107 = vld [vmem:[%s3 + $0x8] sm:$0xff]
  %v108 = vld [vmem:[%s3 + $0x10] sm:$0xff]
  %v109 = vld [vmem:[%s3 + $0x18] sm:$0xff]
  %v110 = vld [vmem:[%s4] sm:$0x1]
  %v112 = vperm.slane %v110, 0
  %vm114 = vcmask 261120
  %v116 = vsel %vm114, %v83, 0
  %v119 = vsel %vm114, %v86, 0
  %v122 = vsel %vm114, %v89, 0
  %v125 = vsel %vm114, %v92, 0
  %v128 = vsel %vm114, %v95, 0
  %v131 = vsel %vm114, %v98, 0
  %v134 = vsel %vm114, %v101, 0
  %v137 = vsel %vm114, %v104, 0
  %139 = vmatpush.msra.mxu0 0.0
  %140 = vmatpush.msra.mxu0 0.0
  %141 = vmatpush.msra.mxu0 0.0
  %142 = vmatpush.msra.mxu0 0.0
  %143 = vmatpush.msra.mxu0 0.0
  %144 = vmatpush.msra.mxu0 0.0
  %145 = vmatpush.msra.mxu0 0.0
  %146 = vmatpush.msra.mxu0 0.0
  %147 = vmatpush.msra.mxu0 0.0
  %148 = vmatpush.msra.mxu0 0.0
  %149 = vmatpush.msra.mxu0 0.0
  %150 = vmatpush.msra.mxu0 0.0
  %151 = vmatpush.msra.mxu0 %v109
  %152 = vmatpush.msra.mxu0 %v108
  %153 = vmatpush.msra.mxu0 %v107
  %154 = vmatpush.msra.mxu0 %v106
  %155 = vmatmul.f32.gmra.mxu0 %v116
  %v156 = vpop.f32.mrf.mxu0
  %v157 = vadd.f32 %v112, %v156
  %158 = vmatmul.f32.gmra.mxu0 %v119
  %v159 = vpop.f32.mrf.mxu0
  %v160 = vadd.f32 %v112, %v159
  %161 = vmatmul.f32.gmra.mxu0 %v122
  %v162 = vpop.f32.mrf.mxu0
  %v163 = vadd.f32 %v112, %v162
  %164 = vmatmul.f32.gmra.mxu0 %v125
  %v165 = vpop.f32.mrf.mxu0
  %v166 = vadd.f32 %v112, %v165
  %167 = vmatmul.f32.gmra.mxu0 %v128
  %v168 = vpop.f32.mrf.mxu0
  %v169 = vadd.f32 %v112, %v168
  %170 = vmatmul.f32.gmra.mxu0 %v131
  %v171 = vpop.f32.mrf.mxu0
  %v172 = vadd.f32 %v112, %v171
  %173 = vmatmul.f32.gmra.mxu0 %v134
  %v174 = vpop.f32.mrf.mxu0
  %v175 = vadd.f32 %v112, %v174
  %176 = vmatmul.f32.gmra.mxu0 %v137
  %v177 = vpop.f32.mrf.mxu0
  %v178 = vadd.f32 %v112, %v177
  %179 = vdwg.mxu0
  %vm180 = vcmask 785408
  %181 = vst.msk [vmem:[%s5] sm:$0xff] %vm180, %v157
  %182 = vst.msk [vmem:[%s5 + $0x8] sm:$0xff] %vm180, %v160
  %183 = vst.msk [vmem:[%s5 + $0x10] sm:$0xff] %vm180, %v163
  %184 = vst.msk [vmem:[%s5 + $0x18] sm:$0xff] %vm180, %v166
  %185 = vst.msk [vmem:[%s5 + $0x20] sm:$0xff] %vm180, %v169
  %186 = vst.msk [vmem:[%s5 + $0x28] sm:$0xff] %vm180, %v172
  %187 = vst.msk [vmem:[%s5 + $0x30] sm:$0xff] %vm180, %v175
  %188 = vst.msk [vmem:[%s5 + $0x38] sm:$0xff] %vm180, %v178
  // Predicated region
  $region22: #{encoder_forward.2} parent=0 // pred_check
    _
  $region23: #{encoder_forward.2} parent=0 // pred_check_branch
    %190 = sbr.rel (0) target = $region25
  $region24: #{encoder_forward.2} parent=0 // pred_region
    _
  $region25: #{encoder_forward.2} parent=0 // pred_fallthru
    _
  // Predicated region
  $region26: #{encoder_forward.2} parent=0 // pred_check
    _
  $region27: #{encoder_forward.2} parent=0 // pred_check_branch
    %192 = sbr.rel (0) target = $region29
  $region28: #{encoder_forward.2} parent=0 // pred_region
    _
  $region29: #{encoder_forward.2} parent=0 // pred_fallthru
    _

// kernel: encoder_forward.3
$region0: #{encoder_forward.3}
  #allocation0 [shape = 'u32[]', space=smem, size = 0x4, offset = 0x4, fixed_abs, tag = 'smem constant byte address 0x4 - core index']
  #allocation1 [shape = 'u32[72,128]{1,0:T(1,128)}', space=vmem, size = 0x9000, scoped, tag = 'internal scratch']
  #allocation2 [shape = 'f32[8,32]{1,0:T(8,128)}', space=vmem, size = 0x1000, scoped, tag = 'scratch operand']
  %s0 = inlined_call_operand.vmem [shape: f32[8,8,96], index: 0, kind: input, shape index: {}]
  %s1 = inlined_call_operand.vmem [shape: f32[32,96], index: 1, kind: input, shape index: {}]
  %s2 = inlined_call_operand.vmem [shape: f32[1,32], index: 2, kind: input, shape index: {}]
  %s3 = inlined_call_operand.vmem [shape: f32[8,8,32], index: 3, kind: output, shape index: {}]
  %s4 = sld [smem:[#allocation0]]
  $region26: #{encoder_forward.3} parent=0
    _
  %s6 = ssub.s32 1, %s4
  %s7 = scalar_select 0, %s6, %s4
  // Predicated region
  $region2: #{encoder_forward.3} parent=0 // pred_check
    _
  $region3: #{encoder_forward.3} parent=0 // pred_check_branch
    %9 = sbr.rel (0) target = $region5
  $region4: #{encoder_forward.3} parent=0 // pred_region
    _
  $region5: #{encoder_forward.3} parent=0 // pred_fallthru
    _
  // Predicated region
  $region6: #{encoder_forward.3} parent=0 // pred_check
    _
  $region7: #{encoder_forward.3} parent=0 // pred_check_branch
    %11 = sbr.rel (0) target = $region9
  $region8: #{encoder_forward.3} parent=0 // pred_region
    _
  $region9: #{encoder_forward.3} parent=0 // pred_fallthru
    _
  // Predicated region
  $region10: #{encoder_forward.3} parent=0 // pred_check
    _
  $region11: #{encoder_forward.3} parent=0 // pred_check_branch
    %13 = sbr.rel (0) target = $region13
  $region12: #{encoder_forward.3} parent=0 // pred_region
    _
  $region13: #{encoder_forward.3} parent=0 // pred_fallthru
    _
  %p14 = scmp.eq.s32.totalorder 0, 0
  // Predicated region
  $region14: #{encoder_forward.3} parent=0 // pred_check
    %p15 = pneg %p14
  $region15: #{encoder_forward.3} parent=0 // pred_check_branch
    %17 = sbr.rel (%p15) target = $region17
  $region16: #{encoder_forward.3} parent=0 // pred_region
    %vm18 = vcmask 261120
    %19 = vst.msk [vmem:[#allocation2] sm:$0xff] %vm18, 0.0
  $region17: #{encoder_forward.3} parent=0 // pred_fallthru
    _
  %v20 = vld [vmem:[%s1] sm:$0xff]
  %v21 = vld [vmem:[%s1 + $0x8] sm:$0xff]
  %v22 = vld [vmem:[%s1 + $0x10] sm:$0xff]
  %v23 = vld [vmem:[%s1 + $0x18] sm:$0xff]
  %v24 = vld [vmem:[%s2] sm:$0x1]
  %v25 = vld [vmem:[#allocation2] sm:$0xff]
  %v26 = vld [vmem:[%s0] sm:$0x1]
  %v27 = vld [vmem:[%s0 + $0x8] sm:$0x1]
  %v28 = vld [vmem:[%s0 + $0x10] sm:$0x1]
  %v29 = vld [vmem:[%s0 + $0x18] sm:$0x1]
  %v30 = vld [vmem:[%s0 + $0x20] sm:$0x1]
  %v31 = vld [vmem:[%s0 + $0x28] sm:$0x1]
  %v32 = vld [vmem:[%s0 + $0x30] sm:$0x1]
  %v33 = vld [vmem:[%s0 + $0x38] sm:$0x1]
  %vm34 = vcmask 261120
  %v36 = vsel %vm34, %v25, 0
  %38 = vmatpush.msra.mxu0 0.0
  %39 = vmatpush.msra.mxu0 0.0
  %40 = vmatpush.msra.mxu0 0.0
  %41 = vmatpush.msra.mxu0 0.0
  %42 = vmatpush.msra.mxu0 0.0
  %43 = vmatpush.msra.mxu0 0.0
  %44 = vmatpush.msra.mxu0 0.0
  %45 = vmatpush.msra.mxu0 0.0
  %46 = vmatpush.msra.mxu0 0.0
  %47 = vmatpush.msra.mxu0 0.0
  %48 = vmatpush.msra.mxu0 0.0
  %49 = vmatpush.msra.mxu0 0.0
  %50 = vmatpush.msra.mxu0 %v23
  %51 = vmatpush.msra.mxu0 %v22
  %52 = vmatpush.msra.mxu0 %v21
  %53 = vmatpush.msra.mxu0 %v20
  %54 = vmatmul.f32.gmra.mxu0 %v36
  %v55 = vpop.f32.mrf.mxu0
  %v56 = vadd.f32 0.0, %v55
  %57 = vdwg.mxu0
  %v59 = vrot.slane %v56, 1
  %v60 = vrot.slane %v56, 2
  %v61 = vrot.slane %v56, 3
  %v62 = vrot.slane %v56, 4
  %v63 = vrot.slane %v56, 5
  %v64 = vrot.slane %v56, 6
  %v65 = vrot.slane %v56, 7
  %v74 = vadd.f32 %v26, %v56
  %v75 = vadd.f32 %v27, %v59
  %v76 = vadd.f32 %v28, %v60
  %v77 = vadd.f32 %v29, %v61
  %v78 = vadd.f32 %v30, %v62
  %v79 = vadd.f32 %v31, %v63
  %v80 = vadd.f32 %v32, %v64
  %v81 = vadd.f32 %v33, %v65
  %v82 = vxor.u32 %v74, 2147483648
  %v83 = vxor.u32 %v75, 2147483648
  %v84 = vxor.u32 %v76, 2147483648
  %v85 = vxor.u32 %v77, 2147483648
  %v86 = vxor.u32 %v78, 2147483648
  %v87 = vxor.u32 %v79, 2147483648
  %v88 = vxor.u32 %v80, 2147483648
  %v89 = vxor.u32 %v81, 2147483648
  %v90 = vmul.f32 %v82, 1.442695
  %v91 = vpow.pop %v90
  %v92 = vmul.f32 %v83, 1.442695
  %v93 = vpow.pop %v92
  %v94 = vmul.f32 %v84, 1.442695
  %v95 = vpow.pop %v94
  %v96 = vmul.f32 %v85, 1.442695
  %v97 = vpow.pop %v96
  %v98 = vmul.f32 %v86, 1.442695
  %v99 = vpow.pop %v98
  %v100 = vmul.f32 %v87, 1.442695
  %v101 = vpow.pop %v100
  %v102 = vmul.f32 %v88, 1.442695
  %v103 = vpow.pop %v102
  %v104 = vmul.f32 %v89, 1.442695
  %v105 = vpow.pop %v104
  %v106 = vadd.f32 %v91, 1.0
  %v107 = vadd.f32 %v93, 1.0
  %v108 = vadd.f32 %v95, 1.0
  %v109 = vadd.f32 %v97, 1.0
  %v110 = vadd.f32 %v99, 1.0
  %v111 = vadd.f32 %v101, 1.0
  %v112 = vadd.f32 %v103, 1.0
  %v113 = vadd.f32 %v105, 1.0
  %v114 = vrcp.pop %v106
  %v115 = vmul.f32 %v106, %v114
  %v116 = vsub.f32 1.0, %v115
  %v117 = vmul.f32 %v114, %v116
  %v118 = vadd.f32 %v114, %v117
  %vm119 = vweird.f32 %v106
  %vm120 = vweird.f32 %v114
  %vm121 = vmor %vm119, %vm120
  %v122 = vsel %vm121, %v114, %v118
  %v123 = vand.u32 2147483647, %v106
  %vm124 = vcmp.eq.f32.partialorder %v123, 8.507059e+37
  %v125 = vand.u32 %v106, 2147483648
  %v126 = vor.u32 1.1754944e-38, %v125
  %v127 = vsel %vm124, %v126, %v122
  %v128 = vmul.f32 1.0, %v127
  %v129 = vrcp.pop %v107
  %v130 = vmul.f32 %v107, %v129
  %v131 = vsub.f32 1.0, %v130
  %v132 = vmul.f32 %v129, %v131
  %v133 = vadd.f32 %v129, %v132
  %vm134 = vweird.f32 %v107
  %vm135 = vweird.f32 %v129
  %vm136 = vmor %vm134, %vm135
  %v137 = vsel %vm136, %v129, %v133
  %v138 = vand.u32 2147483647, %v107
  %vm139 = vcmp.eq.f32.partialorder %v138, 8.507059e+37
  %v140 = vand.u32 %v107, 2147483648
  %v141 = vor.u32 1.1754944e-38, %v140
  %v142 = vsel %vm139, %v141, %v137
  %v143 = vmul.f32 1.0, %v142
  %v144 = vrcp.pop %v108
  %v145 = vmul.f32 %v108, %v144
  %v146 = vsub.f32 1.0, %v145
  %v147 = vmul.f32 %v144, %v146
  %v148 = vadd.f32 %v144, %v147
  %vm149 = vweird.f32 %v108
  %vm150 = vweird.f32 %v144
  %vm151 = vmor %vm149, %vm150
  %v152 = vsel %vm151, %v144, %v148
  %v153 = vand.u32 2147483647, %v108
  %vm154 = vcmp.eq.f32.partialorder %v153, 8.507059e+37
  %v155 = vand.u32 %v108, 2147483648
  %v156 = vor.u32 1.1754944e-38, %v155
  %v157 = vsel %vm154, %v156, %v152
  %v158 = vmul.f32 1.0, %v157
  %v159 = vrcp.pop %v109
  %v160 = vmul.f32 %v109, %v159
  %v161 = vsub.f32 1.0, %v160
  %v162 = vmul.f32 %v159, %v161
  %v163 = vadd.f32 %v159, %v162
  %vm164 = vweird.f32 %v109
  %vm165 = vweird.f32 %v159
  %vm166 = vmor %vm164, %vm165
  %v167 = vsel %vm166, %v159, %v163
  %v168 = vand.u32 2147483647, %v109
  %vm169 = vcmp.eq.f32.partialorder %v168, 8.507059e+37
  %v170 = vand.u32 %v109, 2147483648
  %v171 = vor.u32 1.1754944e-38, %v170
  %v172 = vsel %vm169, %v171, %v167
  %v173 = vmul.f32 1.0, %v172
  %v174 = vrcp.pop %v110
  %v175 = vmul.f32 %v110, %v174
  %v176 = vsub.f32 1.0, %v175
  %v177 = vmul.f32 %v174, %v176
  %v178 = vadd.f32 %v174, %v177
  %vm179 = vweird.f32 %v110
  %vm180 = vweird.f32 %v174
  %vm181 = vmor %vm179, %vm180
  %v182 = vsel %vm181, %v174, %v178
  %v183 = vand.u32 2147483647, %v110
  %vm184 = vcmp.eq.f32.partialorder %v183, 8.507059e+37
  %v185 = vand.u32 %v110, 2147483648
  %v186 = vor.u32 1.1754944e-38, %v185
  %v187 = vsel %vm184, %v186, %v182
  %v188 = vmul.f32 1.0, %v187
  %v189 = vrcp.pop %v111
  %v190 = vmul.f32 %v111, %v189
  %v191 = vsub.f32 1.0, %v190
  %v192 = vmul.f32 %v189, %v191
  %v193 = vadd.f32 %v189, %v192
  %vm194 = vweird.f32 %v111
  %vm195 = vweird.f32 %v189
  %vm196 = vmor %vm194, %vm195
  %v197 = vsel %vm196, %v189, %v193
  %v198 = vand.u32 2147483647, %v111
  %vm199 = vcmp.eq.f32.partialorder %v198, 8.507059e+37
  %v200 = vand.u32 %v111, 2147483648
  %v201 = vor.u32 1.1754944e-38, %v200
  %v202 = vsel %vm199, %v201, %v197
  %v203 = vmul.f32 1.0, %v202
  %v204 = vrcp.pop %v112
  %v205 = vmul.f32 %v112, %v204
  %v206 = vsub.f32 1.0, %v205
  %v207 = vmul.f32 %v204, %v206
  %v208 = vadd.f32 %v204, %v207
  %vm209 = vweird.f32 %v112
  %vm210 = vweird.f32 %v204
  %vm211 = vmor %vm209, %vm210
  %v212 = vsel %vm211, %v204, %v208
  %v213 = vand.u32 2147483647, %v112
  %vm214 = vcmp.eq.f32.partialorder %v213, 8.507059e+37
  %v215 = vand.u32 %v112, 2147483648
  %v216 = vor.u32 1.1754944e-38, %v215
  %v217 = vsel %vm214, %v216, %v212
  %v218 = vmul.f32 1.0, %v217
  %v219 = vrcp.pop %v113
  %v220 = vmul.f32 %v113, %v219
  %v221 = vsub.f32 1.0, %v220
  %v222 = vmul.f32 %v219, %v221
  %v223 = vadd.f32 %v219, %v222
  %vm224 = vweird.f32 %v113
  %vm225 = vweird.f32 %v219
  %vm226 = vmor %vm224, %vm225
  %v227 = vsel %vm226, %v219, %v223
  %v228 = vand.u32 2147483647, %v113
  %vm229 = vcmp.eq.f32.partialorder %v228, 8.507059e+37
  %v230 = vand.u32 %v113, 2147483648
  %v231 = vor.u32 1.1754944e-38, %v230
  %v232 = vsel %vm229, %v231, %v227
  %v233 = vmul.f32 1.0, %v232
  %v235 = vperm.slane %v24, 0
  %236 = vrot.lane.b32.xlu0 %v235, 64
  %v237 = vpop.permute.xlu0 %236
  %v239 = vadd.f32 %v56, %v237
  %v241 = vrot.slane %v239, 1
  %v242 = vrot.slane %v239, 2
  %v243 = vrot.slane %v239, 3
  %v244 = vrot.slane %v239, 4
  %v245 = vrot.slane %v239, 5
  %v246 = vrot.slane %v239, 6
  %v247 = vrot.slane %v239, 7
  %248 = vrot.lane.b32.xlu0 %v239, 64
  %v249 = vpop.permute.xlu0 %248
  %250 = vrot.lane.b32.xlu0 %v241, 64
  %v251 = vpop.permute.xlu0 %250
  %252 = vrot.lane.b32.xlu0 %v242, 64
  %v253 = vpop.permute.xlu0 %252
  %254 = vrot.lane.b32.xlu0 %v243, 64
  %v255 = vpop.permute.xlu0 %254
  %256 = vrot.lane.b32.xlu0 %v244, 64
  %v257 = vpop.permute.xlu0 %256
  %258 = vrot.lane.b32.xlu0 %v245, 64
  %v259 = vpop.permute.xlu0 %258
  %260 = vrot.lane.b32.xlu0 %v246, 64
  %v261 = vpop.permute.xlu0 %260
  %262 = vrot.lane.b32.xlu0 %v247, 64
  %v263 = vpop.permute.xlu0 %262
  %v272 = vmul.f32 %v128, %v249
  %v273 = vmul.f32 %v143, %v251
  %v274 = vmul.f32 %v158, %v253
  %v275 = vmul.f32 %v173, %v255
  %v276 = vmul.f32 %v188, %v257
  %v277 = vmul.f32 %v203, %v259
  %v278 = vmul.f32 %v218, %v261
  %v279 = vmul.f32 %v233, %v263
  %288 = vrot.lane.b32.xlu0 %v272, 64
  %v289 = vpop.permute.xlu0 %288
  %290 = vrot.lane.b32.xlu0 %v273, 64
  %v291 = vpop.permute.xlu0 %290
  %292 = vrot.lane.b32.xlu0 %v274, 64
  %v293 = vpop.permute.xlu0 %292
  %294 = vrot.lane.b32.xlu0 %v275, 64
  %v295 = vpop.permute.xlu0 %294
  %296 = vrot.lane.b32.xlu0 %v276, 64
  %v297 = vpop.permute.xlu0 %296
  %298 = vrot.lane.b32.xlu0 %v277, 64
  %v299 = vpop.permute.xlu0 %298
  %300 = vrot.lane.b32.xlu0 %v278, 64
  %v301 = vpop.permute.xlu0 %300
  %302 = vrot.lane.b32.xlu0 %v279, 64
  %v303 = vpop.permute.xlu0 %302
  %v312 = vadd.f32 %v26, %v289
  %v313 = vadd.f32 %v27, %v291
  %v314 = vadd.f32 %v28, %v293
  %v315 = vadd.f32 %v29, %v295
  %v316 = vadd.f32 %v30, %v297
  %v317 = vadd.f32 %v31, %v299
  %v318 = vadd.f32 %v32, %v301
  %v319 = vadd.f32 %v33, %v303
  %v320 = vtanh.pop %v312
  %v321 = vtanh.pop %v313
  %v322 = vtanh.pop %v314
  %v323 = vtanh.pop %v315
  %v324 = vtanh.pop %v316
  %v325 = vtanh.pop %v317
  %v326 = vtanh.pop %v318
  %v327 = vtanh.pop %v319
  %v336 = vrot.slane %v321, 7
  %vm337 = vcmask 1041409
  %v338 = vsel %vm337, %v336, %v320
  %v339 = vrot.slane %v322, 6
  %vm340 = vcmask 1042434
  %v341 = vsel %vm340, %v339, %v338
  %v342 = vrot.slane %v323, 5
  %vm343 = vcmask 1043459
  %v344 = vsel %vm343, %v342, %v341
  %v345 = vrot.slane %v324, 4
  %vm346 = vcmask 1044484
  %v347 = vsel %vm346, %v345, %v344
  %v348 = vrot.slane %v325, 3
  %vm349 = vcmask 1045509
  %v350 = vsel %vm349, %v348, %v347
  %v351 = vrot.slane %v326, 2
  %vm352 = vcmask 1046534
  %v353 = vsel %vm352, %v351, %v350
  %v354 = vrot.slane %v327, 1
  %vm355 = vcmask 1047559
  %v356 = vsel %vm355, %v354, %v353
  %357 = vrot.lane.b32.xlu0 %v356, 64
  %v358 = vpop.permute.xlu0 %357
  %v360 = vsub.f32 %v25, %v358
  %v362 = vrot.slane %v360, 1
  %v363 = vrot.slane %v360, 2
  %v364 = vrot.slane %v360, 3
  %v365 = vrot.slane %v360, 4
  %v366 = vrot.slane %v360, 5
  %v367 = vrot.slane %v360, 6
  %v368 = vrot.slane %v360, 7
  %369 = vrot.lane.b32.xlu0 %v360, 32
  %v370 = vpop.permute.xlu0 %369
  %371 = vrot.lane.b32.xlu0 %v362, 32
  %v372 = vpop.permute.xlu0 %371
  %373 = vrot.lane.b32.xlu0 %v363, 32
  %v374 = vpop.permute.xlu0 %373
  %375 = vrot.lane.b32.xlu0 %v364, 32
  %v376 = vpop.permute.xlu0 %375
  %377 = vrot.lane.b32.xlu0 %v365, 32
  %v378 = vpop.permute.xlu0 %377
  %379 = vrot.lane.b32.xlu0 %v366, 32
  %v380 = vpop.permute.xlu0 %379
  %381 = vrot.lane.b32.xlu0 %v367, 32
  %v382 = vpop.permute.xlu0 %381
  %383 = vrot.lane.b32.xlu0 %v368, 32
  %v384 = vpop.permute.xlu0 %383
  %v393 = vmul.f32 %v128, %v370
  %v394 = vmul.f32 %v143, %v372
  %v395 = vmul.f32 %v158, %v374
  %v396 = vmul.f32 %v173, %v376
  %v397 = vmul.f32 %v188, %v378
  %v398 = vmul.f32 %v203, %v380
  %v399 = vmul.f32 %v218, %v382
  %v400 = vmul.f32 %v233, %v384
  %409 = vrot.lane.b32.xlu0 %v393, 32
  %v410 = vpop.permute.xlu0 %409
  %411 = vrot.lane.b32.xlu0 %v394, 32
  %v412 = vpop.permute.xlu0 %411
  %413 = vrot.lane.b32.xlu0 %v395, 32
  %v414 = vpop.permute.xlu0 %413
  %415 = vrot.lane.b32.xlu0 %v396, 32
  %v416 = vpop.permute.xlu0 %415
  %417 = vrot.lane.b32.xlu0 %v397, 32
  %v418 = vpop.permute.xlu0 %417
  %419 = vrot.lane.b32.xlu0 %v398, 32
  %v420 = vpop.permute.xlu0 %419
  %421 = vrot.lane.b32.xlu0 %v399, 32
  %v422 = vpop.permute.xlu0 %421
  %423 = vrot.lane.b32.xlu0 %v400, 32
  %v424 = vpop.permute.xlu0 %423
  %v433 = vadd.f32 %v320, %v410
  %v434 = vadd.f32 %v321, %v412
  %v435 = vadd.f32 %v322, %v414
  %v436 = vadd.f32 %v323, %v416
  %v437 = vadd.f32 %v324, %v418
  %v438 = vadd.f32 %v325, %v420
  %v439 = vadd.f32 %v326, %v422
  %v440 = vadd.f32 %v327, %v424
  %449 = vrot.lane.b32.xlu0 %v433, 64
  %v450 = vpop.permute.xlu0 %449
  %451 = vrot.lane.b32.xlu0 %v434, 64
  %v452 = vpop.permute.xlu0 %451
  %453 = vrot.lane.b32.xlu0 %v435, 64
  %v454 = vpop.permute.xlu0 %453
  %455 = vrot.lane.b32.xlu0 %v436, 64
  %v456 = vpop.permute.xlu0 %455
  %457 = vrot.lane.b32.xlu0 %v437, 64
  %v458 = vpop.permute.xlu0 %457
  %459 = vrot.lane.b32.xlu0 %v438, 64
  %v460 = vpop.permute.xlu0 %459
  %461 = vrot.lane.b32.xlu0 %v439, 64
  %v462 = vpop.permute.xlu0 %461
  %463 = vrot.lane.b32.xlu0 %v440, 64
  %v464 = vpop.permute.xlu0 %463
  %vm473 = vcmask 253952
  %474 = vst.msk [vmem:[%s3] sm:$0x1] %vm473, %v450
  %475 = vst.msk [vmem:[%s3 + $0x8] sm:$0x1] %vm473, %v452
  %476 = vst.msk [vmem:[%s3 + $0x10] sm:$0x1] %vm473, %v454
  %477 = vst.msk [vmem:[%s3 + $0x18] sm:$0x1] %vm473, %v456
  %478 = vst.msk [vmem:[%s3 + $0x20] sm:$0x1] %vm473, %v458
  %479 = vst.msk [vmem:[%s3 + $0x28] sm:$0x1] %vm473, %v460
  %480 = vst.msk [vmem:[%s3 + $0x30] sm:$0x1] %vm473, %v462
  %481 = vst.msk [vmem:[%s3 + $0x38] sm:$0x1] %vm473, %v464
  %v482 = vld [vmem:[%s0 + $0x1] sm:$0x1]
  %v483 = vld [vmem:[%s0 + $0x9] sm:$0x1]
  %v484 = vld [vmem:[%s0 + $0x11] sm:$0x1]
  %v485 = vld [vmem:[%s0 + $0x19] sm:$0x1]
  %v486 = vld [vmem:[%s0 + $0x21] sm:$0x1]
  %v487 = vld [vmem:[%s0 + $0x29] sm:$0x1]
  %v488 = vld [vmem:[%s0 + $0x31] sm:$0x1]
  %v489 = vld [vmem:[%s0 + $0x39] sm:$0x1]
  %v490 = vrot.slane %v434, 7
  %v491 = vsel %vm337, %v490, %v433
  %v492 = vrot.slane %v435, 6
  %v493 = vsel %vm340, %v492, %v491
  %v494 = vrot.slane %v436, 5
  %v495 = vsel %vm343, %v494, %v493
  %v496 = vrot.slane %v437, 4
  %v497 = vsel %vm346, %v496, %v495
  %v498 = vrot.slane %v438, 3
  %v499 = vsel %vm349, %v498, %v497
  %v500 = vrot.slane %v439, 2
  %v501 = vsel %vm352, %v500, %v499
  %v502 = vrot.slane %v440, 1
  %v503 = vsel %vm355, %v502, %v501
  %504 = vrot.lane.b32.xlu0 %v503, 64
  %v505 = vpop.permute.xlu0 %504
  %v506 = vsel %vm34, %v505, 0
  %508 = vmatpush.msra.mxu0 0.0
  %509 = vmatpush.msra.mxu0 0.0
  %510 = vmatpush.msra.mxu0 0.0
  %511 = vmatpush.msra.mxu0 0.0
  %512 = vmatpush.msra.mxu0 0.0
  %513 = vmatpush.msra.mxu0 0.0
  %514 = vmatpush.msra.mxu0 0.0
  %515 = vmatpush.msra.mxu0 0.0
  %516 = vmatpush.msra.mxu0 0.0
  %517 = vmatpush.msra.mxu0 0.0
  %518 = vmatpush.msra.mxu0 0.0
  %519 = vmatpush.msra.mxu0 0.0
  %520 = vmatpush.msra.mxu0 %v23
  %521 = vmatpush.msra.mxu0 %v22
  %522 = vmatpush.msra.mxu0 %v21
  %523 = vmatpush.msra.mxu0 %v20
  %524 = vmatmul.f32.gmra.mxu0 %v506
  %v525 = vpop.f32.mrf.mxu0
  %v526 = vadd.f32 0.0, %v525
  %527 = vdwg.mxu0
  %v529 = vrot.slane %v526, 1
  %v530 = vrot.slane %v526, 2
  %v531 = vrot.slane %v526, 3
  %v532 = vrot.slane %v526, 4
  %v533 = vrot.slane %v526, 5
  %v534 = vrot.slane %v526, 6
  %v535 = vrot.slane %v526, 7
  %v544 = vadd.f32 %v482, %v526
  %v545 = vadd.f32 %v483, %v529
  %v546 = vadd.f32 %v484, %v530
  %v547 = vadd.f32 %v485, %v531
  %v548 = vadd.f32 %v486, %v532
  %v549 = vadd.f32 %v487, %v533
  %v550 = vadd.f32 %v488, %v534
  %v551 = vadd.f32 %v489, %v535
  %v552 = vxor.u32 %v544, 2147483648
  %v553 = vxor.u32 %v545, 2147483648
  %v554 = vxor.u32 %v546, 2147483648
  %v555 = vxor.u32 %v547, 2147483648
  %v556 = vxor.u32 %v548, 2147483648
  %v557 = vxor.u32 %v549, 2147483648
  %v558 = vxor.u32 %v550, 2147483648
  %v559 = vxor.u32 %v551, 2147483648
  %v560 = vmul.f32 %v552, 1.442695
  %v561 = vpow.pop %v560
  %v562 = vmul.f32 %v553, 1.442695
  %v563 = vpow.pop %v562
  %v564 = vmul.f32 %v554, 1.442695
  %v565 = vpow.pop %v564
  %v566 = vmul.f32 %v555, 1.442695
  %v567 = vpow.pop %v566
  %v568 = vmul.f32 %v556, 1.442695
  %v569 = vpow.pop %v568
  %v570 = vmul.f32 %v557, 1.442695
  %v571 = vpow.pop %v570
  %v572 = vmul.f32 %v558, 1.442695
  %v573 = vpow.pop %v572
  %v574 = vmul.f32 %v559, 1.442695
  %v575 = vpow.pop %v574
  %v576 = vadd.f32 %v561, 1.0
  %v577 = vadd.f32 %v563, 1.0
  %v578 = vadd.f32 %v565, 1.0
  %v579 = vadd.f32 %v567, 1.0
  %v580 = vadd.f32 %v569, 1.0
  %v581 = vadd.f32 %v571, 1.0
  %v582 = vadd.f32 %v573, 1.0
  %v583 = vadd.f32 %v575, 1.0
  %v584 = vrcp.pop %v576
  %v585 = vmul.f32 %v576, %v584
  %v586 = vsub.f32 1.0, %v585
  %v587 = vmul.f32 %v584, %v586
  %v588 = vadd.f32 %v584, %v587
  %vm589 = vweird.f32 %v576
  %vm590 = vweird.f32 %v584
  %vm591 = vmor %vm589, %vm590
  %v592 = vsel %vm591, %v584, %v588
  %v593 = vand.u32 2147483647, %v576
  %vm594 = vcmp.eq.f32.partialorder %v593, 8.507059e+37
  %v595 = vand.u32 %v576, 2147483648
  %v596 = vor.u32 1.1754944e-38, %v595
  %v597 = vsel %vm594, %v596, %v592
  %v598 = vmul.f32 1.0, %v597
  %v599 = vrcp.pop %v577
  %v600 = vmul.f32 %v577, %v599
  %v601 = vsub.f32 1.0, %v600
  %v602 = vmul.f32 %v599, %v601
  %v603 = vadd.f32 %v599, %v602
  %vm604 = vweird.f32 %v577
  %vm605 = vweird.f32 %v599
  %vm606 = vmor %vm604, %vm605
  %v607 = vsel %vm606, %v599, %v603
  %v608 = vand.u32 2147483647, %v577
  %vm609 = vcmp.eq.f32.partialorder %v608, 8.507059e+37
  %v610 = vand.u32 %v577, 2147483648
  %v611 = vor.u32 1.1754944e-38, %v610
  %v612 = vsel %vm609, %v611, %v607
  %v613 = vmul.f32 1.0, %v612
  %v614 = vrcp.pop %v578
  %v615 = vmul.f32 %v578, %v614
  %v616 = vsub.f32 1.0, %v615
  %v617 = vmul.f32 %v614, %v616
  %v618 = vadd.f32 %v614, %v617
  %vm619 = vweird.f32 %v578
  %vm620 = vweird.f32 %v614
  %vm621 = vmor %vm619, %vm620
  %v622 = vsel %vm621, %v614, %v618
  %v623 = vand.u32 2147483647, %v578
  %vm624 = vcmp.eq.f32.partialorder %v623, 8.507059e+37
  %v625 = vand.u32 %v578, 2147483648
  %v626 = vor.u32 1.1754944e-38, %v625
  %v627 = vsel %vm624, %v626, %v622
  %v628 = vmul.f32 1.0, %v627
  %v629 = vrcp.pop %v579
  %v630 = vmul.f32 %v579, %v629
  %v631 = vsub.f32 1.0, %v630
  %v632 = vmul.f32 %v629, %v631
  %v633 = vadd.f32 %v629, %v632
  %vm634 = vweird.f32 %v579
  %vm635 = vweird.f32 %v629
  %vm636 = vmor %vm634, %vm635
  %v637 = vsel %vm636, %v629, %v633
  %v638 = vand.u32 2147483647, %v579
  %vm639 = vcmp.eq.f32.partialorder %v638, 8.507059e+37
  %v640 = vand.u32 %v579, 2147483648
  %v641 = vor.u32 1.1754944e-38, %v640
  %v642 = vsel %vm639, %v641, %v637
  %v643 = vmul.f32 1.0, %v642
  %v644 = vrcp.pop %v580
  %v645 = vmul.f32 %v580, %v644
  %v646 = vsub.f32 1.0, %v645
  %v647 = vmul.f32 %v644, %v646
  %v648 = vadd.f32 %v644, %v647
  %vm649 = vweird.f32 %v580
  %vm650 = vweird.f32 %v644
  %vm651 = vmor %vm649, %vm650
  %v652 = vsel %vm651, %v644, %v648
  %v653 = vand.u32 2147483647, %v580
  %vm654 = vcmp.eq.f32.partialorder %v653, 8.507059e+37
  %v655 = vand.u32 %v580, 2147483648
  %v656 = vor.u32 1.1754944e-38, %v655
  %v657 = vsel %vm654, %v656, %v652
  %v658 = vmul.f32 1.0, %v657
  %v659 = vrcp.pop %v581
  %v660 = vmul.f32 %v581, %v659
  %v661 = vsub.f32 1.0, %v660
  %v662 = vmul.f32 %v659, %v661
  %v663 = vadd.f32 %v659, %v662
  %vm664 = vweird.f32 %v581
  %vm665 = vweird.f32 %v659
  %vm666 = vmor %vm664, %vm665
  %v667 = vsel %vm666, %v659, %v663
  %v668 = vand.u32 2147483647, %v581
  %vm669 = vcmp.eq.f32.partialorder %v668, 8.507059e+37
  %v670 = vand.u32 %v581, 2147483648
  %v671 = vor.u32 1.1754944e-38, %v670
  %v672 = vsel %vm669, %v671, %v667
  %v673 = vmul.f32 1.0, %v672
  %v674 = vrcp.pop %v582
  %v675 = vmul.f32 %v582, %v674
  %v676 = vsub.f32 1.0, %v675
  %v677 = vmul.f32 %v674, %v676
  %v678 = vadd.f32 %v674, %v677
  %vm679 = vweird.f32 %v582
  %vm680 = vweird.f32 %v674
  %vm681 = vmor %vm679, %vm680
  %v682 = vsel %vm681, %v674, %v678
  %v683 = vand.u32 2147483647, %v582
  %vm684 = vcmp.eq.f32.partialorder %v683, 8.507059e+37
  %v685 = vand.u32 %v582, 2147483648
  %v686 = vor.u32 1.1754944e-38, %v685
  %v687 = vsel %vm684, %v686, %v682
  %v688 = vmul.f32 1.0, %v687
  %v689 = vrcp.pop %v583
  %v690 = vmul.f32 %v583, %v689
  %v691 = vsub.f32 1.0, %v690
  %v692 = vmul.f32 %v689, %v691
  %v693 = vadd.f32 %v689, %v692
  %vm694 = vweird.f32 %v583
  %vm695 = vweird.f32 %v689
  %vm696 = vmor %vm694, %vm695
  %v697 = vsel %vm696, %v689, %v693
  %v698 = vand.u32 2147483647, %v583
  %vm699 = vcmp.eq.f32.partialorder %v698, 8.507059e+37
  %v700 = vand.u32 %v583, 2147483648
  %v701 = vor.u32 1.1754944e-38, %v700
  %v702 = vsel %vm699, %v701, %v697
  %v703 = vmul.f32 1.0, %v702
  %v704 = vadd.f32 %v526, %v237
  %v706 = vrot.slane %v704, 1
  %v707 = vrot.slane %v704, 2
  %v708 = vrot.slane %v704, 3
  %v709 = vrot.slane %v704, 4
  %v710 = vrot.slane %v704, 5
  %v711 = vrot.slane %v704, 6
  %v712 = vrot.slane %v704, 7
  %713 = vrot.lane.b32.xlu0 %v704, 64
  %v714 = vpop.permute.xlu0 %713
  %715 = vrot.lane.b32.xlu0 %v706, 64
  %v716 = vpop.permute.xlu0 %715
  %717 = vrot.lane.b32.xlu0 %v707, 64
  %v718 = vpop.permute.xlu0 %717
  %719 = vrot.lane.b32.xlu0 %v708, 64
  %v720 = vpop.permute.xlu0 %719
  %721 = vrot.lane.b32.xlu0 %v709, 64
  %v722 = vpop.permute.xlu0 %721
  %723 = vrot.lane.b32.xlu0 %v710, 64
  %v724 = vpop.permute.xlu0 %723
  %725 = vrot.lane.b32.xlu0 %v711, 64
  %v726 = vpop.permute.xlu0 %725
  %727 = vrot.lane.b32.xlu0 %v712, 64
  %v728 = vpop.permute.xlu0 %727
  %v737 = vmul.f32 %v598, %v714
  %v738 = vmul.f32 %v613, %v716
  %v739 = vmul.f32 %v628, %v718
  %v740 = vmul.f32 %v643, %v720
  %v741 = vmul.f32 %v658, %v722
  %v742 = vmul.f32 %v673, %v724
  %v743 = vmul.f32 %v688, %v726
  %v744 = vmul.f32 %v703, %v728
  %753 = vrot.lane.b32.xlu0 %v737, 64
  %v754 = vpop.permute.xlu0 %753
  %755 = vrot.lane.b32.xlu0 %v738, 64
  %v756 = vpop.permute.xlu0 %755
  %757 = vrot.lane.b32.xlu0 %v739, 64
  %v758 = vpop.permute.xlu0 %757
  %759 = vrot.lane.b32.xlu0 %v740, 64
  %v760 = vpop.permute.xlu0 %759
  %761 = vrot.lane.b32.xlu0 %v741, 64
  %v762 = vpop.permute.xlu0 %761
  %763 = vrot.lane.b32.xlu0 %v742, 64
  %v764 = vpop.permute.xlu0 %763
  %765 = vrot.lane.b32.xlu0 %v743, 64
  %v766 = vpop.permute.xlu0 %765
  %767 = vrot.lane.b32.xlu0 %v744, 64
  %v768 = vpop.permute.xlu0 %767
  %v777 = vadd.f32 %v482, %v754
  %v778 = vadd.f32 %v483, %v756
  %v779 = vadd.f32 %v484, %v758
  %v780 = vadd.f32 %v485, %v760
  %v781 = vadd.f32 %v486, %v762
  %v782 = vadd.f32 %v487, %v764
  %v783 = vadd.f32 %v488, %v766
  %v784 = vadd.f32 %v489, %v768
  %v785 = vtanh.pop %v777
  %v786 = vtanh.pop %v778
  %v787 = vtanh.pop %v779
  %v788 = vtanh.pop %v780
  %v789 = vtanh.pop %v781
  %v790 = vtanh.pop %v782
  %v791 = vtanh.pop %v783
  %v792 = vtanh.pop %v784
  %v793 = vsub.f32 %v433, %v785
  %v794 = vsub.f32 %v434, %v786
  %v795 = vsub.f32 %v435, %v787
  %v796 = vsub.f32 %v436, %v788
  %v797 = vsub.f32 %v437, %v789
  %v798 = vsub.f32 %v438, %v790
  %v799 = vsub.f32 %v439, %v791
  %v800 = vsub.f32 %v440, %v792
  %809 = vrot.lane.b32.xlu0 %v793, 96
  %v810 = vpop.permute.xlu0 %809
  %811 = vrot.lane.b32.xlu0 %v794, 96
  %v812 = vpop.permute.xlu0 %811
  %813 = vrot.lane.b32.xlu0 %v795, 96
  %v814 = vpop.permute.xlu0 %813
  %815 = vrot.lane.b32.xlu0 %v796, 96
  %v816 = vpop.permute.xlu0 %815
  %817 = vrot.lane.b32.xlu0 %v797, 96
  %v818 = vpop.permute.xlu0 %817
  %819 = vrot.lane.b32.xlu0 %v798, 96
  %v820 = vpop.permute.xlu0 %819
  %821 = vrot.lane.b32.xlu0 %v799, 96
  %v822 = vpop.permute.xlu0 %821
  %823 = vrot.lane.b32.xlu0 %v800, 96
  %v824 = vpop.permute.xlu0 %823
  %v833 = vmul.f32 %v598, %v810
  %v834 = vmul.f32 %v613, %v812
  %v835 = vmul.f32 %v628, %v814
  %v836 = vmul.f32 %v643, %v816
  %v837 = vmul.f32 %v658, %v818
  %v838 = vmul.f32 %v673, %v820
  %v839 = vmul.f32 %v688, %v822
  %v840 = vmul.f32 %v703, %v824
  %849 = vrot.lane.b32.xlu0 %v833, 32
  %v850 = vpop.permute.xlu0 %849
  %851 = vrot.lane.b32.xlu0 %v834, 32
  %v852 = vpop.permute.xlu0 %851
  %853 = vrot.lane.b32.xlu0 %v835, 32
  %v854 = vpop.permute.xlu0 %853
  %855 = vrot.lane.b32.xlu0 %v836, 32
  %v856 = vpop.permute.xlu0 %855
  %857 = vrot.lane.b32.xlu0 %v837, 32
  %v858 = vpop.permute.xlu0 %857
  %859 = vrot.lane.b32.xlu0 %v838, 32
  %v860 = vpop.permute.xlu0 %859
  %861 = vrot.lane.b32.xlu0 %v839, 32
  %v862 = vpop.permute.xlu0 %861
  %863 = vrot.lane.b32.xlu0 %v840, 32
  %v864 = vpop.permute.xlu0 %863
  %v873 = vadd.f32 %v785, %v850
  %v874 = vadd.f32 %v786, %v852
  %v875 = vadd.f32 %v787, %v854
  %v876 = vadd.f32 %v788, %v856
  %v877 = vadd.f32 %v789, %v858
  %v878 = vadd.f32 %v790, %v860
  %v879 = vadd.f32 %v791, %v862
  %v880 = vadd.f32 %v792, %v864
  %889 = vrot.lane.b32.xlu0 %v873, 64
  %v890 = vpop.permute.xlu0 %889
  %891 = vrot.lane.b32.xlu0 %v874, 64
  %v892 = vpop.permute.xlu0 %891
  %893 = vrot.lane.b32.xlu0 %v875, 64
  %v894 = vpop.permute.xlu0 %893
  %895 = vrot.lane.b32.xlu0 %v876, 64
  %v896 = vpop.permute.xlu0 %895
  %897 = vrot.lane.b32.xlu0 %v877, 64
  %v898 = vpop.permute.xlu0 %897
  %899 = vrot.lane.b32.xlu0 %v878, 64
  %v900 = vpop.permute.xlu0 %899
  %901 = vrot.lane.b32.xlu0 %v879, 64
  %v902 = vpop.permute.xlu0 %901
  %903 = vrot.lane.b32.xlu0 %v880, 64
  %v904 = vpop.permute.xlu0 %903
  %913 = vst.msk [vmem:[%s3 + $0x1] sm:$0x1] %vm473, %v890
  %914 = vst.msk [vmem:[%s3 + $0x9] sm:$0x1] %vm473, %v892
  %915 = vst.msk [vmem:[%s3 + $0x11] sm:$0x1] %vm473, %v894
  %916 = vst.msk [vmem:[%s3 + $0x19] sm:$0x1] %vm473, %v896
  %917 = vst.msk [vmem:[%s3 + $0x21] sm:$0x1] %vm473, %v898
  %918 = vst.msk [vmem:[%s3 + $0x29] sm:$0x1] %vm473, %v900
  %919 = vst.msk [vmem:[%s3 + $0x31] sm:$0x1] %vm473, %v902
  %920 = vst.msk [vmem:[%s3 + $0x39] sm:$0x1] %vm473, %v904
  %v921 = vld [vmem:[%s0 + $0x2] sm:$0x1]
  %v922 = vld [vmem:[%s0 + $0xa] sm:$0x1]
  %v923 = vld [vmem:[%s0 + $0x12] sm:$0x1]
  %v924 = vld [vmem:[%s0 + $0x1a] sm:$0x1]
  %v925 = vld [vmem:[%s0 + $0x22] sm:$0x1]
  %v926 = vld [vmem:[%s0 + $0x2a] sm:$0x1]
  %v927 = vld [vmem:[%s0 + $0x32] sm:$0x1]
  %v928 = vld [vmem:[%s0 + $0x3a] sm:$0x1]
  %v929 = vrot.slane %v874, 7
  %v930 = vsel %vm337, %v929, %v873
  %v931 = vrot.slane %v875, 6
  %v932 = vsel %vm340, %v931, %v930
  %v933 = vrot.slane %v876, 5
  %v934 = vsel %vm343, %v933, %v932
  %v935 = vrot.slane %v877, 4
  %v936 = vsel %vm346, %v935, %v934
  %v937 = vrot.slane %v878, 3
  %v938 = vsel %vm349, %v937, %v936
  %v939 = vrot.slane %v879, 2
  %v940 = vsel %vm352, %v939, %v938
  %v941 = vrot.slane %v880, 1
  %v942 = vsel %vm355, %v941, %v940
  %943 = vrot.lane.b32.xlu0 %v942, 64
  %v944 = vpop.permute.xlu0 %943
  %v945 = vsel %vm34, %v944, 0
  %947 = vmatpush.msra.mxu0 0.0
  %948 = vmatpush.msra.mxu0 0.0
  %949 = vmatpush.msra.mxu0 0.0
  %950 = vmatpush.msra.mxu0 0.0
  %951 = vmatpush.msra.mxu0 0.0
  %952 = vmatpush.msra.mxu0 0.0
  %953 = vmatpush.msra.mxu0 0.0
  %954 = vmatpush.msra.mxu0 0.0
  %955 = vmatpush.msra.mxu0 0.0
  %956 = vmatpush.msra.mxu0 0.0
  %957 = vmatpush.msra.mxu0 0.0
  %958 = vmatpush.msra.mxu0 0.0
  %959 = vmatpush.msra.mxu0 %v23
  %960 = vmatpush.msra.mxu0 %v22
  %961 = vmatpush.msra.mxu0 %v21
  %962 = vmatpush.msra.mxu0 %v20
  %963 = vmatmul.f32.gmra.mxu0 %v945
  %v964 = vpop.f32.mrf.mxu0
  %v965 = vadd.f32 0.0, %v964
  %966 = vdwg.mxu0
  %v968 = vrot.slane %v965, 1
  %v969 = vrot.slane %v965, 2
  %v970 = vrot.slane %v965, 3
  %v971 = vrot.slane %v965, 4
  %v972 = vrot.slane %v965, 5
  %v973 = vrot.slane %v965, 6
  %v974 = vrot.slane %v965, 7
  %v983 = vadd.f32 %v921, %v965
  %v984 = vadd.f32 %v922, %v968
  %v985 = vadd.f32 %v923, %v969
  %v986 = vadd.f32 %v924, %v970
  %v987 = vadd.f32 %v925, %v971
  %v988 = vadd.f32 %v926, %v972
  %v989 = vadd.f32 %v927, %v973
  %v990 = vadd.f32 %v928, %v974
  %v991 = vxor.u32 %v983, 2147483648
  %v992 = vxor.u32 %v984, 2147483648
  %v993 = vxor.u32 %v985, 2147483648
  %v994 = vxor.u32 %v986, 2147483648
  %v995 = vxor.u32 %v987, 2147483648
  %v996 = vxor.u32 %v988, 2147483648
  %v997 = vxor.u32 %v989, 2147483648
  %v998 = vxor.u32 %v990, 2147483648
  %v999 = vmul.f32 %v991, 1.442695
  %v1000 = vpow.pop %v999
  %v1001 = vmul.f32 %v992, 1.442695
  %v1002 = vpow.pop %v1001
  %v1003 = vmul.f32 %v993, 1.442695
  %v1004 = vpow.pop %v1003
  %v1005 = vmul.f32 %v994, 1.442695
  %v1006 = vpow.pop %v1005
  %v1007 = vmul.f32 %v995, 1.442695
  %v1008 = vpow.pop %v1007
  %v1009 = vmul.f32 %v996, 1.442695
  %v1010 = vpow.pop %v1009
  %v1011 = vmul.f32 %v997, 1.442695
  %v1012 = vpow.pop %v1011
  %v1013 = vmul.f32 %v998, 1.442695
  %v1014 = vpow.pop %v1013
  %v1015 = vadd.f32 %v1000, 1.0
  %v1016 = vadd.f32 %v1002, 1.0
  %v1017 = vadd.f32 %v1004, 1.0
  %v1018 = vadd.f32 %v1006, 1.0
  %v1019 = vadd.f32 %v1008, 1.0
  %v1020 = vadd.f32 %v1010, 1.0
  %v1021 = vadd.f32 %v1012, 1.0
  %v1022 = vadd.f32 %v1014, 1.0
  %v1023 = vrcp.pop %v1015
  %v1024 = vmul.f32 %v1015, %v1023
  %v1025 = vsub.f32 1.0, %v1024
  %v1026 = vmul.f32 %v1023, %v1025
  %v1027 = vadd.f32 %v1023, %v1026
  %vm1028 = vweird.f32 %v1015
  %vm1029 = vweird.f32 %v1023
  %vm1030 = vmor %vm1028, %vm1029
  %v1031 = vsel %vm1030, %v1023, %v1027
  %v1032 = vand.u32 2147483647, %v1015
  %vm1033 = vcmp.eq.f32.partialorder %v1032, 8.507059e+37
  %v1034 = vand.u32 %v1015, 2147483648
  %v1035 = vor.u32 1.1754944e-38, %v1034
  %v1036 = vsel %vm1033, %v1035, %v1031
  %v1037 = vmul.f32 1.0, %v1036
  %v1038 = vrcp.pop %v1016
  %v1039 = vmul.f32 %v1016, %v1038
  %v1040 = vsub.f32 1.0, %v1039
  %v1041 = vmul.f32 %v1038, %v1040
  %v1042 = vadd.f32 %v1038, %v1041
  %vm1043 = vweird.f32 %v1016
  %vm1044 = vweird.f32 %v1038
  %vm1045 = vmor %vm1043, %vm1044
  %v1046 = vsel %vm1045, %v1038, %v1042
  %v1047 = vand.u32 2147483647, %v1016
  %vm1048 = vcmp.eq.f32.partialorder %v1047, 8.507059e+37
  %v1049 = vand.u32 %v1016, 2147483648
  %v1050 = vor.u32 1.1754944e-38, %v1049
  %v1051 = vsel %vm1048, %v1050, %v1046
  %v1052 = vmul.f32 1.0, %v1051
  %v1053 = vrcp.pop %v1017
  %v1054 = vmul.f32 %v1017, %v1053
  %v1055 = vsub.f32 1.0, %v1054
  %v1056 = vmul.f32 %v1053, %v1055
  %v1057 = vadd.f32 %v1053, %v1056
  %vm1058 = vweird.f32 %v1017
  %vm1059 = vweird.f32 %v1053
  %vm1060 = vmor %vm1058, %vm1059
  %v1061 = vsel %vm1060, %v1053, %v1057
  %v1062 = vand.u32 2147483647, %v1017
  %vm1063 = vcmp.eq.f32.partialorder %v1062, 8.507059e+37
  %v1064 = vand.u32 %v1017, 2147483648
  %v1065 = vor.u32 1.1754944e-38, %v1064
  %v1066 = vsel %vm1063, %v1065, %v1061
  %v1067 = vmul.f32 1.0, %v1066
  %v1068 = vrcp.pop %v1018
  %v1069 = vmul.f32 %v1018, %v1068
  %v1070 = vsub.f32 1.0, %v1069
  %v1071 = vmul.f32 %v1068, %v1070
  %v1072 = vadd.f32 %v1068, %v1071
  %vm1073 = vweird.f32 %v1018
  %vm1074 = vweird.f32 %v1068
  %vm1075 = vmor %vm1073, %vm1074
  %v1076 = vsel %vm1075, %v1068, %v1072
  %v1077 = vand.u32 2147483647, %v1018
  %vm1078 = vcmp.eq.f32.partialorder %v1077, 8.507059e+37
  %v1079 = vand.u32 %v1018, 2147483648
  %v1080 = vor.u32 1.1754944e-38, %v1079
  %v1081 = vsel %vm1078, %v1080, %v1076
  %v1082 = vmul.f32 1.0, %v1081
  %v1083 = vrcp.pop %v1019
  %v1084 = vmul.f32 %v1019, %v1083
  %v1085 = vsub.f32 1.0, %v1084
  %v1086 = vmul.f32 %v1083, %v1085
  %v1087 = vadd.f32 %v1083, %v1086
  %vm1088 = vweird.f32 %v1019
  %vm1089 = vweird.f32 %v1083
  %vm1090 = vmor %vm1088, %vm1089
  %v1091 = vsel %vm1090, %v1083, %v1087
  %v1092 = vand.u32 2147483647, %v1019
  %vm1093 = vcmp.eq.f32.partialorder %v1092, 8.507059e+37
  %v1094 = vand.u32 %v1019, 2147483648
  %v1095 = vor.u32 1.1754944e-38, %v1094
  %v1096 = vsel %vm1093, %v1095, %v1091
  %v1097 = vmul.f32 1.0, %v1096
  %v1098 = vrcp.pop %v1020
  %v1099 = vmul.f32 %v1020, %v1098
  %v1100 = vsub.f32 1.0, %v1099
  %v1101 = vmul.f32 %v1098, %v1100
  %v1102 = vadd.f32 %v1098, %v1101
  %vm1103 = vweird.f32 %v1020
  %vm1104 = vweird.f32 %v1098
  %vm1105 = vmor %vm1103, %vm1104
  %v1106 = vsel %vm1105, %v1098, %v1102
  %v1107 = vand.u32 2147483647, %v1020
  %vm1108 = vcmp.eq.f32.partialorder %v1107, 8.507059e+37
  %v1109 = vand.u32 %v1020, 2147483648
  %v1110 = vor.u32 1.1754944e-38, %v1109
  %v1111 = vsel %vm1108, %v1110, %v1106
  %v1112 = vmul.f32 1.0, %v1111
  %v1113 = vrcp.pop %v1021
  %v1114 = vmul.f32 %v1021, %v1113
  %v1115 = vsub.f32 1.0, %v1114
  %v1116 = vmul.f32 %v1113, %v1115
  %v1117 = vadd.f32 %v1113, %v1116
  %vm1118 = vweird.f32 %v1021
  %vm1119 = vweird.f32 %v1113
  %vm1120 = vmor %vm1118, %vm1119
  %v1121 = vsel %vm1120, %v1113, %v1117
  %v1122 = vand.u32 2147483647, %v1021
  %vm1123 = vcmp.eq.f32.partialorder %v1122, 8.507059e+37
  %v1124 = vand.u32 %v1021, 2147483648
  %v1125 = vor.u32 1.1754944e-38, %v1124
  %v1126 = vsel %vm1123, %v1125, %v1121
  %v1127 = vmul.f32 1.0, %v1126
  %v1128 = vrcp.pop %v1022
  %v1129 = vmul.f32 %v1022, %v1128
  %v1130 = vsub.f32 1.0, %v1129
  %v1131 = vmul.f32 %v1128, %v1130
  %v1132 = vadd.f32 %v1128, %v1131
  %vm1133 = vweird.f32 %v1022
  %vm1134 = vweird.f32 %v1128
  %vm1135 = vmor %vm1133, %vm1134
  %v1136 = vsel %vm1135, %v1128, %v1132
  %v1137 = vand.u32 2147483647, %v1022
  %vm1138 = vcmp.eq.f32.partialorder %v1137, 8.507059e+37
  %v1139 = vand.u32 %v1022, 2147483648
  %v1140 = vor.u32 1.1754944e-38, %v1139
  %v1141 = vsel %vm1138, %v1140, %v1136
  %v1142 = vmul.f32 1.0, %v1141
  %v1143 = vadd.f32 %v965, %v237
  %v1145 = vrot.slane %v1143, 1
  %v1146 = vrot.slane %v1143, 2
  %v1147 = vrot.slane %v1143, 3
  %v1148 = vrot.slane %v1143, 4
  %v1149 = vrot.slane %v1143, 5
  %v1150 = vrot.slane %v1143, 6
  %v1151 = vrot.slane %v1143, 7
  %1152 = vrot.lane.b32.xlu0 %v1143, 64
  %v1153 = vpop.permute.xlu0 %1152
  %1154 = vrot.lane.b32.xlu0 %v1145, 64
  %v1155 = vpop.permute.xlu0 %1154
  %1156 = vrot.lane.b32.xlu0 %v1146, 64
  %v1157 = vpop.permute.xlu0 %1156
  %1158 = vrot.lane.b32.xlu0 %v1147, 64
  %v1159 = vpop.permute.xlu0 %1158
  %1160 = vrot.lane.b32.xlu0 %v1148, 64
  %v1161 = vpop.permute.xlu0 %1160
  %1162 = vrot.lane.b32.xlu0 %v1149, 64
  %v1163 = vpop.permute.xlu0 %1162
  %1164 = vrot.lane.b32.xlu0 %v1150, 64
  %v1165 = vpop.permute.xlu0 %1164
  %1166 = vrot.lane.b32.xlu0 %v1151, 64
  %v1167 = vpop.permute.xlu0 %1166
  %v1176 = vmul.f32 %v1037, %v1153
  %v1177 = vmul.f32 %v1052, %v1155
  %v1178 = vmul.f32 %v1067, %v1157
  %v1179 = vmul.f32 %v1082, %v1159
  %v1180 = vmul.f32 %v1097, %v1161
  %v1181 = vmul.f32 %v1112, %v1163
  %v1182 = vmul.f32 %v1127, %v1165
  %v1183 = vmul.f32 %v1142, %v1167
  %1192 = vrot.lane.b32.xlu0 %v1176, 64
  %v1193 = vpop.permute.xlu0 %1192
  %1194 = vrot.lane.b32.xlu0 %v1177, 64
  %v1195 = vpop.permute.xlu0 %1194
  %1196 = vrot.lane.b32.xlu0 %v1178, 64
  %v1197 = vpop.permute.xlu0 %1196
  %1198 = vrot.lane.b32.xlu0 %v1179, 64
  %v1199 = vpop.permute.xlu0 %1198
  %1200 = vrot.lane.b32.xlu0 %v1180, 64
  %v1201 = vpop.permute.xlu0 %1200
  %1202 = vrot.lane.b32.xlu0 %v1181, 64
  %v1203 = vpop.permute.xlu0 %1202
  %1204 = vrot.lane.b32.xlu0 %v1182, 64
  %v1205 = vpop.permute.xlu0 %1204
  %1206 = vrot.lane.b32.xlu0 %v1183, 64
  %v1207 = vpop.permute.xlu0 %1206
  %v1216 = vadd.f32 %v921, %v1193
  %v1217 = vadd.f32 %v922, %v1195
  %v1218 = vadd.f32 %v923, %v1197
  %v1219 = vadd.f32 %v924, %v1199
  %v1220 = vadd.f32 %v925, %v1201
  %v1221 = vadd.f32 %v926, %v1203
  %v1222 = vadd.f32 %v927, %v1205
  %v1223 = vadd.f32 %v928, %v1207
  %v1224 = vtanh.pop %v1216
  %v1225 = vtanh.pop %v1217
  %v1226 = vtanh.pop %v1218
  %v1227 = vtanh.pop %v1219
  %v1228 = vtanh.pop %v1220
  %v1229 = vtanh.pop %v1221
  %v1230 = vtanh.pop %v1222
  %v1231 = vtanh.pop %v1223
  %v1232 = vsub.f32 %v873, %v1224
  %v1233 = vsub.f32 %v874, %v1225
  %v1234 = vsub.f32 %v875, %v1226
  %v1235 = vsub.f32 %v876, %v1227
  %v1236 = vsub.f32 %v877, %v1228
  %v1237 = vsub.f32 %v878, %v1229
  %v1238 = vsub.f32 %v879, %v1230
  %v1239 = vsub.f32 %v880, %v1231
  %1248 = vrot.lane.b32.xlu0 %v1232, 96
  %v1249 = vpop.permute.xlu0 %1248
  %1250 = vrot.lane.b32.xlu0 %v1233, 96
  %v1251 = vpop.permute.xlu0 %1250
  %1252 = vrot.lane.b32.xlu0 %v1234, 96
  %v1253 = vpop.permute.xlu0 %1252
  %1254 = vrot.lane.b32.xlu0 %v1235, 96
  %v1255 = vpop.permute.xlu0 %1254
  %1256 = vrot.lane.b32.xlu0 %v1236, 96
  %v1257 = vpop.permute.xlu0 %1256
  %1258 = vrot.lane.b32.xlu0 %v1237, 96
  %v1259 = vpop.permute.xlu0 %1258
  %1260 = vrot.lane.b32.xlu0 %v1238, 96
  %v1261 = vpop.permute.xlu0 %1260
  %1262 = vrot.lane.b32.xlu0 %v1239, 96
  %v1263 = vpop.permute.xlu0 %1262
  %v1272 = vmul.f32 %v1037, %v1249
  %v1273 = vmul.f32 %v1052, %v1251
  %v1274 = vmul.f32 %v1067, %v1253
  %v1275 = vmul.f32 %v1082, %v1255
  %v1276 = vmul.f32 %v1097, %v1257
  %v1277 = vmul.f32 %v1112, %v1259
  %v1278 = vmul.f32 %v1127, %v1261
  %v1279 = vmul.f32 %v1142, %v1263
  %1288 = vrot.lane.b32.xlu0 %v1272, 32
  %v1289 = vpop.permute.xlu0 %1288
  %1290 = vrot.lane.b32.xlu0 %v1273, 32
  %v1291 = vpop.permute.xlu0 %1290
  %1292 = vrot.lane.b32.xlu0 %v1274, 32
  %v1293 = vpop.permute.xlu0 %1292
  %1294 = vrot.lane.b32.xlu0 %v1275, 32
  %v1295 = vpop.permute.xlu0 %1294
  %1296 = vrot.lane.b32.xlu0 %v1276, 32
  %v1297 = vpop.permute.xlu0 %1296
  %1298 = vrot.lane.b32.xlu0 %v1277, 32
  %v1299 = vpop.permute.xlu0 %1298
  %1300 = vrot.lane.b32.xlu0 %v1278, 32
  %v1301 = vpop.permute.xlu0 %1300
  %1302 = vrot.lane.b32.xlu0 %v1279, 32
  %v1303 = vpop.permute.xlu0 %1302
  %v1312 = vadd.f32 %v1224, %v1289
  %v1313 = vadd.f32 %v1225, %v1291
  %v1314 = vadd.f32 %v1226, %v1293
  %v1315 = vadd.f32 %v1227, %v1295
  %v1316 = vadd.f32 %v1228, %v1297
  %v1317 = vadd.f32 %v1229, %v1299
  %v1318 = vadd.f32 %v1230, %v1301
  %v1319 = vadd.f32 %v1231, %v1303
  %1328 = vrot.lane.b32.xlu0 %v1312, 64
  %v1329 = vpop.permute.xlu0 %1328
  %1330 = vrot.lane.b32.xlu0 %v1313, 64
  %v1331 = vpop.permute.xlu0 %1330
  %1332 = vrot.lane.b32.xlu0 %v1314, 64
  %v1333 = vpop.permute.xlu0 %1332
  %1334 = vrot.lane.b32.xlu0 %v1315, 64
  %v1335 = vpop.permute.xlu0 %1334
  %1336 = vrot.lane.b32.xlu0 %v1316, 64
  %v1337 = vpop.permute.xlu0 %1336
  %1338 = vrot.lane.b32.xlu0 %v1317, 64
  %v1339 = vpop.permute.xlu0 %1338
  %1340 = vrot.lane.b32.xlu0 %v1318, 64
  %v1341 = vpop.permute.xlu0 %1340
  %1342 = vrot.lane.b32.xlu0 %v1319, 64
  %v1343 = vpop.permute.xlu0 %1342
  %1352 = vst.msk [vmem:[%s3 + $0x2] sm:$0x1] %vm473, %v1329
  %1353 = vst.msk [vmem:[%s3 + $0xa] sm:$0x1] %vm473, %v1331
  %1354 = vst.msk [vmem:[%s3 + $0x12] sm:$0x1] %vm473, %v1333
  %1355 = vst.msk [vmem:[%s3 + $0x1a] sm:$0x1] %vm473, %v1335
  %1356 = vst.msk [vmem:[%s3 + $0x22] sm:$0x1] %vm473, %v1337
  %1357 = vst.msk [vmem:[%s3 + $0x2a] sm:$0x1] %vm473, %v1339
  %1358 = vst.msk [vmem:[%s3 + $0x32] sm:$0x1] %vm473, %v1341
  %1359 = vst.msk [vmem:[%s3 + $0x3a] sm:$0x1] %vm473, %v1343
  %v1360 = vld [vmem:[%s0 + $0x3] sm:$0x1]
  %v1361 = vld [vmem:[%s0 + $0xb] sm:$0x1]
  %v1362 = vld [vmem:[%s0 + $0x13] sm:$0x1]
  %v1363 = vld [vmem:[%s0 + $0x1b] sm:$0x1]
  %v1364 = vld [vmem:[%s0 + $0x23] sm:$0x1]
  %v1365 = vld [vmem:[%s0 + $0x2b] sm:$0x1]
  %v1366 = vld [vmem:[%s0 + $0x33] sm:$0x1]
  %v1367 = vld [vmem:[%s0 + $0x3b] sm:$0x1]
  %v1368 = vrot.slane %v1313, 7
  %v1369 = vsel %vm337, %v1368, %v1312
  %v1370 = vrot.slane %v1314, 6
  %v1371 = vsel %vm340, %v1370, %v1369
  %v1372 = vrot.slane %v1315, 5
  %v1373 = vsel %vm343, %v1372, %v1371
  %v1374 = vrot.slane %v1316, 4
  %v1375 = vsel %vm346, %v1374, %v1373
  %v1376 = vrot.slane %v1317, 3
  %v1377 = vsel %vm349, %v1376, %v1375
  %v1378 = vrot.slane %v1318, 2
  %v1379 = vsel %vm352, %v1378, %v1377
  %v1380 = vrot.slane %v1319, 1
  %v1381 = vsel %vm355, %v1380, %v1379
  %1382 = vrot.lane.b32.xlu0 %v1381, 64
  %v1383 = vpop.permute.xlu0 %1382
  %v1384 = vsel %vm34, %v1383, 0
  %1386 = vmatpush.msra.mxu0 0.0
  %1387 = vmatpush.msra.mxu0 0.0
  %1388 = vmatpush.msra.mxu0 0.0
  %1389 = vmatpush.msra.mxu0 0.0
  %1390 = vmatpush.msra.mxu0 0.0
  %1391 = vmatpush.msra.mxu0 0.0
  %1392 = vmatpush.msra.mxu0 0.0
  %1393 = vmatpush.msra.mxu0 0.0
  %1394 = vmatpush.msra.mxu0 0.0
  %1395 = vmatpush.msra.mxu0 0.0
  %1396 = vmatpush.msra.mxu0 0.0
  %1397 = vmatpush.msra.mxu0 0.0
  %1398 = vmatpush.msra.mxu0 %v23
  %1399 = vmatpush.msra.mxu0 %v22
  %1400 = vmatpush.msra.mxu0 %v21
  %1401 = vmatpush.msra.mxu0 %v20
  %1402 = vmatmul.f32.gmra.mxu0 %v1384
  %v1403 = vpop.f32.mrf.mxu0
  %v1404 = vadd.f32 0.0, %v1403
  %1405 = vdwg.mxu0
  %v1407 = vrot.slane %v1404, 1
  %v1408 = vrot.slane %v1404, 2
  %v1409 = vrot.slane %v1404, 3
  %v1410 = vrot.slane %v1404, 4
  %v1411 = vrot.slane %v1404, 5
  %v1412 = vrot.slane %v1404, 6
  %v1413 = vrot.slane %v1404, 7
  %v1422 = vadd.f32 %v1360, %v1404
  %v1423 = vadd.f32 %v1361, %v1407
  %v1424 = vadd.f32 %v1362, %v1408
  %v1425 = vadd.f32 %v1363, %v1409
  %v1426 = vadd.f32 %v1364, %v1410
  %v1427 = vadd.f32 %v1365, %v1411
  %v1428 = vadd.f32 %v1366, %v1412
  %v1429 = vadd.f32 %v1367, %v1413
  %v1430 = vxor.u32 %v1422, 2147483648
  %v1431 = vxor.u32 %v1423, 2147483648
  %v1432 = vxor.u32 %v1424, 2147483648
  %v1433 = vxor.u32 %v1425, 2147483648
  %v1434 = vxor.u32 %v1426, 2147483648
  %v1435 = vxor.u32 %v1427, 2147483648
  %v1436 = vxor.u32 %v1428, 2147483648
  %v1437 = vxor.u32 %v1429, 2147483648
  %v1438 = vmul.f32 %v1430, 1.442695
  %v1439 = vpow.pop %v1438
  %v1440 = vmul.f32 %v1431, 1.442695
  %v1441 = vpow.pop %v1440
  %v1442 = vmul.f32 %v1432, 1.442695
  %v1443 = vpow.pop %v1442
  %v1444 = vmul.f32 %v1433, 1.442695
  %v1445 = vpow.pop %v1444
  %v1446 = vmul.f32 %v1434, 1.442695
  %v1447 = vpow.pop %v1446
  %v1448 = vmul.f32 %v1435, 1.442695
  %v1449 = vpow.pop %v1448
  %v1450 = vmul.f32 %v1436, 1.442695
  %v1451 = vpow.pop %v1450
  %v1452 = vmul.f32 %v1437, 1.442695
  %v1453 = vpow.pop %v1452
  %v1454 = vadd.f32 %v1439, 1.0
  %v1455 = vadd.f32 %v1441, 1.0
  %v1456 = vadd.f32 %v1443, 1.0
  %v1457 = vadd.f32 %v1445, 1.0
  %v1458 = vadd.f32 %v1447, 1.0
  %v1459 = vadd.f32 %v1449, 1.0
  %v1460 = vadd.f32 %v1451, 1.0
  %v1461 = vadd.f32 %v1453, 1.0
  %v1462 = vrcp.pop %v1454
  %v1463 = vmul.f32 %v1454, %v1462
  %v1464 = vsub.f32 1.0, %v1463
  %v1465 = vmul.f32 %v1462, %v1464
  %v1466 = vadd.f32 %v1462, %v1465
  %vm1467 = vweird.f32 %v1454
  %vm1468 = vweird.f32 %v1462
  %vm1469 = vmor %vm1467, %vm1468
  %v1470 = vsel %vm1469, %v1462, %v1466
  %v1471 = vand.u32 2147483647, %v1454
  %vm1472 = vcmp.eq.f32.partialorder %v1471, 8.507059e+37
  %v1473 = vand.u32 %v1454, 2147483648
  %v1474 = vor.u32 1.1754944e-38, %v1473
  %v1475 = vsel %vm1472, %v1474, %v1470
  %v1476 = vmul.f32 1.0, %v1475
  %v1477 = vrcp.pop %v1455
  %v1478 = vmul.f32 %v1455, %v1477
  %v1479 = vsub.f32 1.0, %v1478
  %v1480 = vmul.f32 %v1477, %v1479
  %v1481 = vadd.f32 %v1477, %v1480
  %vm1482 = vweird.f32 %v1455
  %vm1483 = vweird.f32 %v1477
  %vm1484 = vmor %vm1482, %vm1483
  %v1485 = vsel %vm1484, %v1477, %v1481
  %v1486 = vand.u32 2147483647, %v1455
  %vm1487 = vcmp.eq.f32.partialorder %v1486, 8.507059e+37
  %v1488 = vand.u32 %v1455, 2147483648
  %v1489 = vor.u32 1.1754944e-38, %v1488
  %v1490 = vsel %vm1487, %v1489, %v1485
  %v1491 = vmul.f32 1.0, %v1490
  %v1492 = vrcp.pop %v1456
  %v1493 = vmul.f32 %v1456, %v1492
  %v1494 = vsub.f32 1.0, %v1493
  %v1495 = vmul.f32 %v1492, %v1494
  %v1496 = vadd.f32 %v1492, %v1495
  %vm1497 = vweird.f32 %v1456
  %vm1498 = vweird.f32 %v1492
  %vm1499 = vmor %vm1497, %vm1498
  %v1500 = vsel %vm1499, %v1492, %v1496
  %v1501 = vand.u32 2147483647, %v1456
  %vm1502 = vcmp.eq.f32.partialorder %v1501, 8.507059e+37
  %v1503 = vand.u32 %v1456, 2147483648
  %v1504 = vor.u32 1.1754944e-38, %v1503
  %v1505 = vsel %vm1502, %v1504, %v1500
  %v1506 = vmul.f32 1.0, %v1505
  %v1507 = vrcp.pop %v1457
  %v1508 = vmul.f32 %v1457, %v1507
  %v1509 = vsub.f32 1.0, %v1508
  %v1510 = vmul.f32 %v1507, %v1509
  %v1511 = vadd.f32 %v1507, %v1510
  %vm1512 = vweird.f32 %v1457
  %vm1513 = vweird.f32 %v1507
  %vm1514 = vmor %vm1512, %vm1513
  %v1515 = vsel %vm1514, %v1507, %v1511
  %v1516 = vand.u32 2147483647, %v1457
  %vm1517 = vcmp.eq.f32.partialorder %v1516, 8.507059e+37
  %v1518 = vand.u32 %v1457, 2147483648
  %v1519 = vor.u32 1.1754944e-38, %v1518
  %v1520 = vsel %vm1517, %v1519, %v1515
  %v1521 = vmul.f32 1.0, %v1520
  %v1522 = vrcp.pop %v1458
  %v1523 = vmul.f32 %v1458, %v1522
  %v1524 = vsub.f32 1.0, %v1523
  %v1525 = vmul.f32 %v1522, %v1524
  %v1526 = vadd.f32 %v1522, %v1525
  %vm1527 = vweird.f32 %v1458
  %vm1528 = vweird.f32 %v1522
  %vm1529 = vmor %vm1527, %vm1528
  %v1530 = vsel %vm1529, %v1522, %v1526
  %v1531 = vand.u32 2147483647, %v1458
  %vm1532 = vcmp.eq.f32.partialorder %v1531, 8.507059e+37
  %v1533 = vand.u32 %v1458, 2147483648
  %v1534 = vor.u32 1.1754944e-38, %v1533
  %v1535 = vsel %vm1532, %v1534, %v1530
  %v1536 = vmul.f32 1.0, %v1535
  %v1537 = vrcp.pop %v1459
  %v1538 = vmul.f32 %v1459, %v1537
  %v1539 = vsub.f32 1.0, %v1538
  %v1540 = vmul.f32 %v1537, %v1539
  %v1541 = vadd.f32 %v1537, %v1540
  %vm1542 = vweird.f32 %v1459
  %vm1543 = vweird.f32 %v1537
  %vm1544 = vmor %vm1542, %vm1543
  %v1545 = vsel %vm1544, %v1537, %v1541
  %v1546 = vand.u32 2147483647, %v1459
  %vm1547 = vcmp.eq.f32.partialorder %v1546, 8.507059e+37
  %v1548 = vand.u32 %v1459, 2147483648
  %v1549 = vor.u32 1.1754944e-38, %v1548
  %v1550 = vsel %vm1547, %v1549, %v1545
  %v1551 = vmul.f32 1.0, %v1550
  %v1552 = vrcp.pop %v1460
  %v1553 = vmul.f32 %v1460, %v1552
  %v1554 = vsub.f32 1.0, %v1553
  %v1555 = vmul.f32 %v1552, %v1554
  %v1556 = vadd.f32 %v1552, %v1555
  %vm1557 = vweird.f32 %v1460
  %vm1558 = vweird.f32 %v1552
  %vm1559 = vmor %vm1557, %vm1558
  %v1560 = vsel %vm1559, %v1552, %v1556
  %v1561 = vand.u32 2147483647, %v1460
  %vm1562 = vcmp.eq.f32.partialorder %v1561, 8.507059e+37
  %v1563 = vand.u32 %v1460, 2147483648
  %v1564 = vor.u32 1.1754944e-38, %v1563
  %v1565 = vsel %vm1562, %v1564, %v1560
  %v1566 = vmul.f32 1.0, %v1565
  %v1567 = vrcp.pop %v1461
  %v1568 = vmul.f32 %v1461, %v1567
  %v1569 = vsub.f32 1.0, %v1568
  %v1570 = vmul.f32 %v1567, %v1569
  %v1571 = vadd.f32 %v1567, %v1570
  %vm1572 = vweird.f32 %v1461
  %vm1573 = vweird.f32 %v1567
  %vm1574 = vmor %vm1572, %vm1573
  %v1575 = vsel %vm1574, %v1567, %v1571
  %v1576 = vand.u32 2147483647, %v1461
  %vm1577 = vcmp.eq.f32.partialorder %v1576, 8.507059e+37
  %v1578 = vand.u32 %v1461, 2147483648
  %v1579 = vor.u32 1.1754944e-38, %v1578
  %v1580 = vsel %vm1577, %v1579, %v1575
  %v1581 = vmul.f32 1.0, %v1580
  %v1582 = vadd.f32 %v1404, %v237
  %v1584 = vrot.slane %v1582, 1
  %v1585 = vrot.slane %v1582, 2
  %v1586 = vrot.slane %v1582, 3
  %v1587 = vrot.slane %v1582, 4
  %v1588 = vrot.slane %v1582, 5
  %v1589 = vrot.slane %v1582, 6
  %v1590 = vrot.slane %v1582, 7
  %1591 = vrot.lane.b32.xlu0 %v1582, 64
  %v1592 = vpop.permute.xlu0 %1591
  %1593 = vrot.lane.b32.xlu0 %v1584, 64
  %v1594 = vpop.permute.xlu0 %1593
  %1595 = vrot.lane.b32.xlu0 %v1585, 64
  %v1596 = vpop.permute.xlu0 %1595
  %1597 = vrot.lane.b32.xlu0 %v1586, 64
  %v1598 = vpop.permute.xlu0 %1597
  %1599 = vrot.lane.b32.xlu0 %v1587, 64
  %v1600 = vpop.permute.xlu0 %1599
  %1601 = vrot.lane.b32.xlu0 %v1588, 64
  %v1602 = vpop.permute.xlu0 %1601
  %1603 = vrot.lane.b32.xlu0 %v1589, 64
  %v1604 = vpop.permute.xlu0 %1603
  %1605 = vrot.lane.b32.xlu0 %v1590, 64
  %v1606 = vpop.permute.xlu0 %1605
  %v1615 = vmul.f32 %v1476, %v1592
  %v1616 = vmul.f32 %v1491, %v1594
  %v1617 = vmul.f32 %v1506, %v1596
  %v1618 = vmul.f32 %v1521, %v1598
  %v1619 = vmul.f32 %v1536, %v1600
  %v1620 = vmul.f32 %v1551, %v1602
  %v1621 = vmul.f32 %v1566, %v1604
  %v1622 = vmul.f32 %v1581, %v1606
  %1631 = vrot.lane.b32.xlu0 %v1615, 64
  %v1632 = vpop.permute.xlu0 %1631
  %1633 = vrot.lane.b32.xlu0 %v1616, 64
  %v1634 = vpop.permute.xlu0 %1633
  %1635 = vrot.lane.b32.xlu0 %v1617, 64
  %v1636 = vpop.permute.xlu0 %1635
  %1637 = vrot.lane.b32.xlu0 %v1618, 64
  %v1638 = vpop.permute.xlu0 %1637
  %1639 = vrot.lane.b32.xlu0 %v1619, 64
  %v1640 = vpop.permute.xlu0 %1639
  %1641 = vrot.lane.b32.xlu0 %v1620, 64
  %v1642 = vpop.permute.xlu0 %1641
  %1643 = vrot.lane.b32.xlu0 %v1621, 64
  %v1644 = vpop.permute.xlu0 %1643
  %1645 = vrot.lane.b32.xlu0 %v1622, 64
  %v1646 = vpop.permute.xlu0 %1645
  %v1655 = vadd.f32 %v1360, %v1632
  %v1656 = vadd.f32 %v1361, %v1634
  %v1657 = vadd.f32 %v1362, %v1636
  %v1658 = vadd.f32 %v1363, %v1638
  %v1659 = vadd.f32 %v1364, %v1640
  %v1660 = vadd.f32 %v1365, %v1642
  %v1661 = vadd.f32 %v1366, %v1644
  %v1662 = vadd.f32 %v1367, %v1646
  %v1663 = vtanh.pop %v1655
  %v1664 = vtanh.pop %v1656
  %v1665 = vtanh.pop %v1657
  %v1666 = vtanh.pop %v1658
  %v1667 = vtanh.pop %v1659
  %v1668 = vtanh.pop %v1660
  %v1669 = vtanh.pop %v1661
  %v1670 = vtanh.pop %v1662
  %v1671 = vsub.f32 %v1312, %v1663
  %v1672 = vsub.f32 %v1313, %v1664
  %v1673 = vsub.f32 %v1314, %v1665
  %v1674 = vsub.f32 %v1315, %v1666
  %v1675 = vsub.f32 %v1316, %v1667
  %v1676 = vsub.f32 %v1317, %v1668
  %v1677 = vsub.f32 %v1318, %v1669
  %v1678 = vsub.f32 %v1319, %v1670
  %1687 = vrot.lane.b32.xlu0 %v1671, 96
  %v1688 = vpop.permute.xlu0 %1687
  %1689 = vrot.lane.b32.xlu0 %v1672, 96
  %v1690 = vpop.permute.xlu0 %1689
  %1691 = vrot.lane.b32.xlu0 %v1673, 96
  %v1692 = vpop.permute.xlu0 %1691
  %1693 = vrot.lane.b32.xlu0 %v1674, 96
  %v1694 = vpop.permute.xlu0 %1693
  %1695 = vrot.lane.b32.xlu0 %v1675, 96
  %v1696 = vpop.permute.xlu0 %1695
  %1697 = vrot.lane.b32.xlu0 %v1676, 96
  %v1698 = vpop.permute.xlu0 %1697
  %1699 = vrot.lane.b32.xlu0 %v1677, 96
  %v1700 = vpop.permute.xlu0 %1699
  %1701 = vrot.lane.b32.xlu0 %v1678, 96
  %v1702 = vpop.permute.xlu0 %1701
  %v1711 = vmul.f32 %v1476, %v1688
  %v1712 = vmul.f32 %v1491, %v1690
  %v1713 = vmul.f32 %v1506, %v1692
  %v1714 = vmul.f32 %v1521, %v1694
  %v1715 = vmul.f32 %v1536, %v1696
  %v1716 = vmul.f32 %v1551, %v1698
  %v1717 = vmul.f32 %v1566, %v1700
  %v1718 = vmul.f32 %v1581, %v1702
  %1727 = vrot.lane.b32.xlu0 %v1711, 32
  %v1728 = vpop.permute.xlu0 %1727
  %1729 = vrot.lane.b32.xlu0 %v1712, 32
  %v1730 = vpop.permute.xlu0 %1729
  %1731 = vrot.lane.b32.xlu0 %v1713, 32
  %v1732 = vpop.permute.xlu0 %1731
  %1733 = vrot.lane.b32.xlu0 %v1714, 32
  %v1734 = vpop.permute.xlu0 %1733
  %1735 = vrot.lane.b32.xlu0 %v1715, 32
  %v1736 = vpop.permute.xlu0 %1735
  %1737 = vrot.lane.b32.xlu0 %v1716, 32
  %v1738 = vpop.permute.xlu0 %1737
  %1739 = vrot.lane.b32.xlu0 %v1717, 32
  %v1740 = vpop.permute.xlu0 %1739
  %1741 = vrot.lane.b32.xlu0 %v1718, 32
  %v1742 = vpop.permute.xlu0 %1741
  %v1751 = vadd.f32 %v1663, %v1728
  %v1752 = vadd.f32 %v1664, %v1730
  %v1753 = vadd.f32 %v1665, %v1732
  %v1754 = vadd.f32 %v1666, %v1734
  %v1755 = vadd.f32 %v1667, %v1736
  %v1756 = vadd.f32 %v1668, %v1738
  %v1757 = vadd.f32 %v1669, %v1740
  %v1758 = vadd.f32 %v1670, %v1742
  %1767 = vrot.lane.b32.xlu0 %v1751, 64
  %v1768 = vpop.permute.xlu0 %1767
  %1769 = vrot.lane.b32.xlu0 %v1752, 64
  %v1770 = vpop.permute.xlu0 %1769
  %1771 = vrot.lane.b32.xlu0 %v1753, 64
  %v1772 = vpop.permute.xlu0 %1771
  %1773 = vrot.lane.b32.xlu0 %v1754, 64
  %v1774 = vpop.permute.xlu0 %1773
  %1775 = vrot.lane.b32.xlu0 %v1755, 64
  %v1776 = vpop.permute.xlu0 %1775
  %1777 = vrot.lane.b32.xlu0 %v1756, 64
  %v1778 = vpop.permute.xlu0 %1777
  %1779 = vrot.lane.b32.xlu0 %v1757, 64
  %v1780 = vpop.permute.xlu0 %1779
  %1781 = vrot.lane.b32.xlu0 %v1758, 64
  %v1782 = vpop.permute.xlu0 %1781
  %1791 = vst.msk [vmem:[%s3 + $0x3] sm:$0x1] %vm473, %v1768
  %1792 = vst.msk [vmem:[%s3 + $0xb] sm:$0x1] %vm473, %v1770
  %1793 = vst.msk [vmem:[%s3 + $0x13] sm:$0x1] %vm473, %v1772
  %1794 = vst.msk [vmem:[%s3 + $0x1b] sm:$0x1] %vm473, %v1774
  %1795 = vst.msk [vmem:[%s3 + $0x23] sm:$0x1] %vm473, %v1776
  %1796 = vst.msk [vmem:[%s3 + $0x2b] sm:$0x1] %vm473, %v1778
  %1797 = vst.msk [vmem:[%s3 + $0x33] sm:$0x1] %vm473, %v1780
  %1798 = vst.msk [vmem:[%s3 + $0x3b] sm:$0x1] %vm473, %v1782
  %v1799 = vld [vmem:[%s0 + $0x4] sm:$0x1]
  %v1800 = vld [vmem:[%s0 + $0xc] sm:$0x1]
  %v1801 = vld [vmem:[%s0 + $0x14] sm:$0x1]
  %v1802 = vld [vmem:[%s0 + $0x1c] sm:$0x1]
  %v1803 = vld [vmem:[%s0 + $0x24] sm:$0x1]
  %v1804 = vld [vmem:[%s0 + $0x2c] sm:$0x1]
  %v1805 = vld [vmem:[%s0 + $0x34] sm:$0x1]
  %v1806 = vld [vmem:[%s0 + $0x3c] sm:$0x1]
  %v1807 = vrot.slane %v1752, 7
  %v1808 = vsel %vm337, %v1807, %v1751
  %v1809 = vrot.slane %v1753, 6
  %v1810 = vsel %vm340, %v1809, %v1808
  %v1811 = vrot.slane %v1754, 5
  %v1812 = vsel %vm343, %v1811, %v1810
  %v1813 = vrot.slane %v1755, 4
  %v1814 = vsel %vm346, %v1813, %v1812
  %v1815 = vrot.slane %v1756, 3
  %v1816 = vsel %vm349, %v1815, %v1814
  %v1817 = vrot.slane %v1757, 2
  %v1818 = vsel %vm352, %v1817, %v1816
  %v1819 = vrot.slane %v1758, 1
  %v1820 = vsel %vm355, %v1819, %v1818
  %1821 = vrot.lane.b32.xlu0 %v1820, 64
  %v1822 = vpop.permute.xlu0 %1821
  %v1823 = vsel %vm34, %v1822, 0
  %1825 = vmatpush.msra.mxu0 0.0
  %1826 = vmatpush.msra.mxu0 0.0
  %1827 = vmatpush.msra.mxu0 0.0
  %1828 = vmatpush.msra.mxu0 0.0
  %1829 = vmatpush.msra.mxu0 0.0
  %1830 = vmatpush.msra.mxu0 0.0
  %1831 = vmatpush.msra.mxu0 0.0
  %1832 = vmatpush.msra.mxu0 0.0
  %1833 = vmatpush.msra.mxu0 0.0
  %1834 = vmatpush.msra.mxu0 0.0
  %1835 = vmatpush.msra.mxu0 0.0
  %1836 = vmatpush.msra.mxu0 0.0
  %1837 = vmatpush.msra.mxu0 %v23
  %1838 = vmatpush.msra.mxu0 %v22
  %1839 = vmatpush.msra.mxu0 %v21
  %1840 = vmatpush.msra.mxu0 %v20
  %1841 = vmatmul.f32.gmra.mxu0 %v1823
  %v1842 = vpop.f32.mrf.mxu0
  %v1843 = vadd.f32 0.0, %v1842
  %1844 = vdwg.mxu0
  %v1846 = vrot.slane %v1843, 1
  %v1847 = vrot.slane %v1843, 2
  %v1848 = vrot.slane %v1843, 3
  %v1849 = vrot.slane %v1843, 4
  %v1850 = vrot.slane %v1843, 5
  %v1851 = vrot.slane %v1843, 6
  %v1852 = vrot.slane %v1843, 7
  %v1861 = vadd.f32 %v1799, %v1843
  %v1862 = vadd.f32 %v1800, %v1846
  %v1863 = vadd.f32 %v1801, %v1847
  %v1864 = vadd.f32 %v1802, %v1848
  %v1865 = vadd.f32 %v1803, %v1849
  %v1866 = vadd.f32 %v1804, %v1850
  %v1867 = vadd.f32 %v1805, %v1851
  %v1868 = vadd.f32 %v1806, %v1852
  %v1869 = vxor.u32 %v1861, 2147483648
  %v1870 = vxor.u32 %v1862, 2147483648
  %v1871 = vxor.u32 %v1863, 2147483648
  %v1872 = vxor.u32 %v1864, 2147483648
  %v1873 = vxor.u32 %v1865, 2147483648
  %v1874 = vxor.u32 %v1866, 2147483648
  %v1875 = vxor.u32 %v1867, 2147483648
  %v1876 = vxor.u32 %v1868, 2147483648
  %v1877 = vmul.f32 %v1869, 1.442695
  %v1878 = vpow.pop %v1877
  %v1879 = vmul.f32 %v1870, 1.442695
  %v1880 = vpow.pop %v1879
  %v1881 = vmul.f32 %v1871, 1.442695
  %v1882 = vpow.pop %v1881
  %v1883 = vmul.f32 %v1872, 1.442695
  %v1884 = vpow.pop %v1883
  %v1885 = vmul.f32 %v1873, 1.442695
  %v1886 = vpow.pop %v1885
  %v1887 = vmul.f32 %v1874, 1.442695
  %v1888 = vpow.pop %v1887
  %v1889 = vmul.f32 %v1875, 1.442695
  %v1890 = vpow.pop %v1889
  %v1891 = vmul.f32 %v1876, 1.442695
  %v1892 = vpow.pop %v1891
  %v1893 = vadd.f32 %v1878, 1.0
  %v1894 = vadd.f32 %v1880, 1.0
  %v1895 = vadd.f32 %v1882, 1.0
  %v1896 = vadd.f32 %v1884, 1.0
  %v1897 = vadd.f32 %v1886, 1.0
  %v1898 = vadd.f32 %v1888, 1.0
  %v1899 = vadd.f32 %v1890, 1.0
  %v1900 = vadd.f32 %v1892, 1.0
  %v1901 = vrcp.pop %v1893
  %v1902 = vmul.f32 %v1893, %v1901
  %v1903 = vsub.f32 1.0, %v1902
  %v1904 = vmul.f32 %v1901, %v1903
  %v1905 = vadd.f32 %v1901, %v1904
  %vm1906 = vweird.f32 %v1893
  %vm1907 = vweird.f32 %v1901
  %vm1908 = vmor %vm1906, %vm1907
  %v1909 = vsel %vm1908, %v1901, %v1905
  %v1910 = vand.u32 2147483647, %v1893
  %vm1911 = vcmp.eq.f32.partialorder %v1910, 8.507059e+37
  %v1912 = vand.u32 %v1893, 2147483648
  %v1913 = vor.u32 1.1754944e-38, %v1912
  %v1914 = vsel %vm1911, %v1913, %v1909
  %v1915 = vmul.f32 1.0, %v1914
  %v1916 = vrcp.pop %v1894
  %v1917 = vmul.f32 %v1894, %v1916
  %v1918 = vsub.f32 1.0, %v1917
  %v1919 = vmul.f32 %v1916, %v1918
  %v1920 = vadd.f32 %v1916, %v1919
  %vm1921 = vweird.f32 %v1894
  %vm1922 = vweird.f32 %v1916
  %vm1923 = vmor %vm1921, %vm1922
  %v1924 = vsel %vm1923, %v1916, %v1920
  %v1925 = vand.u32 2147483647, %v1894
  %vm1926 = vcmp.eq.f32.partialorder %v1925, 8.507059e+37
  %v1927 = vand.u32 %v1894, 2147483648
  %v1928 = vor.u32 1.1754944e-38, %v1927
  %v1929 = vsel %vm1926, %v1928, %v1924
  %v1930 = vmul.f32 1.0, %v1929
  %v1931 = vrcp.pop %v1895
  %v1932 = vmul.f32 %v1895, %v1931
  %v1933 = vsub.f32 1.0, %v1932
  %v1934 = vmul.f32 %v1931, %v1933
  %v1935 = vadd.f32 %v1931, %v1934
  %vm1936 = vweird.f32 %v1895
  %vm1937 = vweird.f32 %v1931
  %vm1938 = vmor %vm1936, %vm1937
  %v1939 = vsel %vm1938, %v1931, %v1935
  %v1940 = vand.u32 2147483647, %v1895
  %vm1941 = vcmp.eq.f32.partialorder %v1940, 8.507059e+37
  %v1942 = vand.u32 %v1895, 2147483648
  %v1943 = vor.u32 1.1754944e-38, %v1942
  %v1944 = vsel %vm1941, %v1943, %v1939
  %v1945 = vmul.f32 1.0, %v1944
  %v1946 = vrcp.pop %v1896
  %v1947 = vmul.f32 %v1896, %v1946
  %v1948 = vsub.f32 1.0, %v1947
  %v1949 = vmul.f32 %v1946, %v1948
  %v1950 = vadd.f32 %v1946, %v1949
  %vm1951 = vweird.f32 %v1896
  %vm1952 = vweird.f32 %v1946
  %vm1953 = vmor %vm1951, %vm1952
  %v1954 = vsel %vm1953, %v1946, %v1950
  %v1955 = vand.u32 2147483647, %v1896
  %vm1956 = vcmp.eq.f32.partialorder %v1955, 8.507059e+37
  %v1957 = vand.u32 %v1896, 2147483648
  %v1958 = vor.u32 1.1754944e-38, %v1957
  %v1959 = vsel %vm1956, %v1958, %v1954
  %v1960 = vmul.f32 1.0, %v1959
  %v1961 = vrcp.pop %v1897
  %v1962 = vmul.f32 %v1897, %v1961
  %v1963 = vsub.f32 1.0, %v1962
  %v1964 = vmul.f32 %v1961, %v1963
  %v1965 = vadd.f32 %v1961, %v1964
  %vm1966 = vweird.f32 %v1897
  %vm1967 = vweird.f32 %v1961
  %vm1968 = vmor %vm1966, %vm1967
  %v1969 = vsel %vm1968, %v1961, %v1965
  %v1970 = vand.u32 2147483647, %v1897
  %vm1971 = vcmp.eq.f32.partialorder %v1970, 8.507059e+37
  %v1972 = vand.u32 %v1897, 2147483648
  %v1973 = vor.u32 1.1754944e-38, %v1972
  %v1974 = vsel %vm1971, %v1973, %v1969
  %v1975 = vmul.f32 1.0, %v1974
  %v1976 = vrcp.pop %v1898
  %v1977 = vmul.f32 %v1898, %v1976
  %v1978 = vsub.f32 1.0, %v1977
  %v1979 = vmul.f32 %v1976, %v1978
  %v1980 = vadd.f32 %v1976, %v1979
  %vm1981 = vweird.f32 %v1898
  %vm1982 = vweird.f32 %v1976
  %vm1983 = vmor %vm1981, %vm1982
  %v1984 = vsel %vm1983, %v1976, %v1980
  %v1985 = vand.u32 2147483647, %v1898
  %vm1986 = vcmp.eq.f32.partialorder %v1985, 8.507059e+37
  %v1987 = vand.u32 %v1898, 2147483648
  %v1988 = vor.u32 1.1754944e-38, %v1987
  %v1989 = vsel %vm1986, %v1988, %v1984
  %v1990 = vmul.f32 1.0, %v1989
  %v1991 = vrcp.pop %v1899
  %v1992 = vmul.f32 %v1899, %v1991
  %v1993 = vsub.f32 1.0, %v1992
  %v1994 = vmul.f32 %v1991, %v1993
  %v1995 = vadd.f32 %v1991, %v1994
  %vm1996 = vweird.f32 %v1899
  %vm1997 = vweird.f32 %v1991
  %vm1998 = vmor %vm1996, %vm1997
  %v1999 = vsel %vm1998, %v1991, %v1995
  %v2000 = vand.u32 2147483647, %v1899
  %vm2001 = vcmp.eq.f32.partialorder %v2000, 8.507059e+37
  %v2002 = vand.u32 %v1899, 2147483648
  %v2003 = vor.u32 1.1754944e-38, %v2002
  %v2004 = vsel %vm2001, %v2003, %v1999
  %v2005 = vmul.f32 1.0, %v2004
  %v2006 = vrcp.pop %v1900
  %v2007 = vmul.f32 %v1900, %v2006
  %v2008 = vsub.f32 1.0, %v2007
  %v2009 = vmul.f32 %v2006, %v2008
  %v2010 = vadd.f32 %v2006, %v2009
  %vm2011 = vweird.f32 %v1900
  %vm2012 = vweird.f32 %v2006
  %vm2013 = vmor %vm2011, %vm2012
  %v2014 = vsel %vm2013, %v2006, %v2010
  %v2015 = vand.u32 2147483647, %v1900
  %vm2016 = vcmp.eq.f32.partialorder %v2015, 8.507059e+37
  %v2017 = vand.u32 %v1900, 2147483648
  %v2018 = vor.u32 1.1754944e-38, %v2017
  %v2019 = vsel %vm2016, %v2018, %v2014
  %v2020 = vmul.f32 1.0, %v2019
  %v2021 = vadd.f32 %v1843, %v237
  %v2023 = vrot.slane %v2021, 1
  %v2024 = vrot.slane %v2021, 2
  %v2025 = vrot.slane %v2021, 3
  %v2026 = vrot.slane %v2021, 4
  %v2027 = vrot.slane %v2021, 5
  %v2028 = vrot.slane %v2021, 6
  %v2029 = vrot.slane %v2021, 7
  %2030 = vrot.lane.b32.xlu0 %v2021, 64
  %v2031 = vpop.permute.xlu0 %2030
  %2032 = vrot.lane.b32.xlu0 %v2023, 64
  %v2033 = vpop.permute.xlu0 %2032
  %2034 = vrot.lane.b32.xlu0 %v2024, 64
  %v2035 = vpop.permute.xlu0 %2034
  %2036 = vrot.lane.b32.xlu0 %v2025, 64
  %v2037 = vpop.permute.xlu0 %2036
  %2038 = vrot.lane.b32.xlu0 %v2026, 64
  %v2039 = vpop.permute.xlu0 %2038
  %2040 = vrot.lane.b32.xlu0 %v2027, 64
  %v2041 = vpop.permute.xlu0 %2040
  %2042 = vrot.lane.b32.xlu0 %v2028, 64
  %v2043 = vpop.permute.xlu0 %2042
  %2044 = vrot.lane.b32.xlu0 %v2029, 64
  %v2045 = vpop.permute.xlu0 %2044
  %v2054 = vmul.f32 %v1915, %v2031
  %v2055 = vmul.f32 %v1930, %v2033
  %v2056 = vmul.f32 %v1945, %v2035
  %v2057 = vmul.f32 %v1960, %v2037
  %v2058 = vmul.f32 %v1975, %v2039
  %v2059 = vmul.f32 %v1990, %v2041
  %v2060 = vmul.f32 %v2005, %v2043
  %v2061 = vmul.f32 %v2020, %v2045
  %2070 = vrot.lane.b32.xlu0 %v2054, 64
  %v2071 = vpop.permute.xlu0 %2070
  %2072 = vrot.lane.b32.xlu0 %v2055, 64
  %v2073 = vpop.permute.xlu0 %2072
  %2074 = vrot.lane.b32.xlu0 %v2056, 64
  %v2075 = vpop.permute.xlu0 %2074
  %2076 = vrot.lane.b32.xlu0 %v2057, 64
  %v2077 = vpop.permute.xlu0 %2076
  %2078 = vrot.lane.b32.xlu0 %v2058, 64
  %v2079 = vpop.permute.xlu0 %2078
  %2080 = vrot.lane.b32.xlu0 %v2059, 64
  %v2081 = vpop.permute.xlu0 %2080
  %2082 = vrot.lane.b32.xlu0 %v2060, 64
  %v2083 = vpop.permute.xlu0 %2082
  %2084 = vrot.lane.b32.xlu0 %v2061, 64
  %v2085 = vpop.permute.xlu0 %2084
  %v2094 = vadd.f32 %v1799, %v2071
  %v2095 = vadd.f32 %v1800, %v2073
  %v2096 = vadd.f32 %v1801, %v2075
  %v2097 = vadd.f32 %v1802, %v2077
  %v2098 = vadd.f32 %v1803, %v2079
  %v2099 = vadd.f32 %v1804, %v2081
  %v2100 = vadd.f32 %v1805, %v2083
  %v2101 = vadd.f32 %v1806, %v2085
  %v2102 = vtanh.pop %v2094
  %v2103 = vtanh.pop %v2095
  %v2104 = vtanh.pop %v2096
  %v2105 = vtanh.pop %v2097
  %v2106 = vtanh.pop %v2098
  %v2107 = vtanh.pop %v2099
  %v2108 = vtanh.pop %v2100
  %v2109 = vtanh.pop %v2101
  %v2110 = vsub.f32 %v1751, %v2102
  %v2111 = vsub.f32 %v1752, %v2103
  %v2112 = vsub.f32 %v1753, %v2104
  %v2113 = vsub.f32 %v1754, %v2105
  %v2114 = vsub.f32 %v1755, %v2106
  %v2115 = vsub.f32 %v1756, %v2107
  %v2116 = vsub.f32 %v1757, %v2108
  %v2117 = vsub.f32 %v1758, %v2109
  %2126 = vrot.lane.b32.xlu0 %v2110, 96
  %v2127 = vpop.permute.xlu0 %2126
  %2128 = vrot.lane.b32.xlu0 %v2111, 96
  %v2129 = vpop.permute.xlu0 %2128
  %2130 = vrot.lane.b32.xlu0 %v2112, 96
  %v2131 = vpop.permute.xlu0 %2130
  %2132 = vrot.lane.b32.xlu0 %v2113, 96
  %v2133 = vpop.permute.xlu0 %2132
  %2134 = vrot.lane.b32.xlu0 %v2114, 96
  %v2135 = vpop.permute.xlu0 %2134
  %2136 = vrot.lane.b32.xlu0 %v2115, 96
  %v2137 = vpop.permute.xlu0 %2136
  %2138 = vrot.lane.b32.xlu0 %v2116, 96
  %v2139 = vpop.permute.xlu0 %2138
  %2140 = vrot.lane.b32.xlu0 %v2117, 96
  %v2141 = vpop.permute.xlu0 %2140
  %v2150 = vmul.f32 %v1915, %v2127
  %v2151 = vmul.f32 %v1930, %v2129
  %v2152 = vmul.f32 %v1945, %v2131
  %v2153 = vmul.f32 %v1960, %v2133
  %v2154 = vmul.f32 %v1975, %v2135
  %v2155 = vmul.f32 %v1990, %v2137
  %v2156 = vmul.f32 %v2005, %v2139
  %v2157 = vmul.f32 %v2020, %v2141
  %2166 = vrot.lane.b32.xlu0 %v2150, 32
  %v2167 = vpop.permute.xlu0 %2166
  %2168 = vrot.lane.b32.xlu0 %v2151, 32
  %v2169 = vpop.permute.xlu0 %2168
  %2170 = vrot.lane.b32.xlu0 %v2152, 32
  %v2171 = vpop.permute.xlu0 %2170
  %2172 = vrot.lane.b32.xlu0 %v2153, 32
  %v2173 = vpop.permute.xlu0 %2172
  %2174 = vrot.lane.b32.xlu0 %v2154, 32
  %v2175 = vpop.permute.xlu0 %2174
  %2176 = vrot.lane.b32.xlu0 %v2155, 32
  %v2177 = vpop.permute.xlu0 %2176
  %2178 = vrot.lane.b32.xlu0 %v2156, 32
  %v2179 = vpop.permute.xlu0 %2178
  %2180 = vrot.lane.b32.xlu0 %v2157, 32
  %v2181 = vpop.permute.xlu0 %2180
  %v2190 = vadd.f32 %v2102, %v2167
  %v2191 = vadd.f32 %v2103, %v2169
  %v2192 = vadd.f32 %v2104, %v2171
  %v2193 = vadd.f32 %v2105, %v2173
  %v2194 = vadd.f32 %v2106, %v2175
  %v2195 = vadd.f32 %v2107, %v2177
  %v2196 = vadd.f32 %v2108, %v2179
  %v2197 = vadd.f32 %v2109, %v2181
  %2206 = vrot.lane.b32.xlu0 %v2190, 64
  %v2207 = vpop.permute.xlu0 %2206
  %2208 = vrot.lane.b32.xlu0 %v2191, 64
  %v2209 = vpop.permute.xlu0 %2208
  %2210 = vrot.lane.b32.xlu0 %v2192, 64
  %v2211 = vpop.permute.xlu0 %2210
  %2212 = vrot.lane.b32.xlu0 %v2193, 64
  %v2213 = vpop.permute.xlu0 %2212
  %2214 = vrot.lane.b32.xlu0 %v2194, 64
  %v2215 = vpop.permute.xlu0 %2214
  %2216 = vrot.lane.b32.xlu0 %v2195, 64
  %v2217 = vpop.permute.xlu0 %2216
  %2218 = vrot.lane.b32.xlu0 %v2196, 64
  %v2219 = vpop.permute.xlu0 %2218
  %2220 = vrot.lane.b32.xlu0 %v2197, 64
  %v2221 = vpop.permute.xlu0 %2220
  %2230 = vst.msk [vmem:[%s3 + $0x4] sm:$0x1] %vm473, %v2207
  %2231 = vst.msk [vmem:[%s3 + $0xc] sm:$0x1] %vm473, %v2209
  %2232 = vst.msk [vmem:[%s3 + $0x14] sm:$0x1] %vm473, %v2211
  %2233 = vst.msk [vmem:[%s3 + $0x1c] sm:$0x1] %vm473, %v2213
  %2234 = vst.msk [vmem:[%s3 + $0x24] sm:$0x1] %vm473, %v2215
  %2235 = vst.msk [vmem:[%s3 + $0x2c] sm:$0x1] %vm473, %v2217
  %2236 = vst.msk [vmem:[%s3 + $0x34] sm:$0x1] %vm473, %v2219
  %2237 = vst.msk [vmem:[%s3 + $0x3c] sm:$0x1] %vm473, %v2221
  %v2238 = vld [vmem:[%s0 + $0x5] sm:$0x1]
  %v2239 = vld [vmem:[%s0 + $0xd] sm:$0x1]
  %v2240 = vld [vmem:[%s0 + $0x15] sm:$0x1]
  %v2241 = vld [vmem:[%s0 + $0x1d] sm:$0x1]
  %v2242 = vld [vmem:[%s0 + $0x25] sm:$0x1]
  %v2243 = vld [vmem:[%s0 + $0x2d] sm:$0x1]
  %v2244 = vld [vmem:[%s0 + $0x35] sm:$0x1]
  %v2245 = vld [vmem:[%s0 + $0x3d] sm:$0x1]
  %v2246 = vrot.slane %v2191, 7
  %v2247 = vsel %vm337, %v2246, %v2190
  %v2248 = vrot.slane %v2192, 6
  %v2249 = vsel %vm340, %v2248, %v2247
  %v2250 = vrot.slane %v2193, 5
  %v2251 = vsel %vm343, %v2250, %v2249
  %v2252 = vrot.slane %v2194, 4
  %v2253 = vsel %vm346, %v2252, %v2251
  %v2254 = vrot.slane %v2195, 3
  %v2255 = vsel %vm349, %v2254, %v2253
  %v2256 = vrot.slane %v2196, 2
  %v2257 = vsel %vm352, %v2256, %v2255
  %v2258 = vrot.slane %v2197, 1
  %v2259 = vsel %vm355, %v2258, %v2257
  %2260 = vrot.lane.b32.xlu0 %v2259, 64
  %v2261 = vpop.permute.xlu0 %2260
  %v2262 = vsel %vm34, %v2261, 0
  %2264 = vmatpush.msra.mxu0 0.0
  %2265 = vmatpush.msra.mxu0 0.0
  %2266 = vmatpush.msra.mxu0 0.0
  %2267 = vmatpush.msra.mxu0 0.0
  %2268 = vmatpush.msra.mxu0 0.0
  %2269 = vmatpush.msra.mxu0 0.0
  %2270 = vmatpush.msra.mxu0 0.0
  %2271 = vmatpush.msra.mxu0 0.0
  %2272 = vmatpush.msra.mxu0 0.0
  %2273 = vmatpush.msra.mxu0 0.0
  %2274 = vmatpush.msra.mxu0 0.0
  %2275 = vmatpush.msra.mxu0 0.0
  %2276 = vmatpush.msra.mxu0 %v23
  %2277 = vmatpush.msra.mxu0 %v22
  %2278 = vmatpush.msra.mxu0 %v21
  %2279 = vmatpush.msra.mxu0 %v20
  %2280 = vmatmul.f32.gmra.mxu0 %v2262
  %v2281 = vpop.f32.mrf.mxu0
  %v2282 = vadd.f32 0.0, %v2281
  %2283 = vdwg.mxu0
  %v2285 = vrot.slane %v2282, 1
  %v2286 = vrot.slane %v2282, 2
  %v2287 = vrot.slane %v2282, 3
  %v2288 = vrot.slane %v2282, 4
  %v2289 = vrot.slane %v2282, 5
  %v2290 = vrot.slane %v2282, 6
  %v2291 = vrot.slane %v2282, 7
  %v2300 = vadd.f32 %v2238, %v2282
  %v2301 = vadd.f32 %v2239, %v2285
  %v2302 = vadd.f32 %v2240, %v2286
  %v2303 = vadd.f32 %v2241, %v2287
  %v2304 = vadd.f32 %v2242, %v2288
  %v2305 = vadd.f32 %v2243, %v2289
  %v2306 = vadd.f32 %v2244, %v2290
  %v2307 = vadd.f32 %v2245, %v2291
  %v2308 = vxor.u32 %v2300, 2147483648
  %v2309 = vxor.u32 %v2301, 2147483648
  %v2310 = vxor.u32 %v2302, 2147483648
  %v2311 = vxor.u32 %v2303, 2147483648
  %v2312 = vxor.u32 %v2304, 2147483648
  %v2313 = vxor.u32 %v2305, 2147483648
  %v2314 = vxor.u32 %v2306, 2147483648
  %v2315 = vxor.u32 %v2307, 2147483648
  %v2316 = vmul.f32 %v2308, 1.442695
  %v2317 = vpow.pop %v2316
  %v2318 = vmul.f32 %v2309, 1.442695
  %v2319 = vpow.pop %v2318
  %v2320 = vmul.f32 %v2310, 1.442695
  %v2321 = vpow.pop %v2320
  %v2322 = vmul.f32 %v2311, 1.442695
  %v2323 = vpow.pop %v2322
  %v2324 = vmul.f32 %v2312, 1.442695
  %v2325 = vpow.pop %v2324
  %v2326 = vmul.f32 %v2313, 1.442695
  %v2327 = vpow.pop %v2326
  %v2328 = vmul.f32 %v2314, 1.442695
  %v2329 = vpow.pop %v2328
  %v2330 = vmul.f32 %v2315, 1.442695
  %v2331 = vpow.pop %v2330
  %v2332 = vadd.f32 %v2317, 1.0
  %v2333 = vadd.f32 %v2319, 1.0
  %v2334 = vadd.f32 %v2321, 1.0
  %v2335 = vadd.f32 %v2323, 1.0
  %v2336 = vadd.f32 %v2325, 1.0
  %v2337 = vadd.f32 %v2327, 1.0
  %v2338 = vadd.f32 %v2329, 1.0
  %v2339 = vadd.f32 %v2331, 1.0
  %v2340 = vrcp.pop %v2332
  %v2341 = vmul.f32 %v2332, %v2340
  %v2342 = vsub.f32 1.0, %v2341
  %v2343 = vmul.f32 %v2340, %v2342
  %v2344 = vadd.f32 %v2340, %v2343
  %vm2345 = vweird.f32 %v2332
  %vm2346 = vweird.f32 %v2340
  %vm2347 = vmor %vm2345, %vm2346
  %v2348 = vsel %vm2347, %v2340, %v2344
  %v2349 = vand.u32 2147483647, %v2332
  %vm2350 = vcmp.eq.f32.partialorder %v2349, 8.507059e+37
  %v2351 = vand.u32 %v2332, 2147483648
  %v2352 = vor.u32 1.1754944e-38, %v2351
  %v2353 = vsel %vm2350, %v2352, %v2348
  %v2354 = vmul.f32 1.0, %v2353
  %v2355 = vrcp.pop %v2333
  %v2356 = vmul.f32 %v2333, %v2355
  %v2357 = vsub.f32 1.0, %v2356
  %v2358 = vmul.f32 %v2355, %v2357
  %v2359 = vadd.f32 %v2355, %v2358
  %vm2360 = vweird.f32 %v2333
  %vm2361 = vweird.f32 %v2355
  %vm2362 = vmor %vm2360, %vm2361
  %v2363 = vsel %vm2362, %v2355, %v2359
  %v2364 = vand.u32 2147483647, %v2333
  %vm2365 = vcmp.eq.f32.partialorder %v2364, 8.507059e+37
  %v2366 = vand.u32 %v2333, 2147483648
  %v2367 = vor.u32 1.1754944e-38, %v2366
  %v2368 = vsel %vm2365, %v2367, %v2363
  %v2369 = vmul.f32 1.0, %v2368
  %v2370 = vrcp.pop %v2334
  %v2371 = vmul.f32 %v2334, %v2370
  %v2372 = vsub.f32 1.0, %v2371
  %v2373 = vmul.f32 %v2370, %v2372
  %v2374 = vadd.f32 %v2370, %v2373
  %vm2375 = vweird.f32 %v2334
  %vm2376 = vweird.f32 %v2370
  %vm2377 = vmor %vm2375, %vm2376
  %v2378 = vsel %vm2377, %v2370, %v2374
  %v2379 = vand.u32 2147483647, %v2334
  %vm2380 = vcmp.eq.f32.partialorder %v2379, 8.507059e+37
  %v2381 = vand.u32 %v2334, 2147483648
  %v2382 = vor.u32 1.1754944e-38, %v2381
  %v2383 = vsel %vm2380, %v2382, %v2378
  %v2384 = vmul.f32 1.0, %v2383
  %v2385 = vrcp.pop %v2335
  %v2386 = vmul.f32 %v2335, %v2385
  %v2387 = vsub.f32 1.0, %v2386
  %v2388 = vmul.f32 %v2385, %v2387
  %v2389 = vadd.f32 %v2385, %v2388
  %vm2390 = vweird.f32 %v2335
  %vm2391 = vweird.f32 %v2385
  %vm2392 = vmor %vm2390, %vm2391
  %v2393 = vsel %vm2392, %v2385, %v2389
  %v2394 = vand.u32 2147483647, %v2335
  %vm2395 = vcmp.eq.f32.partialorder %v2394, 8.507059e+37
  %v2396 = vand.u32 %v2335, 2147483648
  %v2397 = vor.u32 1.1754944e-38, %v2396
  %v2398 = vsel %vm2395, %v2397, %v2393
  %v2399 = vmul.f32 1.0, %v2398
  %v2400 = vrcp.pop %v2336
  %v2401 = vmul.f32 %v2336, %v2400
  %v2402 = vsub.f32 1.0, %v2401
  %v2403 = vmul.f32 %v2400, %v2402
  %v2404 = vadd.f32 %v2400, %v2403
  %vm2405 = vweird.f32 %v2336
  %vm2406 = vweird.f32 %v2400
  %vm2407 = vmor %vm2405, %vm2406
  %v2408 = vsel %vm2407, %v2400, %v2404
  %v2409 = vand.u32 2147483647, %v2336
  %vm2410 = vcmp.eq.f32.partialorder %v2409, 8.507059e+37
  %v2411 = vand.u32 %v2336, 2147483648
  %v2412 = vor.u32 1.1754944e-38, %v2411
  %v2413 = vsel %vm2410, %v2412, %v2408
  %v2414 = vmul.f32 1.0, %v2413
  %v2415 = vrcp.pop %v2337
  %v2416 = vmul.f32 %v2337, %v2415
  %v2417 = vsub.f32 1.0, %v2416
  %v2418 = vmul.f32 %v2415, %v2417
  %v2419 = vadd.f32 %v2415, %v2418
  %vm2420 = vweird.f32 %v2337
  %vm2421 = vweird.f32 %v2415
  %vm2422 = vmor %vm2420, %vm2421
  %v2423 = vsel %vm2422, %v2415, %v2419
  %v2424 = vand.u32 2147483647, %v2337
  %vm2425 = vcmp.eq.f32.partialorder %v2424, 8.507059e+37
  %v2426 = vand.u32 %v2337, 2147483648
  %v2427 = vor.u32 1.1754944e-38, %v2426
  %v2428 = vsel %vm2425, %v2427, %v2423
  %v2429 = vmul.f32 1.0, %v2428
  %v2430 = vrcp.pop %v2338
  %v2431 = vmul.f32 %v2338, %v2430
  %v2432 = vsub.f32 1.0, %v2431
  %v2433 = vmul.f32 %v2430, %v2432
  %v2434 = vadd.f32 %v2430, %v2433
  %vm2435 = vweird.f32 %v2338
  %vm2436 = vweird.f32 %v2430
  %vm2437 = vmor %vm2435, %vm2436
  %v2438 = vsel %vm2437, %v2430, %v2434
  %v2439 = vand.u32 2147483647, %v2338
  %vm2440 = vcmp.eq.f32.partialorder %v2439, 8.507059e+37
  %v2441 = vand.u32 %v2338, 2147483648
  %v2442 = vor.u32 1.1754944e-38, %v2441
  %v2443 = vsel %vm2440, %v2442, %v2438
  %v2444 = vmul.f32 1.0, %v2443
  %v2445 = vrcp.pop %v2339
  %v2446 = vmul.f32 %v2339, %v2445
  %v2447 = vsub.f32 1.0, %v2446
  %v2448 = vmul.f32 %v2445, %v2447
  %v2449 = vadd.f32 %v2445, %v2448
  %vm2450 = vweird.f32 %v2339
  %vm2451 = vweird.f32 %v2445
  %vm2452 = vmor %vm2450, %vm2451
  %v2453 = vsel %vm2452, %v2445, %v2449
  %v2454 = vand.u32 2147483647, %v2339
  %vm2455 = vcmp.eq.f32.partialorder %v2454, 8.507059e+37
  %v2456 = vand.u32 %v2339, 2147483648
  %v2457 = vor.u32 1.1754944e-38, %v2456
  %v2458 = vsel %vm2455, %v2457, %v2453
  %v2459 = vmul.f32 1.0, %v2458
  %v2460 = vadd.f32 %v2282, %v237
  %v2462 = vrot.slane %v2460, 1
  %v2463 = vrot.slane %v2460, 2
  %v2464 = vrot.slane %v2460, 3
  %v2465 = vrot.slane %v2460, 4
  %v2466 = vrot.slane %v2460, 5
  %v2467 = vrot.slane %v2460, 6
  %v2468 = vrot.slane %v2460, 7
  %2469 = vrot.lane.b32.xlu0 %v2460, 64
  %v2470 = vpop.permute.xlu0 %2469
  %2471 = vrot.lane.b32.xlu0 %v2462, 64
  %v2472 = vpop.permute.xlu0 %2471
  %2473 = vrot.lane.b32.xlu0 %v2463, 64
  %v2474 = vpop.permute.xlu0 %2473
  %2475 = vrot.lane.b32.xlu0 %v2464, 64
  %v2476 = vpop.permute.xlu0 %2475
  %2477 = vrot.lane.b32.xlu0 %v2465, 64
  %v2478 = vpop.permute.xlu0 %2477
  %2479 = vrot.lane.b32.xlu0 %v2466, 64
  %v2480 = vpop.permute.xlu0 %2479
  %2481 = vrot.lane.b32.xlu0 %v2467, 64
  %v2482 = vpop.permute.xlu0 %2481
  %2483 = vrot.lane.b32.xlu0 %v2468, 64
  %v2484 = vpop.permute.xlu0 %2483
  %v2493 = vmul.f32 %v2354, %v2470
  %v2494 = vmul.f32 %v2369, %v2472
  %v2495 = vmul.f32 %v2384, %v2474
  %v2496 = vmul.f32 %v2399, %v2476
  %v2497 = vmul.f32 %v2414, %v2478
  %v2498 = vmul.f32 %v2429, %v2480
  %v2499 = vmul.f32 %v2444, %v2482
  %v2500 = vmul.f32 %v2459, %v2484
  %2509 = vrot.lane.b32.xlu0 %v2493, 64
  %v2510 = vpop.permute.xlu0 %2509
  %2511 = vrot.lane.b32.xlu0 %v2494, 64
  %v2512 = vpop.permute.xlu0 %2511
  %2513 = vrot.lane.b32.xlu0 %v2495, 64
  %v2514 = vpop.permute.xlu0 %2513
  %2515 = vrot.lane.b32.xlu0 %v2496, 64
  %v2516 = vpop.permute.xlu0 %2515
  %2517 = vrot.lane.b32.xlu0 %v2497, 64
  %v2518 = vpop.permute.xlu0 %2517
  %2519 = vrot.lane.b32.xlu0 %v2498, 64
  %v2520 = vpop.permute.xlu0 %2519
  %2521 = vrot.lane.b32.xlu0 %v2499, 64
  %v2522 = vpop.permute.xlu0 %2521
  %2523 = vrot.lane.b32.xlu0 %v2500, 64
  %v2524 = vpop.permute.xlu0 %2523
  %v2533 = vadd.f32 %v2238, %v2510
  %v2534 = vadd.f32 %v2239, %v2512
  %v2535 = vadd.f32 %v2240, %v2514
  %v2536 = vadd.f32 %v2241, %v2516
  %v2537 = vadd.f32 %v2242, %v2518
  %v2538 = vadd.f32 %v2243, %v2520
  %v2539 = vadd.f32 %v2244, %v2522
  %v2540 = vadd.f32 %v2245, %v2524
  %v2541 = vtanh.pop %v2533
  %v2542 = vtanh.pop %v2534
  %v2543 = vtanh.pop %v2535
  %v2544 = vtanh.pop %v2536
  %v2545 = vtanh.pop %v2537
  %v2546 = vtanh.pop %v2538
  %v2547 = vtanh.pop %v2539
  %v2548 = vtanh.pop %v2540
  %v2549 = vsub.f32 %v2190, %v2541
  %v2550 = vsub.f32 %v2191, %v2542
  %v2551 = vsub.f32 %v2192, %v2543
  %v2552 = vsub.f32 %v2193, %v2544
  %v2553 = vsub.f32 %v2194, %v2545
  %v2554 = vsub.f32 %v2195, %v2546
  %v2555 = vsub.f32 %v2196, %v2547
  %v2556 = vsub.f32 %v2197, %v2548
  %2565 = vrot.lane.b32.xlu0 %v2549, 96
  %v2566 = vpop.permute.xlu0 %2565
  %2567 = vrot.lane.b32.xlu0 %v2550, 96
  %v2568 = vpop.permute.xlu0 %2567
  %2569 = vrot.lane.b32.xlu0 %v2551, 96
  %v2570 = vpop.permute.xlu0 %2569
  %2571 = vrot.lane.b32.xlu0 %v2552, 96
  %v2572 = vpop.permute.xlu0 %2571
  %2573 = vrot.lane.b32.xlu0 %v2553, 96
  %v2574 = vpop.permute.xlu0 %2573
  %2575 = vrot.lane.b32.xlu0 %v2554, 96
  %v2576 = vpop.permute.xlu0 %2575
  %2577 = vrot.lane.b32.xlu0 %v2555, 96
  %v2578 = vpop.permute.xlu0 %2577
  %2579 = vrot.lane.b32.xlu0 %v2556, 96
  %v2580 = vpop.permute.xlu0 %2579
  %v2589 = vmul.f32 %v2354, %v2566
  %v2590 = vmul.f32 %v2369, %v2568
  %v2591 = vmul.f32 %v2384, %v2570
  %v2592 = vmul.f32 %v2399, %v2572
  %v2593 = vmul.f32 %v2414, %v2574
  %v2594 = vmul.f32 %v2429, %v2576
  %v2595 = vmul.f32 %v2444, %v2578
  %v2596 = vmul.f32 %v2459, %v2580
  %2605 = vrot.lane.b32.xlu0 %v2589, 32
  %v2606 = vpop.permute.xlu0 %2605
  %2607 = vrot.lane.b32.xlu0 %v2590, 32
  %v2608 = vpop.permute.xlu0 %2607
  %2609 = vrot.lane.b32.xlu0 %v2591, 32
  %v2610 = vpop.permute.xlu0 %2609
  %2611 = vrot.lane.b32.xlu0 %v2592, 32
  %v2612 = vpop.permute.xlu0 %2611
  %2613 = vrot.lane.b32.xlu0 %v2593, 32
  %v2614 = vpop.permute.xlu0 %2613
  %2615 = vrot.lane.b32.xlu0 %v2594, 32
  %v2616 = vpop.permute.xlu0 %2615
  %2617 = vrot.lane.b32.xlu0 %v2595, 32
  %v2618 = vpop.permute.xlu0 %2617
  %2619 = vrot.lane.b32.xlu0 %v2596, 32
  %v2620 = vpop.permute.xlu0 %2619
  %v2629 = vadd.f32 %v2541, %v2606
  %v2630 = vadd.f32 %v2542, %v2608
  %v2631 = vadd.f32 %v2543, %v2610
  %v2632 = vadd.f32 %v2544, %v2612
  %v2633 = vadd.f32 %v2545, %v2614
  %v2634 = vadd.f32 %v2546, %v2616
  %v2635 = vadd.f32 %v2547, %v2618
  %v2636 = vadd.f32 %v2548, %v2620
  %2645 = vrot.lane.b32.xlu0 %v2629, 64
  %v2646 = vpop.permute.xlu0 %2645
  %2647 = vrot.lane.b32.xlu0 %v2630, 64
  %v2648 = vpop.permute.xlu0 %2647
  %2649 = vrot.lane.b32.xlu0 %v2631, 64
  %v2650 = vpop.permute.xlu0 %2649
  %2651 = vrot.lane.b32.xlu0 %v2632, 64
  %v2652 = vpop.permute.xlu0 %2651
  %2653 = vrot.lane.b32.xlu0 %v2633, 64
  %v2654 = vpop.permute.xlu0 %2653
  %2655 = vrot.lane.b32.xlu0 %v2634, 64
  %v2656 = vpop.permute.xlu0 %2655
  %2657 = vrot.lane.b32.xlu0 %v2635, 64
  %v2658 = vpop.permute.xlu0 %2657
  %2659 = vrot.lane.b32.xlu0 %v2636, 64
  %v2660 = vpop.permute.xlu0 %2659
  %2669 = vst.msk [vmem:[%s3 + $0x5] sm:$0x1] %vm473, %v2646
  %2670 = vst.msk [vmem:[%s3 + $0xd] sm:$0x1] %vm473, %v2648
  %2671 = vst.msk [vmem:[%s3 + $0x15] sm:$0x1] %vm473, %v2650
  %2672 = vst.msk [vmem:[%s3 + $0x1d] sm:$0x1] %vm473, %v2652
  %2673 = vst.msk [vmem:[%s3 + $0x25] sm:$0x1] %vm473, %v2654
  %2674 = vst.msk [vmem:[%s3 + $0x2d] sm:$0x1] %vm473, %v2656
  %2675 = vst.msk [vmem:[%s3 + $0x35] sm:$0x1] %vm473, %v2658
  %2676 = vst.msk [vmem:[%s3 + $0x3d] sm:$0x1] %vm473, %v2660
  %v2677 = vld [vmem:[%s0 + $0x6] sm:$0x1]
  %v2678 = vld [vmem:[%s0 + $0xe] sm:$0x1]
  %v2679 = vld [vmem:[%s0 + $0x16] sm:$0x1]
  %v2680 = vld [vmem:[%s0 + $0x1e] sm:$0x1]
  %v2681 = vld [vmem:[%s0 + $0x26] sm:$0x1]
  %v2682 = vld [vmem:[%s0 + $0x2e] sm:$0x1]
  %v2683 = vld [vmem:[%s0 + $0x36] sm:$0x1]
  %v2684 = vld [vmem:[%s0 + $0x3e] sm:$0x1]
  %v2685 = vrot.slane %v2630, 7
  %v2686 = vsel %vm337, %v2685, %v2629
  %v2687 = vrot.slane %v2631, 6
  %v2688 = vsel %vm340, %v2687, %v2686
  %v2689 = vrot.slane %v2632, 5
  %v2690 = vsel %vm343, %v2689, %v2688
  %v2691 = vrot.slane %v2633, 4
  %v2692 = vsel %vm346, %v2691, %v2690
  %v2693 = vrot.slane %v2634, 3
  %v2694 = vsel %vm349, %v2693, %v2692
  %v2695 = vrot.slane %v2635, 2
  %v2696 = vsel %vm352, %v2695, %v2694
  %v2697 = vrot.slane %v2636, 1
  %v2698 = vsel %vm355, %v2697, %v2696
  %2699 = vrot.lane.b32.xlu0 %v2698, 64
  %v2700 = vpop.permute.xlu0 %2699
  %v2701 = vsel %vm34, %v2700, 0
  %2703 = vmatpush.msra.mxu0 0.0
  %2704 = vmatpush.msra.mxu0 0.0
  %2705 = vmatpush.msra.mxu0 0.0
  %2706 = vmatpush.msra.mxu0 0.0
  %2707 = vmatpush.msra.mxu0 0.0
  %2708 = vmatpush.msra.mxu0 0.0
  %2709 = vmatpush.msra.mxu0 0.0
  %2710 = vmatpush.msra.mxu0 0.0
  %2711 = vmatpush.msra.mxu0 0.0
  %2712 = vmatpush.msra.mxu0 0.0
  %2713 = vmatpush.msra.mxu0 0.0
  %2714 = vmatpush.msra.mxu0 0.0
  %2715 = vmatpush.msra.mxu0 %v23
  %2716 = vmatpush.msra.mxu0 %v22
  %2717 = vmatpush.msra.mxu0 %v21
  %2718 = vmatpush.msra.mxu0 %v20
  %2719 = vmatmul.f32.gmra.mxu0 %v2701
  %v2720 = vpop.f32.mrf.mxu0
  %v2721 = vadd.f32 0.0, %v2720
  %2722 = vdwg.mxu0
  %v2724 = vrot.slane %v2721, 1
  %v2725 = vrot.slane %v2721, 2
  %v2726 = vrot.slane %v2721, 3
  %v2727 = vrot.slane %v2721, 4
  %v2728 = vrot.slane %v2721, 5
  %v2729 = vrot.slane %v2721, 6
  %v2730 = vrot.slane %v2721, 7
  %v2739 = vadd.f32 %v2677, %v2721
  %v2740 = vadd.f32 %v2678, %v2724
  %v2741 = vadd.f32 %v2679, %v2725
  %v2742 = vadd.f32 %v2680, %v2726
  %v2743 = vadd.f32 %v2681, %v2727
  %v2744 = vadd.f32 %v2682, %v2728
  %v2745 = vadd.f32 %v2683, %v2729
  %v2746 = vadd.f32 %v2684, %v2730
  %v2747 = vxor.u32 %v2739, 2147483648
  %v2748 = vxor.u32 %v2740, 2147483648
  %v2749 = vxor.u32 %v2741, 2147483648
  %v2750 = vxor.u32 %v2742, 2147483648
  %v2751 = vxor.u32 %v2743, 2147483648
  %v2752 = vxor.u32 %v2744, 2147483648
  %v2753 = vxor.u32 %v2745, 2147483648
  %v2754 = vxor.u32 %v2746, 2147483648
  %v2755 = vmul.f32 %v2747, 1.442695
  %v2756 = vpow.pop %v2755
  %v2757 = vmul.f32 %v2748, 1.442695
  %v2758 = vpow.pop %v2757
  %v2759 = vmul.f32 %v2749, 1.442695
  %v2760 = vpow.pop %v2759
  %v2761 = vmul.f32 %v2750, 1.442695
  %v2762 = vpow.pop %v2761
  %v2763 = vmul.f32 %v2751, 1.442695
  %v2764 = vpow.pop %v2763
  %v2765 = vmul.f32 %v2752, 1.442695
  %v2766 = vpow.pop %v2765
  %v2767 = vmul.f32 %v2753, 1.442695
  %v2768 = vpow.pop %v2767
  %v2769 = vmul.f32 %v2754, 1.442695
  %v2770 = vpow.pop %v2769
  %v2771 = vadd.f32 %v2756, 1.0
  %v2772 = vadd.f32 %v2758, 1.0
  %v2773 = vadd.f32 %v2760, 1.0
  %v2774 = vadd.f32 %v2762, 1.0
  %v2775 = vadd.f32 %v2764, 1.0
  %v2776 = vadd.f32 %v2766, 1.0
  %v2777 = vadd.f32 %v2768, 1.0
  %v2778 = vadd.f32 %v2770, 1.0
  %v2779 = vrcp.pop %v2771
  %v2780 = vmul.f32 %v2771, %v2779
  %v2781 = vsub.f32 1.0, %v2780
  %v2782 = vmul.f32 %v2779, %v2781
  %v2783 = vadd.f32 %v2779, %v2782
  %vm2784 = vweird.f32 %v2771
  %vm2785 = vweird.f32 %v2779
  %vm2786 = vmor %vm2784, %vm2785
  %v2787 = vsel %vm2786, %v2779, %v2783
  %v2788 = vand.u32 2147483647, %v2771
  %vm2789 = vcmp.eq.f32.partialorder %v2788, 8.507059e+37
  %v2790 = vand.u32 %v2771, 2147483648
  %v2791 = vor.u32 1.1754944e-38, %v2790
  %v2792 = vsel %vm2789, %v2791, %v2787
  %v2793 = vmul.f32 1.0, %v2792
  %v2794 = vrcp.pop %v2772
  %v2795 = vmul.f32 %v2772, %v2794
  %v2796 = vsub.f32 1.0, %v2795
  %v2797 = vmul.f32 %v2794, %v2796
  %v2798 = vadd.f32 %v2794, %v2797
  %vm2799 = vweird.f32 %v2772
  %vm2800 = vweird.f32 %v2794
  %vm2801 = vmor %vm2799, %vm2800
  %v2802 = vsel %vm2801, %v2794, %v2798
  %v2803 = vand.u32 2147483647, %v2772
  %vm2804 = vcmp.eq.f32.partialorder %v2803, 8.507059e+37
  %v2805 = vand.u32 %v2772, 2147483648
  %v2806 = vor.u32 1.1754944e-38, %v2805
  %v2807 = vsel %vm2804, %v2806, %v2802
  %v2808 = vmul.f32 1.0, %v2807
  %v2809 = vrcp.pop %v2773
  %v2810 = vmul.f32 %v2773, %v2809
  %v2811 = vsub.f32 1.0, %v2810
  %v2812 = vmul.f32 %v2809, %v2811
  %v2813 = vadd.f32 %v2809, %v2812
  %vm2814 = vweird.f32 %v2773
  %vm2815 = vweird.f32 %v2809
  %vm2816 = vmor %vm2814, %vm2815
  %v2817 = vsel %vm2816, %v2809, %v2813
  %v2818 = vand.u32 2147483647, %v2773
  %vm2819 = vcmp.eq.f32.partialorder %v2818, 8.507059e+37
  %v2820 = vand.u32 %v2773, 2147483648
  %v2821 = vor.u32 1.1754944e-38, %v2820
  %v2822 = vsel %vm2819, %v2821, %v2817
  %v2823 = vmul.f32 1.0, %v2822
  %v2824 = vrcp.pop %v2774
  %v2825 = vmul.f32 %v2774, %v2824
  %v2826 = vsub.f32 1.0, %v2825
  %v2827 = vmul.f32 %v2824, %v2826
  %v2828 = vadd.f32 %v2824, %v2827
  %vm2829 = vweird.f32 %v2774
  %vm2830 = vweird.f32 %v2824
  %vm2831 = vmor %vm2829, %vm2830
  %v2832 = vsel %vm2831, %v2824, %v2828
  %v2833 = vand.u32 2147483647, %v2774
  %vm2834 = vcmp.eq.f32.partialorder %v2833, 8.507059e+37
  %v2835 = vand.u32 %v2774, 2147483648
  %v2836 = vor.u32 1.1754944e-38, %v2835
  %v2837 = vsel %vm2834, %v2836, %v2832
  %v2838 = vmul.f32 1.0, %v2837
  %v2839 = vrcp.pop %v2775
  %v2840 = vmul.f32 %v2775, %v2839
  %v2841 = vsub.f32 1.0, %v2840
  %v2842 = vmul.f32 %v2839, %v2841
  %v2843 = vadd.f32 %v2839, %v2842
  %vm2844 = vweird.f32 %v2775
  %vm2845 = vweird.f32 %v2839
  %vm2846 = vmor %vm2844, %vm2845
  %v2847 = vsel %vm2846, %v2839, %v2843
  %v2848 = vand.u32 2147483647, %v2775
  %vm2849 = vcmp.eq.f32.partialorder %v2848, 8.507059e+37
  %v2850 = vand.u32 %v2775, 2147483648
  %v2851 = vor.u32 1.1754944e-38, %v2850
  %v2852 = vsel %vm2849, %v2851, %v2847
  %v2853 = vmul.f32 1.0, %v2852
  %v2854 = vrcp.pop %v2776
  %v2855 = vmul.f32 %v2776, %v2854
  %v2856 = vsub.f32 1.0, %v2855
  %v2857 = vmul.f32 %v2854, %v2856
  %v2858 = vadd.f32 %v2854, %v2857
  %vm2859 = vweird.f32 %v2776
  %vm2860 = vweird.f32 %v2854
  %vm2861 = vmor %vm2859, %vm2860
  %v2862 = vsel %vm2861, %v2854, %v2858
  %v2863 = vand.u32 2147483647, %v2776
  %vm2864 = vcmp.eq.f32.partialorder %v2863, 8.507059e+37
  %v2865 = vand.u32 %v2776, 2147483648
  %v2866 = vor.u32 1.1754944e-38, %v2865
  %v2867 = vsel %vm2864, %v2866, %v2862
  %v2868 = vmul.f32 1.0, %v2867
  %v2869 = vrcp.pop %v2777
  %v2870 = vmul.f32 %v2777, %v2869
  %v2871 = vsub.f32 1.0, %v2870
  %v2872 = vmul.f32 %v2869, %v2871
  %v2873 = vadd.f32 %v2869, %v2872
  %vm2874 = vweird.f32 %v2777
  %vm2875 = vweird.f32 %v2869
  %vm2876 = vmor %vm2874, %vm2875
  %v2877 = vsel %vm2876, %v2869, %v2873
  %v2878 = vand.u32 2147483647, %v2777
  %vm2879 = vcmp.eq.f32.partialorder %v2878, 8.507059e+37
  %v2880 = vand.u32 %v2777, 2147483648
  %v2881 = vor.u32 1.1754944e-38, %v2880
  %v2882 = vsel %vm2879, %v2881, %v2877
  %v2883 = vmul.f32 1.0, %v2882
  %v2884 = vrcp.pop %v2778
  %v2885 = vmul.f32 %v2778, %v2884
  %v2886 = vsub.f32 1.0, %v2885
  %v2887 = vmul.f32 %v2884, %v2886
  %v2888 = vadd.f32 %v2884, %v2887
  %vm2889 = vweird.f32 %v2778
  %vm2890 = vweird.f32 %v2884
  %vm2891 = vmor %vm2889, %vm2890
  %v2892 = vsel %vm2891, %v2884, %v2888
  %v2893 = vand.u32 2147483647, %v2778
  %vm2894 = vcmp.eq.f32.partialorder %v2893, 8.507059e+37
  %v2895 = vand.u32 %v2778, 2147483648
  %v2896 = vor.u32 1.1754944e-38, %v2895
  %v2897 = vsel %vm2894, %v2896, %v2892
  %v2898 = vmul.f32 1.0, %v2897
  %v2899 = vadd.f32 %v2721, %v237
  %v2901 = vrot.slane %v2899, 1
  %v2902 = vrot.slane %v2899, 2
  %v2903 = vrot.slane %v2899, 3
  %v2904 = vrot.slane %v2899, 4
  %v2905 = vrot.slane %v2899, 5
  %v2906 = vrot.slane %v2899, 6
  %v2907 = vrot.slane %v2899, 7
  %2908 = vrot.lane.b32.xlu0 %v2899, 64
  %v2909 = vpop.permute.xlu0 %2908
  %2910 = vrot.lane.b32.xlu0 %v2901, 64
  %v2911 = vpop.permute.xlu0 %2910
  %2912 = vrot.lane.b32.xlu0 %v2902, 64
  %v2913 = vpop.permute.xlu0 %2912
  %2914 = vrot.lane.b32.xlu0 %v2903, 64
  %v2915 = vpop.permute.xlu0 %2914
  %2916 = vrot.lane.b32.xlu0 %v2904, 64
  %v2917 = vpop.permute.xlu0 %2916
  %2918 = vrot.lane.b32.xlu0 %v2905, 64
  %v2919 = vpop.permute.xlu0 %2918
  %2920 = vrot.lane.b32.xlu0 %v2906, 64
  %v2921 = vpop.permute.xlu0 %2920
  %2922 = vrot.lane.b32.xlu0 %v2907, 64
  %v2923 = vpop.permute.xlu0 %2922
  %v2932 = vmul.f32 %v2793, %v2909
  %v2933 = vmul.f32 %v2808, %v2911
  %v2934 = vmul.f32 %v2823, %v2913
  %v2935 = vmul.f32 %v2838, %v2915
  %v2936 = vmul.f32 %v2853, %v2917
  %v2937 = vmul.f32 %v2868, %v2919
  %v2938 = vmul.f32 %v2883, %v2921
  %v2939 = vmul.f32 %v2898, %v2923
  %2948 = vrot.lane.b32.xlu0 %v2932, 64
  %v2949 = vpop.permute.xlu0 %2948
  %2950 = vrot.lane.b32.xlu0 %v2933, 64
  %v2951 = vpop.permute.xlu0 %2950
  %2952 = vrot.lane.b32.xlu0 %v2934, 64
  %v2953 = vpop.permute.xlu0 %2952
  %2954 = vrot.lane.b32.xlu0 %v2935, 64
  %v2955 = vpop.permute.xlu0 %2954
  %2956 = vrot.lane.b32.xlu0 %v2936, 64
  %v2957 = vpop.permute.xlu0 %2956
  %2958 = vrot.lane.b32.xlu0 %v2937, 64
  %v2959 = vpop.permute.xlu0 %2958
  %2960 = vrot.lane.b32.xlu0 %v2938, 64
  %v2961 = vpop.permute.xlu0 %2960
  %2962 = vrot.lane.b32.xlu0 %v2939, 64
  %v2963 = vpop.permute.xlu0 %2962
  %v2972 = vadd.f32 %v2677, %v2949
  %v2973 = vadd.f32 %v2678, %v2951
  %v2974 = vadd.f32 %v2679, %v2953
  %v2975 = vadd.f32 %v2680, %v2955
  %v2976 = vadd.f32 %v2681, %v2957
  %v2977 = vadd.f32 %v2682, %v2959
  %v2978 = vadd.f32 %v2683, %v2961
  %v2979 = vadd.f32 %v2684, %v2963
  %v2980 = vtanh.pop %v2972
  %v2981 = vtanh.pop %v2973
  %v2982 = vtanh.pop %v2974
  %v2983 = vtanh.pop %v2975
  %v2984 = vtanh.pop %v2976
  %v2985 = vtanh.pop %v2977
  %v2986 = vtanh.pop %v2978
  %v2987 = vtanh.pop %v2979
  %v2988 = vsub.f32 %v2629, %v2980
  %v2989 = vsub.f32 %v2630, %v2981
  %v2990 = vsub.f32 %v2631, %v2982
  %v2991 = vsub.f32 %v2632, %v2983
  %v2992 = vsub.f32 %v2633, %v2984
  %v2993 = vsub.f32 %v2634, %v2985
  %v2994 = vsub.f32 %v2635, %v2986
  %v2995 = vsub.f32 %v2636, %v2987
  %3004 = vrot.lane.b32.xlu0 %v2988, 96
  %v3005 = vpop.permute.xlu0 %3004
  %3006 = vrot.lane.b32.xlu0 %v2989, 96
  %v3007 = vpop.permute.xlu0 %3006
  %3008 = vrot.lane.b32.xlu0 %v2990, 96
  %v3009 = vpop.permute.xlu0 %3008
  %3010 = vrot.lane.b32.xlu0 %v2991, 96
  %v3011 = vpop.permute.xlu0 %3010
  %3012 = vrot.lane.b32.xlu0 %v2992, 96
  %v3013 = vpop.permute.xlu0 %3012
  %3014 = vrot.lane.b32.xlu0 %v2993, 96
  %v3015 = vpop.permute.xlu0 %3014
  %3016 = vrot.lane.b32.xlu0 %v2994, 96
  %v3017 = vpop.permute.xlu0 %3016
  %3018 = vrot.lane.b32.xlu0 %v2995, 96
  %v3019 = vpop.permute.xlu0 %3018
  %v3028 = vmul.f32 %v2793, %v3005
  %v3029 = vmul.f32 %v2808, %v3007
  %v3030 = vmul.f32 %v2823, %v3009
  %v3031 = vmul.f32 %v2838, %v3011
  %v3032 = vmul.f32 %v2853, %v3013
  %v3033 = vmul.f32 %v2868, %v3015
  %v3034 = vmul.f32 %v2883, %v3017
  %v3035 = vmul.f32 %v2898, %v3019
  %3044 = vrot.lane.b32.xlu0 %v3028, 32
  %v3045 = vpop.permute.xlu0 %3044
  %3046 = vrot.lane.b32.xlu0 %v3029, 32
  %v3047 = vpop.permute.xlu0 %3046
  %3048 = vrot.lane.b32.xlu0 %v3030, 32
  %v3049 = vpop.permute.xlu0 %3048
  %3050 = vrot.lane.b32.xlu0 %v3031, 32
  %v3051 = vpop.permute.xlu0 %3050
  %3052 = vrot.lane.b32.xlu0 %v3032, 32
  %v3053 = vpop.permute.xlu0 %3052
  %3054 = vrot.lane.b32.xlu0 %v3033, 32
  %v3055 = vpop.permute.xlu0 %3054
  %3056 = vrot.lane.b32.xlu0 %v3034, 32
  %v3057 = vpop.permute.xlu0 %3056
  %3058 = vrot.lane.b32.xlu0 %v3035, 32
  %v3059 = vpop.permute.xlu0 %3058
  %v3068 = vadd.f32 %v2980, %v3045
  %v3069 = vadd.f32 %v2981, %v3047
  %v3070 = vadd.f32 %v2982, %v3049
  %v3071 = vadd.f32 %v2983, %v3051
  %v3072 = vadd.f32 %v2984, %v3053
  %v3073 = vadd.f32 %v2985, %v3055
  %v3074 = vadd.f32 %v2986, %v3057
  %v3075 = vadd.f32 %v2987, %v3059
  %3084 = vrot.lane.b32.xlu0 %v3068, 64
  %v3085 = vpop.permute.xlu0 %3084
  %3086 = vrot.lane.b32.xlu0 %v3069, 64
  %v3087 = vpop.permute.xlu0 %3086
  %3088 = vrot.lane.b32.xlu0 %v3070, 64
  %v3089 = vpop.permute.xlu0 %3088
  %3090 = vrot.lane.b32.xlu0 %v3071, 64
  %v3091 = vpop.permute.xlu0 %3090
  %3092 = vrot.lane.b32.xlu0 %v3072, 64
  %v3093 = vpop.permute.xlu0 %3092
  %3094 = vrot.lane.b32.xlu0 %v3073, 64
  %v3095 = vpop.permute.xlu0 %3094
  %3096 = vrot.lane.b32.xlu0 %v3074, 64
  %v3097 = vpop.permute.xlu0 %3096
  %3098 = vrot.lane.b32.xlu0 %v3075, 64
  %v3099 = vpop.permute.xlu0 %3098
  %3108 = vst.msk [vmem:[%s3 + $0x6] sm:$0x1] %vm473, %v3085
  %3109 = vst.msk [vmem:[%s3 + $0xe] sm:$0x1] %vm473, %v3087
  %3110 = vst.msk [vmem:[%s3 + $0x16] sm:$0x1] %vm473, %v3089
  %3111 = vst.msk [vmem:[%s3 + $0x1e] sm:$0x1] %vm473, %v3091
  %3112 = vst.msk [vmem:[%s3 + $0x26] sm:$0x1] %vm473, %v3093
  %3113 = vst.msk [vmem:[%s3 + $0x2e] sm:$0x1] %vm473, %v3095
  %3114 = vst.msk [vmem:[%s3 + $0x36] sm:$0x1] %vm473, %v3097
  %3115 = vst.msk [vmem:[%s3 + $0x3e] sm:$0x1] %vm473, %v3099
  %v3116 = vld [vmem:[%s0 + $0x7] sm:$0x1]
  %v3117 = vld [vmem:[%s0 + $0xf] sm:$0x1]
  %v3118 = vld [vmem:[%s0 + $0x17] sm:$0x1]
  %v3119 = vld [vmem:[%s0 + $0x1f] sm:$0x1]
  %v3120 = vld [vmem:[%s0 + $0x27] sm:$0x1]
  %v3121 = vld [vmem:[%s0 + $0x2f] sm:$0x1]
  %v3122 = vld [vmem:[%s0 + $0x37] sm:$0x1]
  %v3123 = vld [vmem:[%s0 + $0x3f] sm:$0x1]
  %v3124 = vrot.slane %v3069, 7
  %v3125 = vsel %vm337, %v3124, %v3068
  %v3126 = vrot.slane %v3070, 6
  %v3127 = vsel %vm340, %v3126, %v3125
  %v3128 = vrot.slane %v3071, 5
  %v3129 = vsel %vm343, %v3128, %v3127
  %v3130 = vrot.slane %v3072, 4
  %v3131 = vsel %vm346, %v3130, %v3129
  %v3132 = vrot.slane %v3073, 3
  %v3133 = vsel %vm349, %v3132, %v3131
  %v3134 = vrot.slane %v3074, 2
  %v3135 = vsel %vm352, %v3134, %v3133
  %v3136 = vrot.slane %v3075, 1
  %v3137 = vsel %vm355, %v3136, %v3135
  %3138 = vrot.lane.b32.xlu0 %v3137, 64
  %v3139 = vpop.permute.xlu0 %3138
  %v3140 = vsel %vm34, %v3139, 0
  %3142 = vmatpush.msra.mxu0 0.0
  %3143 = vmatpush.msra.mxu0 0.0
  %3144 = vmatpush.msra.mxu0 0.0
  %3145 = vmatpush.msra.mxu0 0.0
  %3146 = vmatpush.msra.mxu0 0.0
  %3147 = vmatpush.msra.mxu0 0.0
  %3148 = vmatpush.msra.mxu0 0.0
  %3149 = vmatpush.msra.mxu0 0.0
  %3150 = vmatpush.msra.mxu0 0.0
  %3151 = vmatpush.msra.mxu0 0.0
  %3152 = vmatpush.msra.mxu0 0.0
  %3153 = vmatpush.msra.mxu0 0.0
  %3154 = vmatpush.msra.mxu0 %v23
  %3155 = vmatpush.msra.mxu0 %v22
  %3156 = vmatpush.msra.mxu0 %v21
  %3157 = vmatpush.msra.mxu0 %v20
  %3158 = vmatmul.f32.gmra.mxu0 %v3140
  %v3159 = vpop.f32.mrf.mxu0
  %v3160 = vadd.f32 0.0, %v3159
  %3161 = vdwg.mxu0
  %v3163 = vrot.slane %v3160, 1
  %v3164 = vrot.slane %v3160, 2
  %v3165 = vrot.slane %v3160, 3
  %v3166 = vrot.slane %v3160, 4
  %v3167 = vrot.slane %v3160, 5
  %v3168 = vrot.slane %v3160, 6
  %v3169 = vrot.slane %v3160, 7
  %v3178 = vadd.f32 %v3116, %v3160
  %v3179 = vadd.f32 %v3117, %v3163
  %v3180 = vadd.f32 %v3118, %v3164
  %v3181 = vadd.f32 %v3119, %v3165
  %v3182 = vadd.f32 %v3120, %v3166
  %v3183 = vadd.f32 %v3121, %v3167
  %v3184 = vadd.f32 %v3122, %v3168
  %v3185 = vadd.f32 %v3123, %v3169
  %v3186 = vxor.u32 %v3178, 2147483648
  %v3187 = vxor.u32 %v3179, 2147483648
  %v3188 = vxor.u32 %v3180, 2147483648
  %v3189 = vxor.u32 %v3181, 2147483648
  %v3190 = vxor.u32 %v3182, 2147483648
  %v3191 = vxor.u32 %v3183, 2147483648
  %v3192 = vxor.u32 %v3184, 2147483648
  %v3193 = vxor.u32 %v3185, 2147483648
  %v3194 = vmul.f32 %v3186, 1.442695
  %v3195 = vpow.pop %v3194
  %v3196 = vmul.f32 %v3187, 1.442695
  %v3197 = vpow.pop %v3196
  %v3198 = vmul.f32 %v3188, 1.442695
  %v3199 = vpow.pop %v3198
  %v3200 = vmul.f32 %v3189, 1.442695
  %v3201 = vpow.pop %v3200
  %v3202 = vmul.f32 %v3190, 1.442695
  %v3203 = vpow.pop %v3202
  %v3204 = vmul.f32 %v3191, 1.442695
  %v3205 = vpow.pop %v3204
  %v3206 = vmul.f32 %v3192, 1.442695
  %v3207 = vpow.pop %v3206
  %v3208 = vmul.f32 %v3193, 1.442695
  %v3209 = vpow.pop %v3208
  %v3210 = vadd.f32 %v3195, 1.0
  %v3211 = vadd.f32 %v3197, 1.0
  %v3212 = vadd.f32 %v3199, 1.0
  %v3213 = vadd.f32 %v3201, 1.0
  %v3214 = vadd.f32 %v3203, 1.0
  %v3215 = vadd.f32 %v3205, 1.0
  %v3216 = vadd.f32 %v3207, 1.0
  %v3217 = vadd.f32 %v3209, 1.0
  %v3218 = vrcp.pop %v3210
  %v3219 = vmul.f32 %v3210, %v3218
  %v3220 = vsub.f32 1.0, %v3219
  %v3221 = vmul.f32 %v3218, %v3220
  %v3222 = vadd.f32 %v3218, %v3221
  %vm3223 = vweird.f32 %v3210
  %vm3224 = vweird.f32 %v3218
  %vm3225 = vmor %vm3223, %vm3224
  %v3226 = vsel %vm3225, %v3218, %v3222
  %v3227 = vand.u32 2147483647, %v3210
  %vm3228 = vcmp.eq.f32.partialorder %v3227, 8.507059e+37
  %v3229 = vand.u32 %v3210, 2147483648
  %v3230 = vor.u32 1.1754944e-38, %v3229
  %v3231 = vsel %vm3228, %v3230, %v3226
  %v3232 = vmul.f32 1.0, %v3231
  %v3233 = vrcp.pop %v3211
  %v3234 = vmul.f32 %v3211, %v3233
  %v3235 = vsub.f32 1.0, %v3234
  %v3236 = vmul.f32 %v3233, %v3235
  %v3237 = vadd.f32 %v3233, %v3236
  %vm3238 = vweird.f32 %v3211
  %vm3239 = vweird.f32 %v3233
  %vm3240 = vmor %vm3238, %vm3239
  %v3241 = vsel %vm3240, %v3233, %v3237
  %v3242 = vand.u32 2147483647, %v3211
  %vm3243 = vcmp.eq.f32.partialorder %v3242, 8.507059e+37
  %v3244 = vand.u32 %v3211, 2147483648
  %v3245 = vor.u32 1.1754944e-38, %v3244
  %v3246 = vsel %vm3243, %v3245, %v3241
  %v3247 = vmul.f32 1.0, %v3246
  %v3248 = vrcp.pop %v3212
  %v3249 = vmul.f32 %v3212, %v3248
  %v3250 = vsub.f32 1.0, %v3249
  %v3251 = vmul.f32 %v3248, %v3250
  %v3252 = vadd.f32 %v3248, %v3251
  %vm3253 = vweird.f32 %v3212
  %vm3254 = vweird.f32 %v3248
  %vm3255 = vmor %vm3253, %vm3254
  %v3256 = vsel %vm3255, %v3248, %v3252
  %v3257 = vand.u32 2147483647, %v3212
  %vm3258 = vcmp.eq.f32.partialorder %v3257, 8.507059e+37
  %v3259 = vand.u32 %v3212, 2147483648
  %v3260 = vor.u32 1.1754944e-38, %v3259
  %v3261 = vsel %vm3258, %v3260, %v3256
  %v3262 = vmul.f32 1.0, %v3261
  %v3263 = vrcp.pop %v3213
  %v3264 = vmul.f32 %v3213, %v3263
  %v3265 = vsub.f32 1.0, %v3264
  %v3266 = vmul.f32 %v3263, %v3265
  %v3267 = vadd.f32 %v3263, %v3266
  %vm3268 = vweird.f32 %v3213
  %vm3269 = vweird.f32 %v3263
  %vm3270 = vmor %vm3268, %vm3269
  %v3271 = vsel %vm3270, %v3263, %v3267
  %v3272 = vand.u32 2147483647, %v3213
  %vm3273 = vcmp.eq.f32.partialorder %v3272, 8.507059e+37
  %v3274 = vand.u32 %v3213, 2147483648
  %v3275 = vor.u32 1.1754944e-38, %v3274
  %v3276 = vsel %vm3273, %v3275, %v3271
  %v3277 = vmul.f32 1.0, %v3276
  %v3278 = vrcp.pop %v3214
  %v3279 = vmul.f32 %v3214, %v3278
  %v3280 = vsub.f32 1.0, %v3279
  %v3281 = vmul.f32 %v3278, %v3280
  %v3282 = vadd.f32 %v3278, %v3281
  %vm3283 = vweird.f32 %v3214
  %vm3284 = vweird.f32 %v3278
  %vm3285 = vmor %vm3283, %vm3284
  %v3286 = vsel %vm3285, %v3278, %v3282
  %v3287 = vand.u32 2147483647, %v3214
  %vm3288 = vcmp.eq.f32.partialorder %v3287, 8.507059e+37
  %v3289 = vand.u32 %v3214, 2147483648
  %v3290 = vor.u32 1.1754944e-38, %v3289
  %v3291 = vsel %vm3288, %v3290, %v3286
  %v3292 = vmul.f32 1.0, %v3291
  %v3293 = vrcp.pop %v3215
  %v3294 = vmul.f32 %v3215, %v3293
  %v3295 = vsub.f32 1.0, %v3294
  %v3296 = vmul.f32 %v3293, %v3295
  %v3297 = vadd.f32 %v3293, %v3296
  %vm3298 = vweird.f32 %v3215
  %vm3299 = vweird.f32 %v3293
  %vm3300 = vmor %vm3298, %vm3299
  %v3301 = vsel %vm3300, %v3293, %v3297
  %v3302 = vand.u32 2147483647, %v3215
  %vm3303 = vcmp.eq.f32.partialorder %v3302, 8.507059e+37
  %v3304 = vand.u32 %v3215, 2147483648
  %v3305 = vor.u32 1.1754944e-38, %v3304
  %v3306 = vsel %vm3303, %v3305, %v3301
  %v3307 = vmul.f32 1.0, %v3306
  %v3308 = vrcp.pop %v3216
  %v3309 = vmul.f32 %v3216, %v3308
  %v3310 = vsub.f32 1.0, %v3309
  %v3311 = vmul.f32 %v3308, %v3310
  %v3312 = vadd.f32 %v3308, %v3311
  %vm3313 = vweird.f32 %v3216
  %vm3314 = vweird.f32 %v3308
  %vm3315 = vmor %vm3313, %vm3314
  %v3316 = vsel %vm3315, %v3308, %v3312
  %v3317 = vand.u32 2147483647, %v3216
  %vm3318 = vcmp.eq.f32.partialorder %v3317, 8.507059e+37
  %v3319 = vand.u32 %v3216, 2147483648
  %v3320 = vor.u32 1.1754944e-38, %v3319
  %v3321 = vsel %vm3318, %v3320, %v3316
  %v3322 = vmul.f32 1.0, %v3321
  %v3323 = vrcp.pop %v3217
  %v3324 = vmul.f32 %v3217, %v3323
  %v3325 = vsub.f32 1.0, %v3324
  %v3326 = vmul.f32 %v3323, %v3325
  %v3327 = vadd.f32 %v3323, %v3326
  %vm3328 = vweird.f32 %v3217
  %vm3329 = vweird.f32 %v3323
  %vm3330 = vmor %vm3328, %vm3329
  %v3331 = vsel %vm3330, %v3323, %v3327
  %v3332 = vand.u32 2147483647, %v3217
  %vm3333 = vcmp.eq.f32.partialorder %v3332, 8.507059e+37
  %v3334 = vand.u32 %v3217, 2147483648
  %v3335 = vor.u32 1.1754944e-38, %v3334
  %v3336 = vsel %vm3333, %v3335, %v3331
  %v3337 = vmul.f32 1.0, %v3336
  %v3338 = vadd.f32 %v3160, %v237
  %v3340 = vrot.slane %v3338, 1
  %v3341 = vrot.slane %v3338, 2
  %v3342 = vrot.slane %v3338, 3
  %v3343 = vrot.slane %v3338, 4
  %v3344 = vrot.slane %v3338, 5
  %v3345 = vrot.slane %v3338, 6
  %v3346 = vrot.slane %v3338, 7
  %3347 = vrot.lane.b32.xlu0 %v3338, 64
  %v3348 = vpop.permute.xlu0 %3347
  %3349 = vrot.lane.b32.xlu0 %v3340, 64
  %v3350 = vpop.permute.xlu0 %3349
  %3351 = vrot.lane.b32.xlu0 %v3341, 64
  %v3352 = vpop.permute.xlu0 %3351
  %3353 = vrot.lane.b32.xlu0 %v3342, 64
  %v3354 = vpop.permute.xlu0 %3353
  %3355 = vrot.lane.b32.xlu0 %v3343, 64
  %v3356 = vpop.permute.xlu0 %3355
  %3357 = vrot.lane.b32.xlu0 %v3344, 64
  %v3358 = vpop.permute.xlu0 %3357
  %3359 = vrot.lane.b32.xlu0 %v3345, 64
  %v3360 = vpop.permute.xlu0 %3359
  %3361 = vrot.lane.b32.xlu0 %v3346, 64
  %v3362 = vpop.permute.xlu0 %3361
  %v3371 = vmul.f32 %v3232, %v3348
  %v3372 = vmul.f32 %v3247, %v3350
  %v3373 = vmul.f32 %v3262, %v3352
  %v3374 = vmul.f32 %v3277, %v3354
  %v3375 = vmul.f32 %v3292, %v3356
  %v3376 = vmul.f32 %v3307, %v3358
  %v3377 = vmul.f32 %v3322, %v3360
  %v3378 = vmul.f32 %v3337, %v3362
  %3387 = vrot.lane.b32.xlu0 %v3371, 64
  %v3388 = vpop.permute.xlu0 %3387
  %3389 = vrot.lane.b32.xlu0 %v3372, 64
  %v3390 = vpop.permute.xlu0 %3389
  %3391 = vrot.lane.b32.xlu0 %v3373, 64
  %v3392 = vpop.permute.xlu0 %3391
  %3393 = vrot.lane.b32.xlu0 %v3374, 64
  %v3394 = vpop.permute.xlu0 %3393
  %3395 = vrot.lane.b32.xlu0 %v3375, 64
  %v3396 = vpop.permute.xlu0 %3395
  %3397 = vrot.lane.b32.xlu0 %v3376, 64
  %v3398 = vpop.permute.xlu0 %3397
  %3399 = vrot.lane.b32.xlu0 %v3377, 64
  %v3400 = vpop.permute.xlu0 %3399
  %3401 = vrot.lane.b32.xlu0 %v3378, 64
  %v3402 = vpop.permute.xlu0 %3401
  %v3411 = vadd.f32 %v3116, %v3388
  %v3412 = vadd.f32 %v3117, %v3390
  %v3413 = vadd.f32 %v3118, %v3392
  %v3414 = vadd.f32 %v3119, %v3394
  %v3415 = vadd.f32 %v3120, %v3396
  %v3416 = vadd.f32 %v3121, %v3398
  %v3417 = vadd.f32 %v3122, %v3400
  %v3418 = vadd.f32 %v3123, %v3402
  %v3419 = vtanh.pop %v3411
  %v3420 = vtanh.pop %v3412
  %v3421 = vtanh.pop %v3413
  %v3422 = vtanh.pop %v3414
  %v3423 = vtanh.pop %v3415
  %v3424 = vtanh.pop %v3416
  %v3425 = vtanh.pop %v3417
  %v3426 = vtanh.pop %v3418
  %v3427 = vsub.f32 %v3068, %v3419
  %v3428 = vsub.f32 %v3069, %v3420
  %v3429 = vsub.f32 %v3070, %v3421
  %v3430 = vsub.f32 %v3071, %v3422
  %v3431 = vsub.f32 %v3072, %v3423
  %v3432 = vsub.f32 %v3073, %v3424
  %v3433 = vsub.f32 %v3074, %v3425
  %v3434 = vsub.f32 %v3075, %v3426
  %3443 = vrot.lane.b32.xlu0 %v3427, 96
  %v3444 = vpop.permute.xlu0 %3443
  %3445 = vrot.lane.b32.xlu0 %v3428, 96
  %v3446 = vpop.permute.xlu0 %3445
  %3447 = vrot.lane.b32.xlu0 %v3429, 96
  %v3448 = vpop.permute.xlu0 %3447
  %3449 = vrot.lane.b32.xlu0 %v3430, 96
  %v3450 = vpop.permute.xlu0 %3449
  %3451 = vrot.lane.b32.xlu0 %v3431, 96
  %v3452 = vpop.permute.xlu0 %3451
  %3453 = vrot.lane.b32.xlu0 %v3432, 96
  %v3454 = vpop.permute.xlu0 %3453
  %3455 = vrot.lane.b32.xlu0 %v3433, 96
  %v3456 = vpop.permute.xlu0 %3455
  %3457 = vrot.lane.b32.xlu0 %v3434, 96
  %v3458 = vpop.permute.xlu0 %3457
  %v3467 = vmul.f32 %v3232, %v3444
  %v3468 = vmul.f32 %v3247, %v3446
  %v3469 = vmul.f32 %v3262, %v3448
  %v3470 = vmul.f32 %v3277, %v3450
  %v3471 = vmul.f32 %v3292, %v3452
  %v3472 = vmul.f32 %v3307, %v3454
  %v3473 = vmul.f32 %v3322, %v3456
  %v3474 = vmul.f32 %v3337, %v3458
  %3483 = vrot.lane.b32.xlu0 %v3467, 32
  %v3484 = vpop.permute.xlu0 %3483
  %3485 = vrot.lane.b32.xlu0 %v3468, 32
  %v3486 = vpop.permute.xlu0 %3485
  %3487 = vrot.lane.b32.xlu0 %v3469, 32
  %v3488 = vpop.permute.xlu0 %3487
  %3489 = vrot.lane.b32.xlu0 %v3470, 32
  %v3490 = vpop.permute.xlu0 %3489
  %3491 = vrot.lane.b32.xlu0 %v3471, 32
  %v3492 = vpop.permute.xlu0 %3491
  %3493 = vrot.lane.b32.xlu0 %v3472, 32
  %v3494 = vpop.permute.xlu0 %3493
  %3495 = vrot.lane.b32.xlu0 %v3473, 32
  %v3496 = vpop.permute.xlu0 %3495
  %3497 = vrot.lane.b32.xlu0 %v3474, 32
  %v3498 = vpop.permute.xlu0 %3497
  %v3507 = vadd.f32 %v3419, %v3484
  %v3508 = vadd.f32 %v3420, %v3486
  %v3509 = vadd.f32 %v3421, %v3488
  %v3510 = vadd.f32 %v3422, %v3490
  %v3511 = vadd.f32 %v3423, %v3492
  %v3512 = vadd.f32 %v3424, %v3494
  %v3513 = vadd.f32 %v3425, %v3496
  %v3514 = vadd.f32 %v3426, %v3498
  %3523 = vrot.lane.b32.xlu0 %v3507, 64
  %v3524 = vpop.permute.xlu0 %3523
  %3525 = vrot.lane.b32.xlu0 %v3508, 64
  %v3526 = vpop.permute.xlu0 %3525
  %3527 = vrot.lane.b32.xlu0 %v3509, 64
  %v3528 = vpop.permute.xlu0 %3527
  %3529 = vrot.lane.b32.xlu0 %v3510, 64
  %v3530 = vpop.permute.xlu0 %3529
  %3531 = vrot.lane.b32.xlu0 %v3511, 64
  %v3532 = vpop.permute.xlu0 %3531
  %3533 = vrot.lane.b32.xlu0 %v3512, 64
  %v3534 = vpop.permute.xlu0 %3533
  %3535 = vrot.lane.b32.xlu0 %v3513, 64
  %v3536 = vpop.permute.xlu0 %3535
  %3537 = vrot.lane.b32.xlu0 %v3514, 64
  %v3538 = vpop.permute.xlu0 %3537
  %3547 = vst.msk [vmem:[%s3 + $0x7] sm:$0x1] %vm473, %v3524
  %3548 = vst.msk [vmem:[%s3 + $0xf] sm:$0x1] %vm473, %v3526
  %3549 = vst.msk [vmem:[%s3 + $0x17] sm:$0x1] %vm473, %v3528
  %3550 = vst.msk [vmem:[%s3 + $0x1f] sm:$0x1] %vm473, %v3530
  %3551 = vst.msk [vmem:[%s3 + $0x27] sm:$0x1] %vm473, %v3532
  %3552 = vst.msk [vmem:[%s3 + $0x2f] sm:$0x1] %vm473, %v3534
  %3553 = vst.msk [vmem:[%s3 + $0x37] sm:$0x1] %vm473, %v3536
  %3554 = vst.msk [vmem:[%s3 + $0x3f] sm:$0x1] %vm473, %v3538
  %v3555 = vrot.slane %v3508, 7
  %v3556 = vsel %vm337, %v3555, %v3507
  %v3557 = vrot.slane %v3509, 6
  %v3558 = vsel %vm340, %v3557, %v3556
  %v3559 = vrot.slane %v3510, 5
  %v3560 = vsel %vm343, %v3559, %v3558
  %v3561 = vrot.slane %v3511, 4
  %v3562 = vsel %vm346, %v3561, %v3560
  %v3563 = vrot.slane %v3512, 3
  %v3564 = vsel %vm349, %v3563, %v3562
  %v3565 = vrot.slane %v3513, 2
  %v3566 = vsel %vm352, %v3565, %v3564
  %v3567 = vrot.slane %v3514, 1
  %v3568 = vsel %vm355, %v3567, %v3566
  %3569 = vrot.lane.b32.xlu0 %v3568, 64
  %v3570 = vpop.permute.xlu0 %3569
  %3572 = vst.msk [vmem:[#allocation2] sm:$0xff] %vm34, %v3570
  // Predicated region
  $region18: #{encoder_forward.3} parent=0 // pred_check
    _
  $region19: #{encoder_forward.3} parent=0 // pred_check_branch
    %3574 = sbr.rel (0) target = $region21
  $region20: #{encoder_forward.3} parent=0 // pred_region
    _
  $region21: #{encoder_forward.3} parent=0 // pred_fallthru
    _
  // Predicated region
  $region22: #{encoder_forward.3} parent=0 // pred_check
    _
  $region23: #{encoder_forward.3} parent=0 // pred_check_branch
    %3576 = sbr.rel (0) target = $region25
  $region24: #{encoder_forward.3} parent=0 // pred_region
    _
  $region25: #{encoder_forward.3} parent=0 // pred_fallthru
    _

</llo_original>
